<compile_context>
chip_gen: v7x
topology: tpu7x:2x2x1
jax: 0.10.0
libtpu: 0.0.40
codegen_flags: <defaults>
</compile_context>

<pallas_src>
import functools

import numpy as np

import jax
import jax.numpy as jnp
from jax.experimental import pallas as pl
from jax.experimental.pallas import tpu as pltpu


# ----------------------------------------------------------------------------
# Fused per-stage Pallas kernel
# ----------------------------------------------------------------------------
def _shift_fwd(hb, d):
    # result[:, n] = hb[:, n - d]; columns n < d are zero.  Pure-jnp lane shift
    # (portable to interpret mode; pltpu.roll(..., axis=1) is the XLU
    # alternative on hardware).
    pad = jnp.zeros((hb.shape[0], d), hb.dtype)
    return jnp.concatenate([pad, hb[:, : hb.shape[1] - d]], axis=1)


def _shift_bwd(hb, d):
    # result[:, n] = hb[:, n + d]; columns n >= N - d are zero.
    pad = jnp.zeros((hb.shape[0], d), hb.dtype)
    return jnp.concatenate([hb[:, d:], pad], axis=1)


def _stage_kernel(x_ref, w_in_ref, b_in_ref, wd_ref, bd_ref, w1_ref, b1_ref,
                  w_head_ref, b_head_ref, wf2_ref, bf2_ref,
                  feat_ref, out_ref, prob_ref, dom_ref,
                  *, num_layers, seq_len, n_lanes, c_out):
    """SingleStageModel + conv_out + softmax + frame domain head, one batch chunk.

    Refs (leading chunk dim squeezed by the BlockSpecs), N = per_chunk * T:
      x:      (C_in, N)
      w_in:   (F, C_in) bf16      b_in:   (F, 1) f32       conv_1x1
      wd:     (L, F, 3F) bf16     bd:     (L, F, 1) f32    fused dilated-conv taps
      w1:     (L, F, F) bf16      b1:     (L, F, 1) f32    per-layer 1x1 conv
      w_head: (C_out+F, F) bf16   b_head: (C_out+F, 1) f32 [conv_out ; frame fc1]
      wf2:    (2, F) bf16         bf2:    (2, 1) f32       frame domain classifier
    Outputs: feat (F, N), out (C_out, N), prob (C_out, N), dom (2, N), all f32.
    """
    x = x_ref[...].astype(jnp.bfloat16)
    h = (jnp.dot(w_in_ref[...], x, preferred_element_type=jnp.float32)
         + b_in_ref[...])                                              # (F, N) f32

    # Per-batch local time index (1, N), hoisted out of the layer loop.
    # (broadcasts against (F, N) in the selects: 1 live int32 vreg instead of 8)
    t_loc = jax.lax.broadcasted_iota(jnp.int32, (1, n_lanes), 1) % seq_len
    zero = jnp.zeros((), jnp.bfloat16)

    # TODO(synk): for realistic MS-TCN depths (num_layers ~ 10) switch this
    # static unroll to lax.fori_loop (d = 1 << l) to bound vreg live ranges.
    for l in range(num_layers):
        d = 2 ** l
        hb = h.astype(jnp.bfloat16)                                    # one (F,N) cast/layer
        # x[t-d] / x[t+d] built and masked entirely in bf16.
        left = jnp.where(t_loc >= d, _shift_fwd(hb, d), zero)
        right = jnp.where(t_loc < seq_len - d, _shift_bwd(hb, d), zero)
        # The 3 dilated-conv taps fused into a single K = 3F bf16 MXU matmul.
        hcat = jnp.concatenate([left, hb, right], axis=0)              # (3F, N) bf16
        c = (jnp.dot(wd_ref[l], hcat, preferred_element_type=jnp.float32)
             + bd_ref[l])
        c = jnp.maximum(c, 0.0)                                        # ReLU
        c = (jnp.dot(w1_ref[l], c.astype(jnp.bfloat16),
                     preferred_element_type=jnp.float32) + b1_ref[l])
        h = h + c                                                      # residual (dropout = id)

    feat_ref[...] = h
    hb = h.astype(jnp.bfloat16)

    # Fused conv_out + frame-domain fc1: one (C_out+F, F) x (F, N) MXU pass.
    head = (jnp.dot(w_head_ref[...], hb, preferred_element_type=jnp.float32)
            + b_head_ref[...])                                         # (C_out+F, N)
    out = head[:c_out]                                                 # conv_out logits
    out_ref[...] = out
    hd = jnp.maximum(head[c_out:], 0.0)                                # frame fc1 + ReLU

    # Exact softmax over classes (prob feeds the next stage).
    e = jnp.exp(out - jnp.max(out, axis=0, keepdims=True))
    prob_ref[...] = e / jnp.sum(e, axis=0, keepdims=True)

    # Frame-level domain classifier head: Linear(F, 2).
    dom_ref[...] = (jnp.dot(wf2_ref[...], hd.astype(jnp.bfloat16),
                            preferred_element_type=jnp.float32) + bf2_ref[...])


def stage_forward(x_folded, sp, fp, *, num_layers, seq_len):
    """x_folded: (chunks, C_in, N) -> feat/out/prob/dom, all (chunks, *, N) f32."""
    chunks, c_in, n_lanes = x_folded.shape
    fmaps = sp["w_in"].shape[0]
    c_out = sp["w_out"].shape[0]

    # conv_out and the frame-domain fc1 stacked into a single head weight.
    w_head = jnp.concatenate([sp["w_out"], fp["w1"]], axis=0)          # (C_out+F, F) bf16
    b_head = jnp.concatenate([sp["b_out"], fp["b1"]], axis=0)          # (C_out+F, 1) f32

    def bcast(a):                                   # weight shared across the grid
        nd = a.ndim
        return pl.BlockSpec(a.shape, lambda b, _nd=nd: (0,) * _nd)

    def per_chunk(c):                               # squeezed leading chunk dim
        return pl.BlockSpec((None, c, n_lanes), lambda b: (b, 0, 0))

    kernel = functools.partial(_stage_kernel, num_layers=num_layers,
                               seq_len=seq_len, n_lanes=n_lanes, c_out=c_out)

    feat, out, prob, dom = pl.pallas_call(
        kernel,
        out_shape=(
            jax.ShapeDtypeStruct((chunks, fmaps, n_lanes), jnp.float32),
            jax.ShapeDtypeStruct((chunks, c_out, n_lanes), jnp.float32),
            jax.ShapeDtypeStruct((chunks, c_out, n_lanes), jnp.float32),
            jax.ShapeDtypeStruct((chunks, 2, n_lanes), jnp.float32),
        ),
        grid=(chunks,),
        in_specs=[
            per_chunk(c_in),
            bcast(sp["w_in"]), bcast(sp["b_in"]),
            bcast(sp["wd"]), bcast(sp["bd"]),
            bcast(sp["w1"]), bcast(sp["b1"]),
            bcast(w_head), bcast(b_head),
            bcast(fp["w2"]), bcast(fp["b2"]),
        ],
        out_specs=(per_chunk(fmaps), per_chunk(c_out), per_chunk(c_out),
                   per_chunk(2)),
        compiler_params=pltpu.CompilerParams(
            dimension_semantics=("parallel",),        # >=2 steps keep both v7x TCs busy
            vmem_limit_bytes=32 * 1024 * 1024),
        # TODO(synk): for production-length T (thousands of frames) tile T with a
        # 2^(L-1) halo instead of whole-sequence blocks (v7x VMEM is 64 MiB).
    )(x_folded, sp["w_in"], sp["b_in"], sp["wd"], sp["bd"], sp["w1"], sp["b1"],
      w_head, b_head, fp["w2"], fp["b2"])
    return feat, out, prob, dom


# ----------------------------------------------------------------------------
# Plain-JAX glue (batch lane-folding, BatchNorm eval, tiny seq head)
# ----------------------------------------------------------------------------
def _fold(x, chunks):
    """(B, C, T) -> (chunks, C, per*T), batch folded into the lane dimension."""
    B, C, T = x.shape
    per = B // chunks
    return x.reshape(chunks, per, C, T).transpose(0, 2, 1, 3).reshape(chunks, C, per * T)


def _unfold(y, B, T):
    """(chunks, C, per*T) -> (B, C, T)."""
    chunks, C, N = y.shape
    per = N // T
    return y.reshape(chunks, C, per, T).transpose(0, 2, 1, 3).reshape(B, C, T)


def batchnorm_eval(x, bn, eps=1e-5):
    return (x - bn["rm"]) / jnp.sqrt(bn["rv"] + eps) * bn["gamma"] + bn["beta"]


def seq_domain_forward(feat_seq, p):
    """(B, 64) -> (B, 2): ~16 KFLOPs, plain JAX (a pallas_call is pure overhead)."""
    h = jnp.maximum(feat_seq @ p["w1"].T + p["b1"], 0.0)
    return h @ p["w2"].T + p["b2"]


@functools.partial(jax.jit, static_argnames=("num_layers",))
def _pipeline(params, x, num_layers):
    """All stages for the combined (source+target) batch, fully jitted.

    Returns per-stage stacks: feat (B,S,F,T), out (B,S,C,T), prob (B,S,C,T),
    dom (B,S,2,T), seq_d (B,S,2).
    """
    B, _, T = x.shape
    # Lane-fold the batch (wider N for the single-TC chips) but keep >=2
    # parallel grid steps so both v7x TensorCores run.
    chunks = 2 if (B % 2 == 0 and B >= 2) else B

    stage_params = [params["stage1"]] + list(params["stages"])
    feats, outs, probs, doms, seqds = [], [], [], [], []

    # TODO(synk): fuse the refinement stages into one pallas_call (stacked
    # per-stage weights, prob kept in VMEM) to drop the inter-stage HBM round trip.
    stage_in = _fold(x, chunks)
    for sp in stage_params:
        feat_f, out_f, prob_f, dom_f = stage_forward(
            stage_in, sp, params["ad_frame"], num_layers=num_layers, seq_len=T)
        stage_in = prob_f                                   # next stage input, still folded

        feat = _unfold(feat_f, B, T)
        out = _unfold(out_f, B, T)
        prob = _unfold(prob_f, B, T)
        dom = _unfold(dom_f, B, T)

        mean = jnp.mean(feat, axis=-1)                      # out_feat.mean(-1), (B, F)
        feat_seq = batchnorm_eval(mean, params["bn"])       # eval-mode BatchNorm1d(64)
        seq_d = seq_domain_forward(feat_seq, params["ad_seq"])

        feats.append(feat); outs.append(out); probs.append(prob)
        doms.append(dom); seqds.append(seq_d)

    st = lambda xs: jnp.stack(xs, axis=1)   # emulates unsqueeze(1) + cat(dim=1)
    return st(feats), st(outs), st(probs), st(doms), st(seqds)


def _select_masked(dom_all, seq_d_all, mask, domain_gt):
    """Reference select_masked applied to the per-stage stack of one domain."""
    B, S, _, T = dom_all.shape
    flat = jnp.transpose(dom_all, (0, 3, 1, 2)).reshape(B * T, S, 2)
    # TODO(synk): boolean masked selection has a data-dependent output shape, so
    # it stays outside jit / Pallas; everything upstream is one jitted call.
    idx = np.flatnonzero(np.asarray(mask[:, 0, :]).reshape(-1) > 0)
    sel = flat[idx]                                   # (n_valid, S, 2)
    out_d = sel[:, :, None, :]                        # (n_valid, S, 1, 2)
    lb_d = jnp.full(out_d.shape[:3], float(domain_gt), dtype=out_d.dtype)
    lb_seq_d = jnp.full((B, S, 1), float(domain_gt), dtype=jnp.float32)
    return out_d, lb_d, seq_d_all, lb_seq_d


def multi_stage_forward(params, x_s, x_t, mask_s, mask_t, beta, reverse, *, num_layers):
    del beta, reverse  # GradRevLayer / dropout are identity in the forward pass
    B = x_s.shape[0]
    # Source and target share all parameters (eval-mode BN): run them through
    # the same kernel launches to halve dispatch count and fill the grid.
    x = jnp.concatenate([x_s, x_t], axis=0)
    feat_all, out_all, prob_all, dom_all, seq_all = _pipeline(
        params, x, num_layers=num_layers)

    sl_s, sl_t = slice(0, B), slice(B, 2 * B)
    pd_s, ld_s, sd_s, lsd_s = _select_masked(dom_all[sl_s], seq_all[sl_s], mask_s, 0)
    pd_t, ld_t, sd_t, lsd_t = _select_masked(dom_all[sl_t], seq_all[sl_t], mask_t, 1)

    pred_d = jnp.concatenate([pd_s, pd_t], axis=0)
    label_d = jnp.concatenate([ld_s, ld_t], axis=0).astype(jnp.int32)
    pred_seq_d = jnp.concatenate([sd_s, sd_t], axis=0)
    label_seq_d = jnp.concatenate([lsd_s, lsd_t], axis=0).astype(jnp.int32)

    pred_s, prob_s, feat_s = out_all[sl_s], prob_all[sl_s], feat_all[sl_s]
    pred_t, prob_t, feat_t = out_all[sl_t], prob_all[sl_t], feat_all[sl_t]

    # out_2 = out.clone() and prob_2 = softmax(out_2) in the reference -> identical.
    return (pred_s, prob_s, feat_s, pred_t, prob_t, feat_t, pred_d, label_d,
            pred_s, prob_s, pred_t, prob_t, pred_seq_d, label_seq_d)


# ----------------------------------------------------------------------------
# Deterministic parameter initialization
# ----------------------------------------------------------------------------
def _init_linear(key, out_f, in_f):
    kw, kb = jax.random.split(key)
    scale = 1.0 / jnp.sqrt(jnp.float32(in_f))
    w = scale * jax.random.normal(kw, (out_f, in_f), jnp.float32)
    b = scale * jax.random.normal(kb, (out_f,), jnp.float32)
    return w, b


def _init_stage(key, num_layers, fmaps, c_in, c_out):
    keys = jax.random.split(key, 2 + 2 * num_layers)
    w_in, b_in = _init_linear(keys[0], fmaps, c_in)
    wd, bd, w1, b1 = [], [], [], []
    for l in range(num_layers):
        kd, k1 = keys[1 + 2 * l], keys[2 + 2 * l]
        sc = 1.0 / jnp.sqrt(jnp.float32(fmaps * 3))
        # PyTorch Conv1d weight (C_out, C_in, K=3) as (k, out, in); tap k hits x[t+(k-1)*d].
        w_k = sc * jax.random.normal(kd, (3, fmaps, fmaps), jnp.float32)
        # Fused layout (out, 3F): cols [0:F]=x[t-d], [F:2F]=x[t], [2F:3F]=x[t+d].
        wd.append(jnp.transpose(w_k, (1, 0, 2)).reshape(fmaps, 3 * fmaps))
        bd.append(sc * jax.random.normal(jax.random.fold_in(kd, 1), (fmaps,), jnp.float32))
        w1l, b1l = _init_linear(k1, fmaps, fmaps)
        w1.append(w1l); b1.append(b1l)
    w_out, b_out = _init_linear(keys[-1], c_out, fmaps)
    return dict(
        w_in=w_in.astype(jnp.bfloat16), b_in=b_in.reshape(fmaps, 1),
        wd=jnp.stack(wd).astype(jnp.bfloat16),
        bd=jnp.stack(bd).reshape(num_layers, fmaps, 1),
        w1=jnp.stack(w1).astype(jnp.bfloat16),
        b1=jnp.stack(b1).reshape(num_layers, fmaps, 1),
        w_out=w_out.astype(jnp.bfloat16), b_out=b_out.reshape(c_out, 1),
    )


def init_params(key, *, dim_in, num_f_maps, num_classes, num_layers, num_stages):
    assert num_f_maps == 64, "model hard-codes BatchNorm1d(64) / 64-dim seq classifier"
    keys = jax.random.split(key, num_stages + 3)
    stage1 = _init_stage(keys[0], num_layers, num_f_maps, dim_in, num_classes)
    stages = [_init_stage(keys[1 + s], num_layers, num_f_maps, num_classes, num_classes)
              for s in range(num_stages - 1)]

    kf, ks, kb = keys[num_stages], keys[num_stages + 1], keys[num_stages + 2]
    w1, b1 = _init_linear(jax.random.fold_in(kf, 0), num_f_maps, num_f_maps)
    w2, b2 = _init_linear(jax.random.fold_in(kf, 1), 2, num_f_maps)
    ad_frame = dict(w1=w1.astype(jnp.bfloat16), b1=b1.reshape(num_f_maps, 1),
                    w2=w2.astype(jnp.bfloat16), b2=b2.reshape(2, 1))

    w1s, b1s = _init_linear(jax.random.fold_in(ks, 0), 64, 64)
    w2s, b2s = _init_linear(jax.random.fold_in(ks, 1), 2, 64)
    ad_seq = dict(w1=w1s, b1=b1s, w2=w2s, b2=b2s)

    bn = dict(gamma=1.0 + 0.02 * jax.random.normal(kb, (64,), jnp.float32),
              beta=jnp.zeros((64,), jnp.float32),
              rm=jnp.zeros((64,), jnp.float32),
              rv=jnp.ones((64,), jnp.float32))
    return dict(stage1=stage1, stages=stages, ad_frame=ad_frame, ad_seq=ad_seq, bn=bn)


# ----------------------------------------------------------------------------
# Main
# ----------------------------------------------------------------------------
if __name__ == "__main__":
    B, DIM_IN, T = 2, 16, 128
    NUM_F_MAPS = 64          # fixed by the original model (BatchNorm1d(64))
    NUM_CLASSES = 8
    NUM_LAYERS = 3           # dilations 1, 2, 4
    NUM_STAGES = 2           # stage1 + 1 refinement stage

    key = jax.random.PRNGKey(0)
    k_param, k_xs, k_xt = jax.random.split(key, 3)
    params = init_params(k_param, dim_in=DIM_IN, num_f_maps=NUM_F_MAPS,
                         num_classes=NUM_CLASSES, num_layers=NUM_LAYERS,
                         num_stages=NUM_STAGES)

    x_s = jax.random.normal(k_xs, (B, DIM_IN, T), jnp.float32)
    x_t = jax.random.normal(k_xt, (B, DIM_IN, T), jnp.float32)
    mask_s = jnp.ones((B, 1, T), jnp.float32).at[0, 0, T - 32:].set(0.0)
    mask_t = jnp.ones((B, 1, T), jnp.float32).at[1, 0, :16].set(0.0)
    beta = [0.5, 0.5]

    outs = multi_stage_forward(params, x_s, x_t, mask_s, mask_t, beta,
                               reverse=False, num_layers=NUM_LAYERS)
    outs = jax.block_until_ready(outs)
    print("KERNEL_OK")
</pallas_src>

<mosaic_0001>
module attributes {stable_mosaic.version = 11 : i64} {
  func.func @_stage_kernel(%arg0: i32, %arg1: memref<1x16x256xf32, #tpu.memory_space<vmem>>, %arg2: memref<64x16xbf16, #tpu.memory_space<vmem>>, %arg3: memref<64x1xf32, #tpu.memory_space<vmem>>, %arg4: memref<3x64x192xbf16, #tpu.memory_space<vmem>>, %arg5: memref<3x64x1xf32, #tpu.memory_space<vmem>>, %arg6: memref<3x64x64xbf16, #tpu.memory_space<vmem>>, %arg7: memref<3x64x1xf32, #tpu.memory_space<vmem>>, %arg8: memref<72x64xbf16, #tpu.memory_space<vmem>>, %arg9: memref<72x1xf32, #tpu.memory_space<vmem>>, %arg10: memref<2x64xbf16, #tpu.memory_space<vmem>>, %arg11: memref<2x1xf32, #tpu.memory_space<vmem>>, %arg12: memref<1x64x256xf32, #tpu.memory_space<vmem>>, %arg13: memref<1x8x256xf32, #tpu.memory_space<vmem>>, %arg14: memref<1x8x256xf32, #tpu.memory_space<vmem>>, %arg15: memref<1x2x256xf32, #tpu.memory_space<vmem>>) attributes {dimension_semantics = [#tpu.dimension_semantics<parallel>], iteration_bounds = array<i64: 2>, scalar_prefetch = 0 : i64, scratch_operands = 0 : i64, tpu.core_type = #tpu.core_type<tc>, window_params = [{transform_indices = @transform_0, window_bounds = array<i64: 1, 16, 256>}, {pipeline_mode = #tpu.pipeline_mode<synchronous>, transform_indices = @transform_1, window_bounds = array<i64: 64, 16>}, {pipeline_mode = #tpu.pipeline_mode<synchronous>, transform_indices = @transform_2, window_bounds = array<i64: 64, 1>}, {pipeline_mode = #tpu.pipeline_mode<synchronous>, transform_indices = @transform_3, window_bounds = array<i64: 3, 64, 192>}, {pipeline_mode = #tpu.pipeline_mode<synchronous>, transform_indices = @transform_4, window_bounds = array<i64: 3, 64, 1>}, {pipeline_mode = #tpu.pipeline_mode<synchronous>, transform_indices = @transform_5, window_bounds = array<i64: 3, 64, 64>}, {pipeline_mode = #tpu.pipeline_mode<synchronous>, transform_indices = @transform_6, window_bounds = array<i64: 3, 64, 1>}, {pipeline_mode = #tpu.pipeline_mode<synchronous>, transform_indices = @transform_7, window_bounds = array<i64: 72, 64>}, {pipeline_mode = #tpu.pipeline_mode<synchronous>, transform_indices = @transform_8, window_bounds = array<i64: 72, 1>}, {pipeline_mode = #tpu.pipeline_mode<synchronous>, transform_indices = @transform_9, window_bounds = array<i64: 2, 64>}, {pipeline_mode = #tpu.pipeline_mode<synchronous>, transform_indices = @transform_10, window_bounds = array<i64: 2, 1>}, {transform_indices = @transform_11, window_bounds = array<i64: 1, 64, 256>}, {transform_indices = @transform_12, window_bounds = array<i64: 1, 8, 256>}, {transform_indices = @transform_13, window_bounds = array<i64: 1, 8, 256>}, {transform_indices = @transform_14, window_bounds = array<i64: 1, 2, 256>}]} {
    %c0 = arith.constant 0 : index
    %c0_0 = arith.constant 0 : index
    %c0_1 = arith.constant 0 : index
    %0 = vector.load %arg1[%c0, %c0_0, %c0_1] : memref<1x16x256xf32, #tpu.memory_space<vmem>>, vector<1x16x256xf32>
    %1 = vector.shape_cast %0 : vector<1x16x256xf32> to vector<16x256xf32>
    %2 = arith.truncf %1 : vector<16x256xf32> to vector<16x256xbf16>
    %c0_2 = arith.constant 0 : index
    %c0_3 = arith.constant 0 : index
    %3 = vector.load %arg2[%c0_2, %c0_3] : memref<64x16xbf16, #tpu.memory_space<vmem>>, vector<64x16xbf16>
    %cst = arith.constant dense<0.000000e+00> : vector<64x256xf32>
    %4 = tpu.matmul %3, %2, %cst {dimension_numbers = #tpu.dot_dimension_numbers<[1], [0], [0], [1], [0, 0, 1, 1], [], []>} : vector<64x16xbf16>, vector<16x256xbf16>, vector<64x256xf32> -> vector<64x256xf32>
    %c0_4 = arith.constant 0 : index
    %c0_5 = arith.constant 0 : index
    %5 = vector.load %arg3[%c0_4, %c0_5] : memref<64x1xf32, #tpu.memory_space<vmem>>, vector<64x1xf32>
    %6 = vector.broadcast %5 : vector<64x1xf32> to vector<64x256xf32>
    %7 = arith.addf %4, %6 : vector<64x256xf32>
    %8 = tpu.iota {dimensions = array<i32: 1>} : vector<1x256xi32>
    %c128_i32 = arith.constant 128 : i32
    %c0_i32 = arith.constant 0 : i32
    %9 = arith.cmpi eq, %c128_i32, %c0_i32 : i32
    %c1_i32 = arith.constant 1 : i32
    %10 = arith.select %9, %c1_i32, %c128_i32 : i32
    %11 = vector.broadcast %10 : i32 to vector<1x256xi32>
    %12 = arith.remsi %8, %11 : vector<1x256xi32>
    %c0_i32_6 = arith.constant 0 : i32
    %13 = vector.broadcast %c0_i32_6 : i32 to vector<1x256xi32>
    %14 = arith.cmpi ne, %12, %13 : vector<1x256xi32>
    %c0_i32_7 = arith.constant 0 : i32
    %15 = vector.broadcast %c0_i32_7 : i32 to vector<1x256xi32>
    %16 = arith.cmpi slt, %12, %15 : vector<1x256xi32>
    %c0_i32_8 = arith.constant 0 : i32
    %17 = arith.cmpi slt, %10, %c0_i32_8 : i32
    %18 = vector.broadcast %17 : i1 to vector<1x256xi1>
    %19 = vector.broadcast %18 : vector<1x256xi1> to vector<1x256xi1>
    %20 = arith.xori %16, %19 : vector<1x256xi1>
    %21 = arith.andi %20, %14 : vector<1x256xi1>
    %22 = vector.broadcast %10 : i32 to vector<1x256xi32>
    %23 = arith.addi %12, %22 : vector<1x256xi32>
    %24 = arith.select %21, %23, %12 : vector<1x256xi1>, vector<1x256xi32>
    %25 = arith.truncf %7 : vector<64x256xf32> to vector<64x256xbf16>
    %c1_i32_9 = arith.constant 1 : i32
    %26 = vector.broadcast %c1_i32_9 : i32 to vector<1x256xi32>
    %27 = arith.cmpi sge, %24, %26 : vector<1x256xi32>
    %cst_10 = arith.constant 0.000000e+00 : bf16
    %28 = vector.broadcast %cst_10 : bf16 to vector<64x1xbf16>
    %29 = vector.extract_strided_slice %25 {offsets = [0, 0], sizes = [64, 255], strides = [1, 1]} : vector<64x256xbf16> to vector<64x255xbf16>
    %30 = tpu.concatenate %28, %29 in 1 : vector<64x1xbf16>, vector<64x255xbf16> -> vector<64x256xbf16>
    %cst_11 = arith.constant 0.000000e+00 : bf16
    %31 = vector.shape_cast %27 : vector<1x256xi1> to vector<1x256xi1>
    %32 = vector.broadcast %31 : vector<1x256xi1> to vector<64x256xi1>
    %33 = vector.broadcast %cst_11 : bf16 to vector<64x256xbf16>
    %34 = arith.select %32, %30, %33 : vector<64x256xi1>, vector<64x256xbf16>
    %c127_i32 = arith.constant 127 : i32
    %35 = vector.broadcast %c127_i32 : i32 to vector<1x256xi32>
    %36 = arith.cmpi slt, %24, %35 : vector<1x256xi32>
    %cst_12 = arith.constant 0.000000e+00 : bf16
    %37 = vector.broadcast %cst_12 : bf16 to vector<64x1xbf16>
    %38 = vector.extract_strided_slice %25 {offsets = [0, 1], sizes = [64, 255], strides = [1, 1]} : vector<64x256xbf16> to vector<64x255xbf16>
    %39 = tpu.concatenate %38, %37 in 1 : vector<64x255xbf16>, vector<64x1xbf16> -> vector<64x256xbf16>
    %cst_13 = arith.constant 0.000000e+00 : bf16
    %40 = vector.shape_cast %36 : vector<1x256xi1> to vector<1x256xi1>
    %41 = vector.broadcast %40 : vector<1x256xi1> to vector<64x256xi1>
    %42 = vector.broadcast %cst_13 : bf16 to vector<64x256xbf16>
    %43 = arith.select %41, %39, %42 : vector<64x256xi1>, vector<64x256xbf16>
    %44 = tpu.concatenate %34, %25, %43 in 0 : vector<64x256xbf16>, vector<64x256xbf16>, vector<64x256xbf16> -> vector<192x256xbf16>
    %c0_14 = arith.constant 0 : index
    %c0_15 = arith.constant 0 : index
    %c0_16 = arith.constant 0 : index
    %45 = vector.load %arg4[%c0_14, %c0_15, %c0_16] : memref<3x64x192xbf16, #tpu.memory_space<vmem>>, vector<1x64x192xbf16>
    %46 = vector.shape_cast %45 : vector<1x64x192xbf16> to vector<64x192xbf16>
    %cst_17 = arith.constant dense<0.000000e+00> : vector<64x256xf32>
    %47 = tpu.matmul %46, %44, %cst_17 {dimension_numbers = #tpu.dot_dimension_numbers<[1], [0], [0], [1], [0, 0, 1, 1], [], []>} : vector<64x192xbf16>, vector<192x256xbf16>, vector<64x256xf32> -> vector<64x256xf32>
    %c0_18 = arith.constant 0 : index
    %c0_19 = arith.constant 0 : index
    %c0_20 = arith.constant 0 : index
    %48 = vector.load %arg5[%c0_18, %c0_19, %c0_20] : memref<3x64x1xf32, #tpu.memory_space<vmem>>, vector<1x64x1xf32>
    %49 = vector.shape_cast %48 : vector<1x64x1xf32> to vector<64x1xf32>
    %50 = vector.broadcast %49 : vector<64x1xf32> to vector<64x256xf32>
    %51 = arith.addf %47, %50 : vector<64x256xf32>
    %cst_21 = arith.constant 0.000000e+00 : f32
    %52 = vector.broadcast %cst_21 : f32 to vector<64x256xf32>
    %53 = arith.maximumf %51, %52 : vector<64x256xf32>
    %c0_22 = arith.constant 0 : index
    %c0_23 = arith.constant 0 : index
    %c0_24 = arith.constant 0 : index
    %54 = vector.load %arg6[%c0_22, %c0_23, %c0_24] : memref<3x64x64xbf16, #tpu.memory_space<vmem>>, vector<1x64x64xbf16>
    %55 = vector.shape_cast %54 : vector<1x64x64xbf16> to vector<64x64xbf16>
    %56 = arith.truncf %53 : vector<64x256xf32> to vector<64x256xbf16>
    %cst_25 = arith.constant dense<0.000000e+00> : vector<64x256xf32>
    %57 = tpu.matmul %55, %56, %cst_25 {dimension_numbers = #tpu.dot_dimension_numbers<[1], [0], [0], [1], [0, 0, 1, 1], [], []>} : vector<64x64xbf16>, vector<64x256xbf16>, vector<64x256xf32> -> vector<64x256xf32>
    %c0_26 = arith.constant 0 : index
    %c0_27 = arith.constant 0 : index
    %c0_28 = arith.constant 0 : index
    %58 = vector.load %arg7[%c0_26, %c0_27, %c0_28] : memref<3x64x1xf32, #tpu.memory_space<vmem>>, vector<1x64x1xf32>
    %59 = vector.shape_cast %58 : vector<1x64x1xf32> to vector<64x1xf32>
    %60 = vector.broadcast %59 : vector<64x1xf32> to vector<64x256xf32>
    %61 = arith.addf %57, %60 : vector<64x256xf32>
    %62 = arith.addf %7, %61 : vector<64x256xf32>
    %63 = arith.truncf %62 : vector<64x256xf32> to vector<64x256xbf16>
    %c2_i32 = arith.constant 2 : i32
    %64 = vector.broadcast %c2_i32 : i32 to vector<1x256xi32>
    %65 = arith.cmpi sge, %24, %64 : vector<1x256xi32>
    %cst_29 = arith.constant 0.000000e+00 : bf16
    %66 = vector.broadcast %cst_29 : bf16 to vector<64x2xbf16>
    %67 = vector.extract_strided_slice %63 {offsets = [0, 0], sizes = [64, 254], strides = [1, 1]} : vector<64x256xbf16> to vector<64x254xbf16>
    %68 = tpu.concatenate %66, %67 in 1 : vector<64x2xbf16>, vector<64x254xbf16> -> vector<64x256xbf16>
    %cst_30 = arith.constant 0.000000e+00 : bf16
    %69 = vector.shape_cast %65 : vector<1x256xi1> to vector<1x256xi1>
    %70 = vector.broadcast %69 : vector<1x256xi1> to vector<64x256xi1>
    %71 = vector.broadcast %cst_30 : bf16 to vector<64x256xbf16>
    %72 = arith.select %70, %68, %71 : vector<64x256xi1>, vector<64x256xbf16>
    %c126_i32 = arith.constant 126 : i32
    %73 = vector.broadcast %c126_i32 : i32 to vector<1x256xi32>
    %74 = arith.cmpi slt, %24, %73 : vector<1x256xi32>
    %cst_31 = arith.constant 0.000000e+00 : bf16
    %75 = vector.broadcast %cst_31 : bf16 to vector<64x2xbf16>
    %76 = vector.extract_strided_slice %63 {offsets = [0, 2], sizes = [64, 254], strides = [1, 1]} : vector<64x256xbf16> to vector<64x254xbf16>
    %77 = tpu.concatenate %76, %75 in 1 : vector<64x254xbf16>, vector<64x2xbf16> -> vector<64x256xbf16>
    %cst_32 = arith.constant 0.000000e+00 : bf16
    %78 = vector.shape_cast %74 : vector<1x256xi1> to vector<1x256xi1>
    %79 = vector.broadcast %78 : vector<1x256xi1> to vector<64x256xi1>
    %80 = vector.broadcast %cst_32 : bf16 to vector<64x256xbf16>
    %81 = arith.select %79, %77, %80 : vector<64x256xi1>, vector<64x256xbf16>
    %82 = tpu.concatenate %72, %63, %81 in 0 : vector<64x256xbf16>, vector<64x256xbf16>, vector<64x256xbf16> -> vector<192x256xbf16>
    %c1 = arith.constant 1 : index
    %c0_33 = arith.constant 0 : index
    %c0_34 = arith.constant 0 : index
    %83 = vector.load %arg4[%c1, %c0_33, %c0_34] : memref<3x64x192xbf16, #tpu.memory_space<vmem>>, vector<1x64x192xbf16>
    %84 = vector.shape_cast %83 : vector<1x64x192xbf16> to vector<64x192xbf16>
    %cst_35 = arith.constant dense<0.000000e+00> : vector<64x256xf32>
    %85 = tpu.matmul %84, %82, %cst_35 {dimension_numbers = #tpu.dot_dimension_numbers<[1], [0], [0], [1], [0, 0, 1, 1], [], []>} : vector<64x192xbf16>, vector<192x256xbf16>, vector<64x256xf32> -> vector<64x256xf32>
    %c1_36 = arith.constant 1 : index
    %c0_37 = arith.constant 0 : index
    %c0_38 = arith.constant 0 : index
    %86 = vector.load %arg5[%c1_36, %c0_37, %c0_38] : memref<3x64x1xf32, #tpu.memory_space<vmem>>, vector<1x64x1xf32>
    %87 = vector.shape_cast %86 : vector<1x64x1xf32> to vector<64x1xf32>
    %88 = vector.broadcast %87 : vector<64x1xf32> to vector<64x256xf32>
    %89 = arith.addf %85, %88 : vector<64x256xf32>
    %cst_39 = arith.constant 0.000000e+00 : f32
    %90 = vector.broadcast %cst_39 : f32 to vector<64x256xf32>
    %91 = arith.maximumf %89, %90 : vector<64x256xf32>
    %c1_40 = arith.constant 1 : index
    %c0_41 = arith.constant 0 : index
    %c0_42 = arith.constant 0 : index
    %92 = vector.load %arg6[%c1_40, %c0_41, %c0_42] : memref<3x64x64xbf16, #tpu.memory_space<vmem>>, vector<1x64x64xbf16>
    %93 = vector.shape_cast %92 : vector<1x64x64xbf16> to vector<64x64xbf16>
    %94 = arith.truncf %91 : vector<64x256xf32> to vector<64x256xbf16>
    %cst_43 = arith.constant dense<0.000000e+00> : vector<64x256xf32>
    %95 = tpu.matmul %93, %94, %cst_43 {dimension_numbers = #tpu.dot_dimension_numbers<[1], [0], [0], [1], [0, 0, 1, 1], [], []>} : vector<64x64xbf16>, vector<64x256xbf16>, vector<64x256xf32> -> vector<64x256xf32>
    %c1_44 = arith.constant 1 : index
    %c0_45 = arith.constant 0 : index
    %c0_46 = arith.constant 0 : index
    %96 = vector.load %arg7[%c1_44, %c0_45, %c0_46] : memref<3x64x1xf32, #tpu.memory_space<vmem>>, vector<1x64x1xf32>
    %97 = vector.shape_cast %96 : vector<1x64x1xf32> to vector<64x1xf32>
    %98 = vector.broadcast %97 : vector<64x1xf32> to vector<64x256xf32>
    %99 = arith.addf %95, %98 : vector<64x256xf32>
    %100 = arith.addf %62, %99 : vector<64x256xf32>
    %101 = arith.truncf %100 : vector<64x256xf32> to vector<64x256xbf16>
    %c4_i32 = arith.constant 4 : i32
    %102 = vector.broadcast %c4_i32 : i32 to vector<1x256xi32>
    %103 = arith.cmpi sge, %24, %102 : vector<1x256xi32>
    %cst_47 = arith.constant 0.000000e+00 : bf16
    %104 = vector.broadcast %cst_47 : bf16 to vector<64x4xbf16>
    %105 = vector.extract_strided_slice %101 {offsets = [0, 0], sizes = [64, 252], strides = [1, 1]} : vector<64x256xbf16> to vector<64x252xbf16>
    %106 = tpu.concatenate %104, %105 in 1 : vector<64x4xbf16>, vector<64x252xbf16> -> vector<64x256xbf16>
    %cst_48 = arith.constant 0.000000e+00 : bf16
    %107 = vector.shape_cast %103 : vector<1x256xi1> to vector<1x256xi1>
    %108 = vector.broadcast %107 : vector<1x256xi1> to vector<64x256xi1>
    %109 = vector.broadcast %cst_48 : bf16 to vector<64x256xbf16>
    %110 = arith.select %108, %106, %109 : vector<64x256xi1>, vector<64x256xbf16>
    %c124_i32 = arith.constant 124 : i32
    %111 = vector.broadcast %c124_i32 : i32 to vector<1x256xi32>
    %112 = arith.cmpi slt, %24, %111 : vector<1x256xi32>
    %cst_49 = arith.constant 0.000000e+00 : bf16
    %113 = vector.broadcast %cst_49 : bf16 to vector<64x4xbf16>
    %114 = vector.extract_strided_slice %101 {offsets = [0, 4], sizes = [64, 252], strides = [1, 1]} : vector<64x256xbf16> to vector<64x252xbf16>
    %115 = tpu.concatenate %114, %113 in 1 : vector<64x252xbf16>, vector<64x4xbf16> -> vector<64x256xbf16>
    %cst_50 = arith.constant 0.000000e+00 : bf16
    %116 = vector.shape_cast %112 : vector<1x256xi1> to vector<1x256xi1>
    %117 = vector.broadcast %116 : vector<1x256xi1> to vector<64x256xi1>
    %118 = vector.broadcast %cst_50 : bf16 to vector<64x256xbf16>
    %119 = arith.select %117, %115, %118 : vector<64x256xi1>, vector<64x256xbf16>
    %120 = tpu.concatenate %110, %101, %119 in 0 : vector<64x256xbf16>, vector<64x256xbf16>, vector<64x256xbf16> -> vector<192x256xbf16>
    %c2 = arith.constant 2 : index
    %c0_51 = arith.constant 0 : index
    %c0_52 = arith.constant 0 : index
    %121 = vector.load %arg4[%c2, %c0_51, %c0_52] : memref<3x64x192xbf16, #tpu.memory_space<vmem>>, vector<1x64x192xbf16>
    %122 = vector.shape_cast %121 : vector<1x64x192xbf16> to vector<64x192xbf16>
    %cst_53 = arith.constant dense<0.000000e+00> : vector<64x256xf32>
    %123 = tpu.matmul %122, %120, %cst_53 {dimension_numbers = #tpu.dot_dimension_numbers<[1], [0], [0], [1], [0, 0, 1, 1], [], []>} : vector<64x192xbf16>, vector<192x256xbf16>, vector<64x256xf32> -> vector<64x256xf32>
    %c2_54 = arith.constant 2 : index
    %c0_55 = arith.constant 0 : index
    %c0_56 = arith.constant 0 : index
    %124 = vector.load %arg5[%c2_54, %c0_55, %c0_56] : memref<3x64x1xf32, #tpu.memory_space<vmem>>, vector<1x64x1xf32>
    %125 = vector.shape_cast %124 : vector<1x64x1xf32> to vector<64x1xf32>
    %126 = vector.broadcast %125 : vector<64x1xf32> to vector<64x256xf32>
    %127 = arith.addf %123, %126 : vector<64x256xf32>
    %cst_57 = arith.constant 0.000000e+00 : f32
    %128 = vector.broadcast %cst_57 : f32 to vector<64x256xf32>
    %129 = arith.maximumf %127, %128 : vector<64x256xf32>
    %c2_58 = arith.constant 2 : index
    %c0_59 = arith.constant 0 : index
    %c0_60 = arith.constant 0 : index
    %130 = vector.load %arg6[%c2_58, %c0_59, %c0_60] : memref<3x64x64xbf16, #tpu.memory_space<vmem>>, vector<1x64x64xbf16>
    %131 = vector.shape_cast %130 : vector<1x64x64xbf16> to vector<64x64xbf16>
    %132 = arith.truncf %129 : vector<64x256xf32> to vector<64x256xbf16>
    %cst_61 = arith.constant dense<0.000000e+00> : vector<64x256xf32>
    %133 = tpu.matmul %131, %132, %cst_61 {dimension_numbers = #tpu.dot_dimension_numbers<[1], [0], [0], [1], [0, 0, 1, 1], [], []>} : vector<64x64xbf16>, vector<64x256xbf16>, vector<64x256xf32> -> vector<64x256xf32>
    %c2_62 = arith.constant 2 : index
    %c0_63 = arith.constant 0 : index
    %c0_64 = arith.constant 0 : index
    %134 = vector.load %arg7[%c2_62, %c0_63, %c0_64] : memref<3x64x1xf32, #tpu.memory_space<vmem>>, vector<1x64x1xf32>
    %135 = vector.shape_cast %134 : vector<1x64x1xf32> to vector<64x1xf32>
    %136 = vector.broadcast %135 : vector<64x1xf32> to vector<64x256xf32>
    %137 = arith.addf %133, %136 : vector<64x256xf32>
    %138 = arith.addf %100, %137 : vector<64x256xf32>
    %c0_65 = arith.constant 0 : index
    %c0_66 = arith.constant 0 : index
    %c0_67 = arith.constant 0 : index
    %139 = vector.load %arg12[%c0_65, %c0_66, %c0_67] : memref<1x64x256xf32, #tpu.memory_space<vmem>>, vector<1x64x256xf32>
    %140 = vector.shape_cast %139 : vector<1x64x256xf32> to vector<64x256xf32>
    %141 = vector.shape_cast %138 : vector<64x256xf32> to vector<1x64x256xf32>
    tpu.vector_store %arg12[%c0_65, %c0_66, %c0_67], %141 {strides = array<i32>} : memref<1x64x256xf32, #tpu.memory_space<vmem>>, vector<1x64x256xf32>,
    %142 = arith.truncf %138 : vector<64x256xf32> to vector<64x256xbf16>
    %c0_68 = arith.constant 0 : index
    %c0_69 = arith.constant 0 : index
    %143 = vector.load %arg8[%c0_68, %c0_69] : memref<72x64xbf16, #tpu.memory_space<vmem>>, vector<72x64xbf16>
    %cst_70 = arith.constant dense<0.000000e+00> : vector<72x256xf32>
    %144 = tpu.matmul %143, %142, %cst_70 {dimension_numbers = #tpu.dot_dimension_numbers<[1], [0], [0], [1], [0, 0, 1, 1], [], []>} : vector<72x64xbf16>, vector<64x256xbf16>, vector<72x256xf32> -> vector<72x256xf32>
    %c0_71 = arith.constant 0 : index
    %c0_72 = arith.constant 0 : index
    %145 = vector.load %arg9[%c0_71, %c0_72] : memref<72x1xf32, #tpu.memory_space<vmem>>, vector<72x1xf32>
    %146 = vector.broadcast %145 : vector<72x1xf32> to vector<72x256xf32>
    %147 = arith.addf %144, %146 : vector<72x256xf32>
    %148 = vector.extract_strided_slice %147 {offsets = [0, 0], sizes = [8, 256], strides = [1, 1]} : vector<72x256xf32> to vector<8x256xf32>
    %c0_73 = arith.constant 0 : index
    %c0_74 = arith.constant 0 : index
    %c0_75 = arith.constant 0 : index
    %149 = vector.load %arg13[%c0_73, %c0_74, %c0_75] : memref<1x8x256xf32, #tpu.memory_space<vmem>>, vector<1x8x256xf32>
    %150 = vector.shape_cast %149 : vector<1x8x256xf32> to vector<8x256xf32>
    %151 = vector.shape_cast %148 : vector<8x256xf32> to vector<1x8x256xf32>
    tpu.vector_store %arg13[%c0_73, %c0_74, %c0_75], %151 {strides = array<i32>} : memref<1x8x256xf32, #tpu.memory_space<vmem>>, vector<1x8x256xf32>,
    %152 = vector.extract_strided_slice %147 {offsets = [8, 0], sizes = [64, 256], strides = [1, 1]} : vector<72x256xf32> to vector<64x256xf32>
    %cst_76 = arith.constant 0.000000e+00 : f32
    %153 = vector.broadcast %cst_76 : f32 to vector<64x256xf32>
    %154 = arith.maximumf %152, %153 : vector<64x256xf32>
    %cst_77 = arith.constant dense<0xFF800000> : vector<256xf32>
    %155 = vector.multi_reduction <maximumf>, %148, %cst_77 [0] : vector<8x256xf32> to vector<256xf32>
    %156 = vector.shape_cast %155 : vector<256xf32> to vector<1x256xf32>
    %157 = vector.broadcast %156 : vector<1x256xf32> to vector<8x256xf32>
    %158 = arith.subf %148, %157 : vector<8x256xf32>
    %159 = math.exp %158 : vector<8x256xf32>
    %cst_78 = arith.constant dense<0.000000e+00> : vector<256xf32>
    %160 = vector.multi_reduction <add>, %159, %cst_78 [0] : vector<8x256xf32> to vector<256xf32>
    %161 = vector.shape_cast %160 : vector<256xf32> to vector<1x256xf32>
    %162 = vector.broadcast %161 : vector<1x256xf32> to vector<8x256xf32>
    %163 = arith.divf %159, %162 : vector<8x256xf32>
    %c0_79 = arith.constant 0 : index
    %c0_80 = arith.constant 0 : index
    %c0_81 = arith.constant 0 : index
    %164 = vector.load %arg14[%c0_79, %c0_80, %c0_81] : memref<1x8x256xf32, #tpu.memory_space<vmem>>, vector<1x8x256xf32>
    %165 = vector.shape_cast %164 : vector<1x8x256xf32> to vector<8x256xf32>
    %166 = vector.shape_cast %163 : vector<8x256xf32> to vector<1x8x256xf32>
    tpu.vector_store %arg14[%c0_79, %c0_80, %c0_81], %166 {strides = array<i32>} : memref<1x8x256xf32, #tpu.memory_space<vmem>>, vector<1x8x256xf32>,
    %c0_82 = arith.constant 0 : index
    %c0_83 = arith.constant 0 : index
    %167 = vector.load %arg10[%c0_82, %c0_83] : memref<2x64xbf16, #tpu.memory_space<vmem>>, vector<2x64xbf16>
    %168 = arith.truncf %154 : vector<64x256xf32> to vector<64x256xbf16>
    %cst_84 = arith.constant dense<0.000000e+00> : vector<2x256xf32>
    %169 = tpu.matmul %167, %168, %cst_84 {dimension_numbers = #tpu.dot_dimension_numbers<[1], [0], [0], [1], [0, 0, 1, 1], [], []>} : vector<2x64xbf16>, vector<64x256xbf16>, vector<2x256xf32> -> vector<2x256xf32>
    %c0_85 = arith.constant 0 : index
    %c0_86 = arith.constant 0 : index
    %170 = vector.load %arg11[%c0_85, %c0_86] : memref<2x1xf32, #tpu.memory_space<vmem>>, vector<2x1xf32>
    %171 = vector.broadcast %170 : vector<2x1xf32> to vector<2x256xf32>
    %172 = arith.addf %169, %171 : vector<2x256xf32>
    %c0_87 = arith.constant 0 : index
    %c0_88 = arith.constant 0 : index
    %c0_89 = arith.constant 0 : index
    %173 = vector.load %arg15[%c0_87, %c0_88, %c0_89] : memref<1x2x256xf32, #tpu.memory_space<vmem>>, vector<1x2x256xf32>
    %174 = vector.shape_cast %173 : vector<1x2x256xf32> to vector<2x256xf32>
    %175 = vector.shape_cast %172 : vector<2x256xf32> to vector<1x2x256xf32>
    tpu.vector_store %arg15[%c0_87, %c0_88, %c0_89], %175 {strides = array<i32>} : memref<1x2x256xf32, #tpu.memory_space<vmem>>, vector<1x2x256xf32>,
    return
  }
  func.func @transform_0(%arg0: i32) -> (i32, i32, i32) {
    %c0_i32 = arith.constant 0 : i32
    %c0_i32_0 = arith.constant 0 : i32
    %c0_i32_1 = arith.constant 0 : i32
    return %arg0, %c0_i32, %c0_i32_0 : i32, i32, i32
  }
  func.func @transform_1(%arg0: i32) -> (i32, i32) {
    %c0_i32 = arith.constant 0 : i32
    %c0_i32_0 = arith.constant 0 : i32
    %c0_i32_1 = arith.constant 0 : i32
    return %c0_i32, %c0_i32_0 : i32, i32
  }
  func.func @transform_2(%arg0: i32) -> (i32, i32) {
    %c0_i32 = arith.constant 0 : i32
    %c0_i32_0 = arith.constant 0 : i32
    %c0_i32_1 = arith.constant 0 : i32
    return %c0_i32, %c0_i32_0 : i32, i32
  }
  func.func @transform_3(%arg0: i32) -> (i32, i32, i32) {
    %c0_i32 = arith.constant 0 : i32
    %c0_i32_0 = arith.constant 0 : i32
    %c0_i32_1 = arith.constant 0 : i32
    %c0_i32_2 = arith.constant 0 : i32
    return %c0_i32, %c0_i32_0, %c0_i32_1 : i32, i32, i32
  }
  func.func @transform_4(%arg0: i32) -> (i32, i32, i32) {
    %c0_i32 = arith.constant 0 : i32
    %c0_i32_0 = arith.constant 0 : i32
    %c0_i32_1 = arith.constant 0 : i32
    %c0_i32_2 = arith.constant 0 : i32
    return %c0_i32, %c0_i32_0, %c0_i32_1 : i32, i32, i32
  }
  func.func @transform_5(%arg0: i32) -> (i32, i32, i32) {
    %c0_i32 = arith.constant 0 : i32
    %c0_i32_0 = arith.constant 0 : i32
    %c0_i32_1 = arith.constant 0 : i32
    %c0_i32_2 = arith.constant 0 : i32
    return %c0_i32, %c0_i32_0, %c0_i32_1 : i32, i32, i32
  }
  func.func @transform_6(%arg0: i32) -> (i32, i32, i32) {
    %c0_i32 = arith.constant 0 : i32
    %c0_i32_0 = arith.constant 0 : i32
    %c0_i32_1 = arith.constant 0 : i32
    %c0_i32_2 = arith.constant 0 : i32
    return %c0_i32, %c0_i32_0, %c0_i32_1 : i32, i32, i32
  }
  func.func @transform_7(%arg0: i32) -> (i32, i32) {
    %c0_i32 = arith.constant 0 : i32
    %c0_i32_0 = arith.constant 0 : i32
    %c0_i32_1 = arith.constant 0 : i32
    return %c0_i32, %c0_i32_0 : i32, i32
  }
  func.func @transform_8(%arg0: i32) -> (i32, i32) {
    %c0_i32 = arith.constant 0 : i32
    %c0_i32_0 = arith.constant 0 : i32
    %c0_i32_1 = arith.constant 0 : i32
    return %c0_i32, %c0_i32_0 : i32, i32
  }
  func.func @transform_9(%arg0: i32) -> (i32, i32) {
    %c0_i32 = arith.constant 0 : i32
    %c0_i32_0 = arith.constant 0 : i32
    %c0_i32_1 = arith.constant 0 : i32
    return %c0_i32, %c0_i32_0 : i32, i32
  }
  func.func @transform_10(%arg0: i32) -> (i32, i32) {
    %c0_i32 = arith.constant 0 : i32
    %c0_i32_0 = arith.constant 0 : i32
    %c0_i32_1 = arith.constant 0 : i32
    return %c0_i32, %c0_i32_0 : i32, i32
  }
  func.func @transform_11(%arg0: i32) -> (i32, i32, i32) {
    %c0_i32 = arith.constant 0 : i32
    %c0_i32_0 = arith.constant 0 : i32
    %c0_i32_1 = arith.constant 0 : i32
    return %arg0, %c0_i32, %c0_i32_0 : i32, i32, i32
  }
  func.func @transform_12(%arg0: i32) -> (i32, i32, i32) {
    %c0_i32 = arith.constant 0 : i32
    %c0_i32_0 = arith.constant 0 : i32
    %c0_i32_1 = arith.constant 0 : i32
    return %arg0, %c0_i32, %c0_i32_0 : i32, i32, i32
  }
  func.func @transform_13(%arg0: i32) -> (i32, i32, i32) {
    %c0_i32 = arith.constant 0 : i32
    %c0_i32_0 = arith.constant 0 : i32
    %c0_i32_1 = arith.constant 0 : i32
    return %arg0, %c0_i32, %c0_i32_0 : i32, i32, i32
  }
  func.func @transform_14(%arg0: i32) -> (i32, i32, i32) {
    %c0_i32 = arith.constant 0 : i32
    %c0_i32_0 = arith.constant 0 : i32
    %c0_i32_1 = arith.constant 0 : i32
    return %arg0, %c0_i32, %c0_i32_0 : i32, i32, i32
  }
}

module attributes {stable_mosaic.version = 11 : i64} {
  func.func @_stage_kernel(%arg0: i32, %arg1: memref<1x8x256xf32, #tpu.memory_space<vmem>>, %arg2: memref<64x8xbf16, #tpu.memory_space<vmem>>, %arg3: memref<64x1xf32, #tpu.memory_space<vmem>>, %arg4: memref<3x64x192xbf16, #tpu.memory_space<vmem>>, %arg5: memref<3x64x1xf32, #tpu.memory_space<vmem>>, %arg6: memref<3x64x64xbf16, #tpu.memory_space<vmem>>, %arg7: memref<3x64x1xf32, #tpu.memory_space<vmem>>, %arg8: memref<72x64xbf16, #tpu.memory_space<vmem>>, %arg9: memref<72x1xf32, #tpu.memory_space<vmem>>, %arg10: memref<2x64xbf16, #tpu.memory_space<vmem>>, %arg11: memref<2x1xf32, #tpu.memory_space<vmem>>, %arg12: memref<1x64x256xf32, #tpu.memory_space<vmem>>, %arg13: memref<1x8x256xf32, #tpu.memory_space<vmem>>, %arg14: memref<1x8x256xf32, #tpu.memory_space<vmem>>, %arg15: memref<1x2x256xf32, #tpu.memory_space<vmem>>) attributes {dimension_semantics = [#tpu.dimension_semantics<parallel>], iteration_bounds = array<i64: 2>, scalar_prefetch = 0 : i64, scratch_operands = 0 : i64, tpu.core_type = #tpu.core_type<tc>, window_params = [{transform_indices = @transform_0, window_bounds = array<i64: 1, 8, 256>}, {pipeline_mode = #tpu.pipeline_mode<synchronous>, transform_indices = @transform_1, window_bounds = array<i64: 64, 8>}, {pipeline_mode = #tpu.pipeline_mode<synchronous>, transform_indices = @transform_2, window_bounds = array<i64: 64, 1>}, {pipeline_mode = #tpu.pipeline_mode<synchronous>, transform_indices = @transform_3, window_bounds = array<i64: 3, 64, 192>}, {pipeline_mode = #tpu.pipeline_mode<synchronous>, transform_indices = @transform_4, window_bounds = array<i64: 3, 64, 1>}, {pipeline_mode = #tpu.pipeline_mode<synchronous>, transform_indices = @transform_5, window_bounds = array<i64: 3, 64, 64>}, {pipeline_mode = #tpu.pipeline_mode<synchronous>, transform_indices = @transform_6, window_bounds = array<i64: 3, 64, 1>}, {pipeline_mode = #tpu.pipeline_mode<synchronous>, transform_indices = @transform_7, window_bounds = array<i64: 72, 64>}, {pipeline_mode = #tpu.pipeline_mode<synchronous>, transform_indices = @transform_8, window_bounds = array<i64: 72, 1>}, {pipeline_mode = #tpu.pipeline_mode<synchronous>, transform_indices = @transform_9, window_bounds = array<i64: 2, 64>}, {pipeline_mode = #tpu.pipeline_mode<synchronous>, transform_indices = @transform_10, window_bounds = array<i64: 2, 1>}, {transform_indices = @transform_11, window_bounds = array<i64: 1, 64, 256>}, {transform_indices = @transform_12, window_bounds = array<i64: 1, 8, 256>}, {transform_indices = @transform_13, window_bounds = array<i64: 1, 8, 256>}, {transform_indices = @transform_14, window_bounds = array<i64: 1, 2, 256>}]} {
    %c0 = arith.constant 0 : index
    %c0_0 = arith.constant 0 : index
    %c0_1 = arith.constant 0 : index
    %0 = vector.load %arg1[%c0, %c0_0, %c0_1] : memref<1x8x256xf32, #tpu.memory_space<vmem>>, vector<1x8x256xf32>
    %1 = vector.shape_cast %0 : vector<1x8x256xf32> to vector<8x256xf32>
    %2 = arith.truncf %1 : vector<8x256xf32> to vector<8x256xbf16>
    %c0_2 = arith.constant 0 : index
    %c0_3 = arith.constant 0 : index
    %3 = vector.load %arg2[%c0_2, %c0_3] : memref<64x8xbf16, #tpu.memory_space<vmem>>, vector<64x8xbf16>
    %cst = arith.constant dense<0.000000e+00> : vector<64x256xf32>
    %4 = tpu.matmul %3, %2, %cst {dimension_numbers = #tpu.dot_dimension_numbers<[1], [0], [0], [1], [0, 0, 1, 1], [], []>} : vector<64x8xbf16>, vector<8x256xbf16>, vector<64x256xf32> -> vector<64x256xf32>
    %c0_4 = arith.constant 0 : index
    %c0_5 = arith.constant 0 : index
    %5 = vector.load %arg3[%c0_4, %c0_5] : memref<64x1xf32, #tpu.memory_space<vmem>>, vector<64x1xf32>
    %6 = vector.broadcast %5 : vector<64x1xf32> to vector<64x256xf32>
    %7 = arith.addf %4, %6 : vector<64x256xf32>
    %8 = tpu.iota {dimensions = array<i32: 1>} : vector<1x256xi32>
    %c128_i32 = arith.constant 128 : i32
    %c0_i32 = arith.constant 0 : i32
    %9 = arith.cmpi eq, %c128_i32, %c0_i32 : i32
    %c1_i32 = arith.constant 1 : i32
    %10 = arith.select %9, %c1_i32, %c128_i32 : i32
    %11 = vector.broadcast %10 : i32 to vector<1x256xi32>
    %12 = arith.remsi %8, %11 : vector<1x256xi32>
    %c0_i32_6 = arith.constant 0 : i32
    %13 = vector.broadcast %c0_i32_6 : i32 to vector<1x256xi32>
    %14 = arith.cmpi ne, %12, %13 : vector<1x256xi32>
    %c0_i32_7 = arith.constant 0 : i32
    %15 = vector.broadcast %c0_i32_7 : i32 to vector<1x256xi32>
    %16 = arith.cmpi slt, %12, %15 : vector<1x256xi32>
    %c0_i32_8 = arith.constant 0 : i32
    %17 = arith.cmpi slt, %10, %c0_i32_8 : i32
    %18 = vector.broadcast %17 : i1 to vector<1x256xi1>
    %19 = vector.broadcast %18 : vector<1x256xi1> to vector<1x256xi1>
    %20 = arith.xori %16, %19 : vector<1x256xi1>
    %21 = arith.andi %20, %14 : vector<1x256xi1>
    %22 = vector.broadcast %10 : i32 to vector<1x256xi32>
    %23 = arith.addi %12, %22 : vector<1x256xi32>
    %24 = arith.select %21, %23, %12 : vector<1x256xi1>, vector<1x256xi32>
    %25 = arith.truncf %7 : vector<64x256xf32> to vector<64x256xbf16>
    %c1_i32_9 = arith.constant 1 : i32
    %26 = vector.broadcast %c1_i32_9 : i32 to vector<1x256xi32>
    %27 = arith.cmpi sge, %24, %26 : vector<1x256xi32>
    %cst_10 = arith.constant 0.000000e+00 : bf16
    %28 = vector.broadcast %cst_10 : bf16 to vector<64x1xbf16>
    %29 = vector.extract_strided_slice %25 {offsets = [0, 0], sizes = [64, 255], strides = [1, 1]} : vector<64x256xbf16> to vector<64x255xbf16>
    %30 = tpu.concatenate %28, %29 in 1 : vector<64x1xbf16>, vector<64x255xbf16> -> vector<64x256xbf16>
    %cst_11 = arith.constant 0.000000e+00 : bf16
    %31 = vector.shape_cast %27 : vector<1x256xi1> to vector<1x256xi1>
    %32 = vector.broadcast %31 : vector<1x256xi1> to vector<64x256xi1>
    %33 = vector.broadcast %cst_11 : bf16 to vector<64x256xbf16>
    %34 = arith.select %32, %30, %33 : vector<64x256xi1>, vector<64x256xbf16>
    %c127_i32 = arith.constant 127 : i32
    %35 = vector.broadcast %c127_i32 : i32 to vector<1x256xi32>
    %36 = arith.cmpi slt, %24, %35 : vector<1x256xi32>
    %cst_12 = arith.constant 0.000000e+00 : bf16
    %37 = vector.broadcast %cst_12 : bf16 to vector<64x1xbf16>
    %38 = vector.extract_strided_slice %25 {offsets = [0, 1], sizes = [64, 255], strides = [1, 1]} : vector<64x256xbf16> to vector<64x255xbf16>
    %39 = tpu.concatenate %38, %37 in 1 : vector<64x255xbf16>, vector<64x1xbf16> -> vector<64x256xbf16>
    %cst_13 = arith.constant 0.000000e+00 : bf16
    %40 = vector.shape_cast %36 : vector<1x256xi1> to vector<1x256xi1>
    %41 = vector.broadcast %40 : vector<1x256xi1> to vector<64x256xi1>
    %42 = vector.broadcast %cst_13 : bf16 to vector<64x256xbf16>
    %43 = arith.select %41, %39, %42 : vector<64x256xi1>, vector<64x256xbf16>
    %44 = tpu.concatenate %34, %25, %43 in 0 : vector<64x256xbf16>, vector<64x256xbf16>, vector<64x256xbf16> -> vector<192x256xbf16>
    %c0_14 = arith.constant 0 : index
    %c0_15 = arith.constant 0 : index
    %c0_16 = arith.constant 0 : index
    %45 = vector.load %arg4[%c0_14, %c0_15, %c0_16] : memref<3x64x192xbf16, #tpu.memory_space<vmem>>, vector<1x64x192xbf16>
    %46 = vector.shape_cast %45 : vector<1x64x192xbf16> to vector<64x192xbf16>
    %cst_17 = arith.constant dense<0.000000e+00> : vector<64x256xf32>
    %47 = tpu.matmul %46, %44, %cst_17 {dimension_numbers = #tpu.dot_dimension_numbers<[1], [0], [0], [1], [0, 0, 1, 1], [], []>} : vector<64x192xbf16>, vector<192x256xbf16>, vector<64x256xf32> -> vector<64x256xf32>
    %c0_18 = arith.constant 0 : index
    %c0_19 = arith.constant 0 : index
    %c0_20 = arith.constant 0 : index
    %48 = vector.load %arg5[%c0_18, %c0_19, %c0_20] : memref<3x64x1xf32, #tpu.memory_space<vmem>>, vector<1x64x1xf32>
    %49 = vector.shape_cast %48 : vector<1x64x1xf32> to vector<64x1xf32>
    %50 = vector.broadcast %49 : vector<64x1xf32> to vector<64x256xf32>
    %51 = arith.addf %47, %50 : vector<64x256xf32>
    %cst_21 = arith.constant 0.000000e+00 : f32
    %52 = vector.broadcast %cst_21 : f32 to vector<64x256xf32>
    %53 = arith.maximumf %51, %52 : vector<64x256xf32>
    %c0_22 = arith.constant 0 : index
    %c0_23 = arith.constant 0 : index
    %c0_24 = arith.constant 0 : index
    %54 = vector.load %arg6[%c0_22, %c0_23, %c0_24] : memref<3x64x64xbf16, #tpu.memory_space<vmem>>, vector<1x64x64xbf16>
    %55 = vector.shape_cast %54 : vector<1x64x64xbf16> to vector<64x64xbf16>
    %56 = arith.truncf %53 : vector<64x256xf32> to vector<64x256xbf16>
    %cst_25 = arith.constant dense<0.000000e+00> : vector<64x256xf32>
    %57 = tpu.matmul %55, %56, %cst_25 {dimension_numbers = #tpu.dot_dimension_numbers<[1], [0], [0], [1], [0, 0, 1, 1], [], []>} : vector<64x64xbf16>, vector<64x256xbf16>, vector<64x256xf32> -> vector<64x256xf32>
    %c0_26 = arith.constant 0 : index
    %c0_27 = arith.constant 0 : index
    %c0_28 = arith.constant 0 : index
    %58 = vector.load %arg7[%c0_26, %c0_27, %c0_28] : memref<3x64x1xf32, #tpu.memory_space<vmem>>, vector<1x64x1xf32>
    %59 = vector.shape_cast %58 : vector<1x64x1xf32> to vector<64x1xf32>
    %60 = vector.broadcast %59 : vector<64x1xf32> to vector<64x256xf32>
    %61 = arith.addf %57, %60 : vector<64x256xf32>
    %62 = arith.addf %7, %61 : vector<64x256xf32>
    %63 = arith.truncf %62 : vector<64x256xf32> to vector<64x256xbf16>
    %c2_i32 = arith.constant 2 : i32
    %64 = vector.broadcast %c2_i32 : i32 to vector<1x256xi32>
    %65 = arith.cmpi sge, %24, %64 : vector<1x256xi32>
    %cst_29 = arith.constant 0.000000e+00 : bf16
    %66 = vector.broadcast %cst_29 : bf16 to vector<64x2xbf16>
    %67 = vector.extract_strided_slice %63 {offsets = [0, 0], sizes = [64, 254], strides = [1, 1]} : vector<64x256xbf16> to vector<64x254xbf16>
    %68 = tpu.concatenate %66, %67 in 1 : vector<64x2xbf16>, vector<64x254xbf16> -> vector<64x256xbf16>
    %cst_30 = arith.constant 0.000000e+00 : bf16
    %69 = vector.shape_cast %65 : vector<1x256xi1> to vector<1x256xi1>
    %70 = vector.broadcast %69 : vector<1x256xi1> to vector<64x256xi1>
    %71 = vector.broadcast %cst_30 : bf16 to vector<64x256xbf16>
    %72 = arith.select %70, %68, %71 : vector<64x256xi1>, vector<64x256xbf16>
    %c126_i32 = arith.constant 126 : i32
    %73 = vector.broadcast %c126_i32 : i32 to vector<1x256xi32>
    %74 = arith.cmpi slt, %24, %73 : vector<1x256xi32>
    %cst_31 = arith.constant 0.000000e+00 : bf16
    %75 = vector.broadcast %cst_31 : bf16 to vector<64x2xbf16>
    %76 = vector.extract_strided_slice %63 {offsets = [0, 2], sizes = [64, 254], strides = [1, 1]} : vector<64x256xbf16> to vector<64x254xbf16>
    %77 = tpu.concatenate %76, %75 in 1 : vector<64x254xbf16>, vector<64x2xbf16> -> vector<64x256xbf16>
    %cst_32 = arith.constant 0.000000e+00 : bf16
    %78 = vector.shape_cast %74 : vector<1x256xi1> to vector<1x256xi1>
    %79 = vector.broadcast %78 : vector<1x256xi1> to vector<64x256xi1>
    %80 = vector.broadcast %cst_32 : bf16 to vector<64x256xbf16>
    %81 = arith.select %79, %77, %80 : vector<64x256xi1>, vector<64x256xbf16>
    %82 = tpu.concatenate %72, %63, %81 in 0 : vector<64x256xbf16>, vector<64x256xbf16>, vector<64x256xbf16> -> vector<192x256xbf16>
    %c1 = arith.constant 1 : index
    %c0_33 = arith.constant 0 : index
    %c0_34 = arith.constant 0 : index
    %83 = vector.load %arg4[%c1, %c0_33, %c0_34] : memref<3x64x192xbf16, #tpu.memory_space<vmem>>, vector<1x64x192xbf16>
    %84 = vector.shape_cast %83 : vector<1x64x192xbf16> to vector<64x192xbf16>
    %cst_35 = arith.constant dense<0.000000e+00> : vector<64x256xf32>
    %85 = tpu.matmul %84, %82, %cst_35 {dimension_numbers = #tpu.dot_dimension_numbers<[1], [0], [0], [1], [0, 0, 1, 1], [], []>} : vector<64x192xbf16>, vector<192x256xbf16>, vector<64x256xf32> -> vector<64x256xf32>
    %c1_36 = arith.constant 1 : index
    %c0_37 = arith.constant 0 : index
    %c0_38 = arith.constant 0 : index
    %86 = vector.load %arg5[%c1_36, %c0_37, %c0_38] : memref<3x64x1xf32, #tpu.memory_space<vmem>>, vector<1x64x1xf32>
    %87 = vector.shape_cast %86 : vector<1x64x1xf32> to vector<64x1xf32>
    %88 = vector.broadcast %87 : vector<64x1xf32> to vector<64x256xf32>
    %89 = arith.addf %85, %88 : vector<64x256xf32>
    %cst_39 = arith.constant 0.000000e+00 : f32
    %90 = vector.broadcast %cst_39 : f32 to vector<64x256xf32>
    %91 = arith.maximumf %89, %90 : vector<64x256xf32>
    %c1_40 = arith.constant 1 : index
    %c0_41 = arith.constant 0 : index
    %c0_42 = arith.constant 0 : index
    %92 = vector.load %arg6[%c1_40, %c0_41, %c0_42] : memref<3x64x64xbf16, #tpu.memory_space<vmem>>, vector<1x64x64xbf16>
    %93 = vector.shape_cast %92 : vector<1x64x64xbf16> to vector<64x64xbf16>
    %94 = arith.truncf %91 : vector<64x256xf32> to vector<64x256xbf16>
    %cst_43 = arith.constant dense<0.000000e+00> : vector<64x256xf32>
    %95 = tpu.matmul %93, %94, %cst_43 {dimension_numbers = #tpu.dot_dimension_numbers<[1], [0], [0], [1], [0, 0, 1, 1], [], []>} : vector<64x64xbf16>, vector<64x256xbf16>, vector<64x256xf32> -> vector<64x256xf32>
    %c1_44 = arith.constant 1 : index
    %c0_45 = arith.constant 0 : index
    %c0_46 = arith.constant 0 : index
    %96 = vector.load %arg7[%c1_44, %c0_45, %c0_46] : memref<3x64x1xf32, #tpu.memory_space<vmem>>, vector<1x64x1xf32>
    %97 = vector.shape_cast %96 : vector<1x64x1xf32> to vector<64x1xf32>
    %98 = vector.broadcast %97 : vector<64x1xf32> to vector<64x256xf32>
    %99 = arith.addf %95, %98 : vector<64x256xf32>
    %100 = arith.addf %62, %99 : vector<64x256xf32>
    %101 = arith.truncf %100 : vector<64x256xf32> to vector<64x256xbf16>
    %c4_i32 = arith.constant 4 : i32
    %102 = vector.broadcast %c4_i32 : i32 to vector<1x256xi32>
    %103 = arith.cmpi sge, %24, %102 : vector<1x256xi32>
    %cst_47 = arith.constant 0.000000e+00 : bf16
    %104 = vector.broadcast %cst_47 : bf16 to vector<64x4xbf16>
    %105 = vector.extract_strided_slice %101 {offsets = [0, 0], sizes = [64, 252], strides = [1, 1]} : vector<64x256xbf16> to vector<64x252xbf16>
    %106 = tpu.concatenate %104, %105 in 1 : vector<64x4xbf16>, vector<64x252xbf16> -> vector<64x256xbf16>
    %cst_48 = arith.constant 0.000000e+00 : bf16
    %107 = vector.shape_cast %103 : vector<1x256xi1> to vector<1x256xi1>
    %108 = vector.broadcast %107 : vector<1x256xi1> to vector<64x256xi1>
    %109 = vector.broadcast %cst_48 : bf16 to vector<64x256xbf16>
    %110 = arith.select %108, %106, %109 : vector<64x256xi1>, vector<64x256xbf16>
    %c124_i32 = arith.constant 124 : i32
    %111 = vector.broadcast %c124_i32 : i32 to vector<1x256xi32>
    %112 = arith.cmpi slt, %24, %111 : vector<1x256xi32>
    %cst_49 = arith.constant 0.000000e+00 : bf16
    %113 = vector.broadcast %cst_49 : bf16 to vector<64x4xbf16>
    %114 = vector.extract_strided_slice %101 {offsets = [0, 4], sizes = [64, 252], strides = [1, 1]} : vector<64x256xbf16> to vector<64x252xbf16>
    %115 = tpu.concatenate %114, %113 in 1 : vector<64x252xbf16>, vector<64x4xbf16> -> vector<64x256xbf16>
    %cst_50 = arith.constant 0.000000e+00 : bf16
    %116 = vector.shape_cast %112 : vector<1x256xi1> to vector<1x256xi1>
    %117 = vector.broadcast %116 : vector<1x256xi1> to vector<64x256xi1>
    %118 = vector.broadcast %cst_50 : bf16 to vector<64x256xbf16>
    %119 = arith.select %117, %115, %118 : vector<64x256xi1>, vector<64x256xbf16>
    %120 = tpu.concatenate %110, %101, %119 in 0 : vector<64x256xbf16>, vector<64x256xbf16>, vector<64x256xbf16> -> vector<192x256xbf16>
    %c2 = arith.constant 2 : index
    %c0_51 = arith.constant 0 : index
    %c0_52 = arith.constant 0 : index
    %121 = vector.load %arg4[%c2, %c0_51, %c0_52] : memref<3x64x192xbf16, #tpu.memory_space<vmem>>, vector<1x64x192xbf16>
    %122 = vector.shape_cast %121 : vector<1x64x192xbf16> to vector<64x192xbf16>
    %cst_53 = arith.constant dense<0.000000e+00> : vector<64x256xf32>
    %123 = tpu.matmul %122, %120, %cst_53 {dimension_numbers = #tpu.dot_dimension_numbers<[1], [0], [0], [1], [0, 0, 1, 1], [], []>} : vector<64x192xbf16>, vector<192x256xbf16>, vector<64x256xf32> -> vector<64x256xf32>
    %c2_54 = arith.constant 2 : index
    %c0_55 = arith.constant 0 : index
    %c0_56 = arith.constant 0 : index
    %124 = vector.load %arg5[%c2_54, %c0_55, %c0_56] : memref<3x64x1xf32, #tpu.memory_space<vmem>>, vector<1x64x1xf32>
    %125 = vector.shape_cast %124 : vector<1x64x1xf32> to vector<64x1xf32>
    %126 = vector.broadcast %125 : vector<64x1xf32> to vector<64x256xf32>
    %127 = arith.addf %123, %126 : vector<64x256xf32>
    %cst_57 = arith.constant 0.000000e+00 : f32
    %128 = vector.broadcast %cst_57 : f32 to vector<64x256xf32>
    %129 = arith.maximumf %127, %128 : vector<64x256xf32>
    %c2_58 = arith.constant 2 : index
    %c0_59 = arith.constant 0 : index
    %c0_60 = arith.constant 0 : index
    %130 = vector.load %arg6[%c2_58, %c0_59, %c0_60] : memref<3x64x64xbf16, #tpu.memory_space<vmem>>, vector<1x64x64xbf16>
    %131 = vector.shape_cast %130 : vector<1x64x64xbf16> to vector<64x64xbf16>
    %132 = arith.truncf %129 : vector<64x256xf32> to vector<64x256xbf16>
    %cst_61 = arith.constant dense<0.000000e+00> : vector<64x256xf32>
    %133 = tpu.matmul %131, %132, %cst_61 {dimension_numbers = #tpu.dot_dimension_numbers<[1], [0], [0], [1], [0, 0, 1, 1], [], []>} : vector<64x64xbf16>, vector<64x256xbf16>, vector<64x256xf32> -> vector<64x256xf32>
    %c2_62 = arith.constant 2 : index
    %c0_63 = arith.constant 0 : index
    %c0_64 = arith.constant 0 : index
    %134 = vector.load %arg7[%c2_62, %c0_63, %c0_64] : memref<3x64x1xf32, #tpu.memory_space<vmem>>, vector<1x64x1xf32>
    %135 = vector.shape_cast %134 : vector<1x64x1xf32> to vector<64x1xf32>
    %136 = vector.broadcast %135 : vector<64x1xf32> to vector<64x256xf32>
    %137 = arith.addf %133, %136 : vector<64x256xf32>
    %138 = arith.addf %100, %137 : vector<64x256xf32>
    %c0_65 = arith.constant 0 : index
    %c0_66 = arith.constant 0 : index
    %c0_67 = arith.constant 0 : index
    %139 = vector.load %arg12[%c0_65, %c0_66, %c0_67] : memref<1x64x256xf32, #tpu.memory_space<vmem>>, vector<1x64x256xf32>
    %140 = vector.shape_cast %139 : vector<1x64x256xf32> to vector<64x256xf32>
    %141 = vector.shape_cast %138 : vector<64x256xf32> to vector<1x64x256xf32>
    tpu.vector_store %arg12[%c0_65, %c0_66, %c0_67], %141 {strides = array<i32>} : memref<1x64x256xf32, #tpu.memory_space<vmem>>, vector<1x64x256xf32>,
    %142 = arith.truncf %138 : vector<64x256xf32> to vector<64x256xbf16>
    %c0_68 = arith.constant 0 : index
    %c0_69 = arith.constant 0 : index
    %143 = vector.load %arg8[%c0_68, %c0_69] : memref<72x64xbf16, #tpu.memory_space<vmem>>, vector<72x64xbf16>
    %cst_70 = arith.constant dense<0.000000e+00> : vector<72x256xf32>
    %144 = tpu.matmul %143, %142, %cst_70 {dimension_numbers = #tpu.dot_dimension_numbers<[1], [0], [0], [1], [0, 0, 1, 1], [], []>} : vector<72x64xbf16>, vector<64x256xbf16>, vector<72x256xf32> -> vector<72x256xf32>
    %c0_71 = arith.constant 0 : index
    %c0_72 = arith.constant 0 : index
    %145 = vector.load %arg9[%c0_71, %c0_72] : memref<72x1xf32, #tpu.memory_space<vmem>>, vector<72x1xf32>
    %146 = vector.broadcast %145 : vector<72x1xf32> to vector<72x256xf32>
    %147 = arith.addf %144, %146 : vector<72x256xf32>
    %148 = vector.extract_strided_slice %147 {offsets = [0, 0], sizes = [8, 256], strides = [1, 1]} : vector<72x256xf32> to vector<8x256xf32>
    %c0_73 = arith.constant 0 : index
    %c0_74 = arith.constant 0 : index
    %c0_75 = arith.constant 0 : index
    %149 = vector.load %arg13[%c0_73, %c0_74, %c0_75] : memref<1x8x256xf32, #tpu.memory_space<vmem>>, vector<1x8x256xf32>
    %150 = vector.shape_cast %149 : vector<1x8x256xf32> to vector<8x256xf32>
    %151 = vector.shape_cast %148 : vector<8x256xf32> to vector<1x8x256xf32>
    tpu.vector_store %arg13[%c0_73, %c0_74, %c0_75], %151 {strides = array<i32>} : memref<1x8x256xf32, #tpu.memory_space<vmem>>, vector<1x8x256xf32>,
    %152 = vector.extract_strided_slice %147 {offsets = [8, 0], sizes = [64, 256], strides = [1, 1]} : vector<72x256xf32> to vector<64x256xf32>
    %cst_76 = arith.constant 0.000000e+00 : f32
    %153 = vector.broadcast %cst_76 : f32 to vector<64x256xf32>
    %154 = arith.maximumf %152, %153 : vector<64x256xf32>
    %cst_77 = arith.constant dense<0xFF800000> : vector<256xf32>
    %155 = vector.multi_reduction <maximumf>, %148, %cst_77 [0] : vector<8x256xf32> to vector<256xf32>
    %156 = vector.shape_cast %155 : vector<256xf32> to vector<1x256xf32>
    %157 = vector.broadcast %156 : vector<1x256xf32> to vector<8x256xf32>
    %158 = arith.subf %148, %157 : vector<8x256xf32>
    %159 = math.exp %158 : vector<8x256xf32>
    %cst_78 = arith.constant dense<0.000000e+00> : vector<256xf32>
    %160 = vector.multi_reduction <add>, %159, %cst_78 [0] : vector<8x256xf32> to vector<256xf32>
    %161 = vector.shape_cast %160 : vector<256xf32> to vector<1x256xf32>
    %162 = vector.broadcast %161 : vector<1x256xf32> to vector<8x256xf32>
    %163 = arith.divf %159, %162 : vector<8x256xf32>
    %c0_79 = arith.constant 0 : index
    %c0_80 = arith.constant 0 : index
    %c0_81 = arith.constant 0 : index
    %164 = vector.load %arg14[%c0_79, %c0_80, %c0_81] : memref<1x8x256xf32, #tpu.memory_space<vmem>>, vector<1x8x256xf32>
    %165 = vector.shape_cast %164 : vector<1x8x256xf32> to vector<8x256xf32>
    %166 = vector.shape_cast %163 : vector<8x256xf32> to vector<1x8x256xf32>
    tpu.vector_store %arg14[%c0_79, %c0_80, %c0_81], %166 {strides = array<i32>} : memref<1x8x256xf32, #tpu.memory_space<vmem>>, vector<1x8x256xf32>,
    %c0_82 = arith.constant 0 : index
    %c0_83 = arith.constant 0 : index
    %167 = vector.load %arg10[%c0_82, %c0_83] : memref<2x64xbf16, #tpu.memory_space<vmem>>, vector<2x64xbf16>
    %168 = arith.truncf %154 : vector<64x256xf32> to vector<64x256xbf16>
    %cst_84 = arith.constant dense<0.000000e+00> : vector<2x256xf32>
    %169 = tpu.matmul %167, %168, %cst_84 {dimension_numbers = #tpu.dot_dimension_numbers<[1], [0], [0], [1], [0, 0, 1, 1], [], []>} : vector<2x64xbf16>, vector<64x256xbf16>, vector<2x256xf32> -> vector<2x256xf32>
    %c0_85 = arith.constant 0 : index
    %c0_86 = arith.constant 0 : index
    %170 = vector.load %arg11[%c0_85, %c0_86] : memref<2x1xf32, #tpu.memory_space<vmem>>, vector<2x1xf32>
    %171 = vector.broadcast %170 : vector<2x1xf32> to vector<2x256xf32>
    %172 = arith.addf %169, %171 : vector<2x256xf32>
    %c0_87 = arith.constant 0 : index
    %c0_88 = arith.constant 0 : index
    %c0_89 = arith.constant 0 : index
    %173 = vector.load %arg15[%c0_87, %c0_88, %c0_89] : memref<1x2x256xf32, #tpu.memory_space<vmem>>, vector<1x2x256xf32>
    %174 = vector.shape_cast %173 : vector<1x2x256xf32> to vector<2x256xf32>
    %175 = vector.shape_cast %172 : vector<2x256xf32> to vector<1x2x256xf32>
    tpu.vector_store %arg15[%c0_87, %c0_88, %c0_89], %175 {strides = array<i32>} : memref<1x2x256xf32, #tpu.memory_space<vmem>>, vector<1x2x256xf32>,
    return
  }
  func.func @transform_0(%arg0: i32) -> (i32, i32, i32) {
    %c0_i32 = arith.constant 0 : i32
    %c0_i32_0 = arith.constant 0 : i32
    %c0_i32_1 = arith.constant 0 : i32
    return %arg0, %c0_i32, %c0_i32_0 : i32, i32, i32
  }
  func.func @transform_1(%arg0: i32) -> (i32, i32) {
    %c0_i32 = arith.constant 0 : i32
    %c0_i32_0 = arith.constant 0 : i32
    %c0_i32_1 = arith.constant 0 : i32
    return %c0_i32, %c0_i32_0 : i32, i32
  }
  func.func @transform_2(%arg0: i32) -> (i32, i32) {
    %c0_i32 = arith.constant 0 : i32
    %c0_i32_0 = arith.constant 0 : i32
    %c0_i32_1 = arith.constant 0 : i32
    return %c0_i32, %c0_i32_0 : i32, i32
  }
  func.func @transform_3(%arg0: i32) -> (i32, i32, i32) {
    %c0_i32 = arith.constant 0 : i32
    %c0_i32_0 = arith.constant 0 : i32
    %c0_i32_1 = arith.constant 0 : i32
    %c0_i32_2 = arith.constant 0 : i32
    return %c0_i32, %c0_i32_0, %c0_i32_1 : i32, i32, i32
  }
  func.func @transform_4(%arg0: i32) -> (i32, i32, i32) {
    %c0_i32 = arith.constant 0 : i32
    %c0_i32_0 = arith.constant 0 : i32
    %c0_i32_1 = arith.constant 0 : i32
    %c0_i32_2 = arith.constant 0 : i32
    return %c0_i32, %c0_i32_0, %c0_i32_1 : i32, i32, i32
  }
  func.func @transform_5(%arg0: i32) -> (i32, i32, i32) {
    %c0_i32 = arith.constant 0 : i32
    %c0_i32_0 = arith.constant 0 : i32
    %c0_i32_1 = arith.constant 0 : i32
    %c0_i32_2 = arith.constant 0 : i32
    return %c0_i32, %c0_i32_0, %c0_i32_1 : i32, i32, i32
  }
  func.func @transform_6(%arg0: i32) -> (i32, i32, i32) {
    %c0_i32 = arith.constant 0 : i32
    %c0_i32_0 = arith.constant 0 : i32
    %c0_i32_1 = arith.constant 0 : i32
    %c0_i32_2 = arith.constant 0 : i32
    return %c0_i32, %c0_i32_0, %c0_i32_1 : i32, i32, i32
  }
  func.func @transform_7(%arg0: i32) -> (i32, i32) {
    %c0_i32 = arith.constant 0 : i32
    %c0_i32_0 = arith.constant 0 : i32
    %c0_i32_1 = arith.constant 0 : i32
    return %c0_i32, %c0_i32_0 : i32, i32
  }
  func.func @transform_8(%arg0: i32) -> (i32, i32) {
    %c0_i32 = arith.constant 0 : i32
    %c0_i32_0 = arith.constant 0 : i32
    %c0_i32_1 = arith.constant 0 : i32
    return %c0_i32, %c0_i32_0 : i32, i32
  }
  func.func @transform_9(%arg0: i32) -> (i32, i32) {
    %c0_i32 = arith.constant 0 : i32
    %c0_i32_0 = arith.constant 0 : i32
    %c0_i32_1 = arith.constant 0 : i32
    return %c0_i32, %c0_i32_0 : i32, i32
  }
  func.func @transform_10(%arg0: i32) -> (i32, i32) {
    %c0_i32 = arith.constant 0 : i32
    %c0_i32_0 = arith.constant 0 : i32
    %c0_i32_1 = arith.constant 0 : i32
    return %c0_i32, %c0_i32_0 : i32, i32
  }
  func.func @transform_11(%arg0: i32) -> (i32, i32, i32) {
    %c0_i32 = arith.constant 0 : i32
    %c0_i32_0 = arith.constant 0 : i32
    %c0_i32_1 = arith.constant 0 : i32
    return %arg0, %c0_i32, %c0_i32_0 : i32, i32, i32
  }
  func.func @transform_12(%arg0: i32) -> (i32, i32, i32) {
    %c0_i32 = arith.constant 0 : i32
    %c0_i32_0 = arith.constant 0 : i32
    %c0_i32_1 = arith.constant 0 : i32
    return %arg0, %c0_i32, %c0_i32_0 : i32, i32, i32
  }
  func.func @transform_13(%arg0: i32) -> (i32, i32, i32) {
    %c0_i32 = arith.constant 0 : i32
    %c0_i32_0 = arith.constant 0 : i32
    %c0_i32_1 = arith.constant 0 : i32
    return %arg0, %c0_i32, %c0_i32_0 : i32, i32, i32
  }
  func.func @transform_14(%arg0: i32) -> (i32, i32, i32) {
    %c0_i32 = arith.constant 0 : i32
    %c0_i32_0 = arith.constant 0 : i32
    %c0_i32_1 = arith.constant 0 : i32
    return %arg0, %c0_i32, %c0_i32_0 : i32, i32, i32
  }
}

</mosaic_0001>

<llo_original>
// kernel: _pipeline.3
$region0: #{_pipeline.3}
  #allocation0 [shape = 'u32[]', space=smem, size = 0x4, offset = 0x4, fixed_abs, tag = 'smem constant byte address 0x4 - core index']
  #allocation1 [shape = 'u32[144,128]{1,0:T(1,128)}', space=vmem, size = 0x12000, scoped, tag = 'internal scratch']
  %s0 = inlined_call_operand.vmem [shape: f32[2,8,256], index: 0, kind: input, shape index: {}]
  %s1 = inlined_call_operand.vmem [shape: bf16[64,8], index: 1, kind: input, shape index: {}]
  %s2 = inlined_call_operand.vmem [shape: f32[64,1], index: 2, kind: input, shape index: {}]
  %s3 = inlined_call_operand.vmem [shape: bf16[3,64,192], index: 3, kind: input, shape index: {}]
  %s4 = inlined_call_operand.vmem [shape: f32[3,64,1], index: 4, kind: input, shape index: {}]
  %s5 = inlined_call_operand.vmem [shape: bf16[3,64,64], index: 5, kind: input, shape index: {}]
  %s6 = inlined_call_operand.vmem [shape: f32[3,64,1], index: 6, kind: input, shape index: {}]
  %s7 = inlined_call_operand.vmem [shape: bf16[72,64], index: 7, kind: input, shape index: {}]
  %s8 = inlined_call_operand.vmem [shape: f32[72,1], index: 8, kind: input, shape index: {}]
  %s9 = inlined_call_operand.vmem [shape: bf16[2,64], index: 9, kind: input, shape index: {}]
  %s10 = inlined_call_operand.vmem [shape: f32[2,1], index: 10, kind: input, shape index: {}]
  %s11 = inlined_call_operand.vmem [shape: f32[2,64,256], index: 11, kind: output, shape index: {0}]
  %s12 = inlined_call_operand.vmem [shape: f32[2,8,256], index: 12, kind: output, shape index: {1}]
  %s13 = inlined_call_operand.vmem [shape: f32[2,8,256], index: 13, kind: output, shape index: {2}]
  %s14 = inlined_call_operand.vmem [shape: f32[2,2,256], index: 14, kind: output, shape index: {3}]
  %15 = xla_tuple %s11, %s12, %s13, %s14
  %s16 = sld [smem:[#allocation0]]
  $region101: #{_pipeline.3} parent=0
    _
  %s18 = ssub.s32 1, %s16
  %s19 = scalar_select 0, %s18, %s16
  loop: start=0, step=1, limit=4
  $region2: #{_pipeline.3} parent=0 // loop_pre_header
    _
  $region3: #{_pipeline.3} parent=0 // loop_header
    %s21 = sphi 0, %s25
    %p22 = scmp.ge.s32.totalorder %s21, 4
    %s31 = sphi 0, %s33
    %s34 = sphi 0, %s31
    %s35 = sphi 0, %s34
    %s51 = sphi 0, %s35
    %s55 = sphi 0, %s55
    %s57 = sphi 0, %s55
    %s58 = sphi 0, %s57
    %s72 = sphi 0, %s58
    %s76 = sphi 0, %s76
    %s78 = sphi 0, %s76
    %s79 = sphi 0, %s78
    %s93 = sphi 0, %s79
    %s97 = sphi 0, %s97
    %s99 = sphi 0, %s97
    %s100 = sphi 0, %s99
    %s114 = sphi 0, %s100
    %s118 = sphi 0, %s118
    %s120 = sphi 0, %s118
    %s121 = sphi 0, %s120
    %s135 = sphi 0, %s121
    %s139 = sphi 0, %s139
    %s141 = sphi 0, %s139
    %s142 = sphi 0, %s141
    %s156 = sphi 0, %s142
    %s160 = sphi 0, %s160
    %s162 = sphi 0, %s160
    %s163 = sphi 0, %s162
    %s177 = sphi 0, %s163
    %s181 = sphi 0, %s181
    %s183 = sphi 0, %s181
    %s184 = sphi 0, %s183
    %s198 = sphi 0, %s184
    %s202 = sphi 0, %s202
    %s204 = sphi 0, %s202
    %s205 = sphi 0, %s204
    %s219 = sphi 0, %s205
    %s223 = sphi 0, %s223
    %s225 = sphi 0, %s223
    %s226 = sphi 0, %s225
    %s240 = sphi 0, %s226
    %s244 = sphi 0, %s244
    %s246 = sphi 0, %s244
    %s247 = sphi 0, %s246
    %s261 = sphi 0, %s247
    %s267 = sphi 0, %s269
    %s270 = sphi 0, %s267
    %s271 = sphi 0, %s270
    %s287 = sphi 0, %s271
    %s293 = sphi 0, %s295
    %s296 = sphi 0, %s293
    %s297 = sphi 0, %s296
    %s313 = sphi 0, %s297
    %s319 = sphi 0, %s321
    %s322 = sphi 0, %s319
    %s323 = sphi 0, %s322
    %s339 = sphi 0, %s323
    %s345 = sphi 0, %s347
    %s348 = sphi 0, %s345
    %s349 = sphi 0, %s348
    %s365 = sphi 0, %s349
  $region4: #{_pipeline.3} parent=0 // loop_header_branch
    %24 = sbr.rel (%p22) target = $region8
  $region5: #{_pipeline.3} parent=0 // loop_body
    %s26 = ssub.s32 %s21, 1
    %s27 = ssub.s32 %s21, 2
    %s28 = sadd.s32 %s21, 1
    %s29 = ssub.s32 %s21, %s28
    %p30 = scmp.eq.s32.totalorder %s29, 0
    %s32 = sadd.s32 %s31, 1
    %s33 = scalar_select %p30, %s31, %s32
    %p36 = pneg %p30
    %p37 = scmp.eq.s32.totalorder %s21, 1
    %p38 = por %p36, %p37
    %p39 = scmp.ne.s32.totalorder %s31, %s34
    %p40 = scmp.eq.s32.totalorder %s21, 0
    %p41 = por %p39, %p40
    %p42 = scmp.ne.s32.totalorder %s31, %s34
    %p43 = scmp.eq.s32.totalorder %s26, 1
    %p44 = por %p42, %p43
    %p45 = scmp.ne.s32.totalorder %s34, %s35
    %p46 = scmp.eq.s32.totalorder %s26, 0
    %p47 = por %p45, %p46
    %p48 = scmp.ne.s32.totalorder %s34, %s35
    %p49 = scmp.eq.s32.totalorder %s27, 1
    %p50 = por %p48, %p49
    %p52 = scmp.ne.s32.totalorder %s35, %s51
    %p53 = scmp.eq.s32.totalorder %s27, 0
    %p54 = por %p52, %p53
    %s56 = sadd.s32 %s55, 1
    %p59 = scmp.eq.s32.totalorder %s21, 1
    %p60 = scmp.ne.s32.totalorder %s55, %s57
    %p61 = scmp.eq.s32.totalorder %s21, 0
    %p62 = por %p60, %p61
    %p63 = scmp.ne.s32.totalorder %s55, %s57
    %p64 = scmp.eq.s32.totalorder %s26, 1
    %p65 = por %p63, %p64
    %p66 = scmp.ne.s32.totalorder %s57, %s58
    %p67 = scmp.eq.s32.totalorder %s26, 0
    %p68 = por %p66, %p67
    %p69 = scmp.ne.s32.totalorder %s57, %s58
    %p70 = scmp.eq.s32.totalorder %s27, 1
    %p71 = por %p69, %p70
    %p73 = scmp.ne.s32.totalorder %s58, %s72
    %p74 = scmp.eq.s32.totalorder %s27, 0
    %p75 = por %p73, %p74
    %s77 = sadd.s32 %s76, 1
    %p80 = scmp.eq.s32.totalorder %s21, 1
    %p81 = scmp.ne.s32.totalorder %s76, %s78
    %p82 = scmp.eq.s32.totalorder %s21, 0
    %p83 = por %p81, %p82
    %p84 = scmp.ne.s32.totalorder %s76, %s78
    %p85 = scmp.eq.s32.totalorder %s26, 1
    %p86 = por %p84, %p85
    %p87 = scmp.ne.s32.totalorder %s78, %s79
    %p88 = scmp.eq.s32.totalorder %s26, 0
    %p89 = por %p87, %p88
    %p90 = scmp.ne.s32.totalorder %s78, %s79
    %p91 = scmp.eq.s32.totalorder %s27, 1
    %p92 = por %p90, %p91
    %p94 = scmp.ne.s32.totalorder %s79, %s93
    %p95 = scmp.eq.s32.totalorder %s27, 0
    %p96 = por %p94, %p95
    %s98 = sadd.s32 %s97, 1
    %p101 = scmp.eq.s32.totalorder %s21, 1
    %p102 = scmp.ne.s32.totalorder %s97, %s99
    %p103 = scmp.eq.s32.totalorder %s21, 0
    %p104 = por %p102, %p103
    %p105 = scmp.ne.s32.totalorder %s97, %s99
    %p106 = scmp.eq.s32.totalorder %s26, 1
    %p107 = por %p105, %p106
    %p108 = scmp.ne.s32.totalorder %s99, %s100
    %p109 = scmp.eq.s32.totalorder %s26, 0
    %p110 = por %p108, %p109
    %p111 = scmp.ne.s32.totalorder %s99, %s100
    %p112 = scmp.eq.s32.totalorder %s27, 1
    %p113 = por %p111, %p112
    %p115 = scmp.ne.s32.totalorder %s100, %s114
    %p116 = scmp.eq.s32.totalorder %s27, 0
    %p117 = por %p115, %p116
    %s119 = sadd.s32 %s118, 1
    %p122 = scmp.eq.s32.totalorder %s21, 1
    %p123 = scmp.ne.s32.totalorder %s118, %s120
    %p124 = scmp.eq.s32.totalorder %s21, 0
    %p125 = por %p123, %p124
    %p126 = scmp.ne.s32.totalorder %s118, %s120
    %p127 = scmp.eq.s32.totalorder %s26, 1
    %p128 = por %p126, %p127
    %p129 = scmp.ne.s32.totalorder %s120, %s121
    %p130 = scmp.eq.s32.totalorder %s26, 0
    %p131 = por %p129, %p130
    %p132 = scmp.ne.s32.totalorder %s120, %s121
    %p133 = scmp.eq.s32.totalorder %s27, 1
    %p134 = por %p132, %p133
    %p136 = scmp.ne.s32.totalorder %s121, %s135
    %p137 = scmp.eq.s32.totalorder %s27, 0
    %p138 = por %p136, %p137
    %s140 = sadd.s32 %s139, 1
    %p143 = scmp.eq.s32.totalorder %s21, 1
    %p144 = scmp.ne.s32.totalorder %s139, %s141
    %p145 = scmp.eq.s32.totalorder %s21, 0
    %p146 = por %p144, %p145
    %p147 = scmp.ne.s32.totalorder %s139, %s141
    %p148 = scmp.eq.s32.totalorder %s26, 1
    %p149 = por %p147, %p148
    %p150 = scmp.ne.s32.totalorder %s141, %s142
    %p151 = scmp.eq.s32.totalorder %s26, 0
    %p152 = por %p150, %p151
    %p153 = scmp.ne.s32.totalorder %s141, %s142
    %p154 = scmp.eq.s32.totalorder %s27, 1
    %p155 = por %p153, %p154
    %p157 = scmp.ne.s32.totalorder %s142, %s156
    %p158 = scmp.eq.s32.totalorder %s27, 0
    %p159 = por %p157, %p158
    %s161 = sadd.s32 %s160, 1
    %p164 = scmp.eq.s32.totalorder %s21, 1
    %p165 = scmp.ne.s32.totalorder %s160, %s162
    %p166 = scmp.eq.s32.totalorder %s21, 0
    %p167 = por %p165, %p166
    %p168 = scmp.ne.s32.totalorder %s160, %s162
    %p169 = scmp.eq.s32.totalorder %s26, 1
    %p170 = por %p168, %p169
    %p171 = scmp.ne.s32.totalorder %s162, %s163
    %p172 = scmp.eq.s32.totalorder %s26, 0
    %p173 = por %p171, %p172
    %p174 = scmp.ne.s32.totalorder %s162, %s163
    %p175 = scmp.eq.s32.totalorder %s27, 1
    %p176 = por %p174, %p175
    %p178 = scmp.ne.s32.totalorder %s163, %s177
    %p179 = scmp.eq.s32.totalorder %s27, 0
    %p180 = por %p178, %p179
    %s182 = sadd.s32 %s181, 1
    %p185 = scmp.eq.s32.totalorder %s21, 1
    %p186 = scmp.ne.s32.totalorder %s181, %s183
    %p187 = scmp.eq.s32.totalorder %s21, 0
    %p188 = por %p186, %p187
    %p189 = scmp.ne.s32.totalorder %s181, %s183
    %p190 = scmp.eq.s32.totalorder %s26, 1
    %p191 = por %p189, %p190
    %p192 = scmp.ne.s32.totalorder %s183, %s184
    %p193 = scmp.eq.s32.totalorder %s26, 0
    %p194 = por %p192, %p193
    %p195 = scmp.ne.s32.totalorder %s183, %s184
    %p196 = scmp.eq.s32.totalorder %s27, 1
    %p197 = por %p195, %p196
    %p199 = scmp.ne.s32.totalorder %s184, %s198
    %p200 = scmp.eq.s32.totalorder %s27, 0
    %p201 = por %p199, %p200
    %s203 = sadd.s32 %s202, 1
    %p206 = scmp.eq.s32.totalorder %s21, 1
    %p207 = scmp.ne.s32.totalorder %s202, %s204
    %p208 = scmp.eq.s32.totalorder %s21, 0
    %p209 = por %p207, %p208
    %p210 = scmp.ne.s32.totalorder %s202, %s204
    %p211 = scmp.eq.s32.totalorder %s26, 1
    %p212 = por %p210, %p211
    %p213 = scmp.ne.s32.totalorder %s204, %s205
    %p214 = scmp.eq.s32.totalorder %s26, 0
    %p215 = por %p213, %p214
    %p216 = scmp.ne.s32.totalorder %s204, %s205
    %p217 = scmp.eq.s32.totalorder %s27, 1
    %p218 = por %p216, %p217
    %p220 = scmp.ne.s32.totalorder %s205, %s219
    %p221 = scmp.eq.s32.totalorder %s27, 0
    %p222 = por %p220, %p221
    %s224 = sadd.s32 %s223, 1
    %p227 = scmp.eq.s32.totalorder %s21, 1
    %p228 = scmp.ne.s32.totalorder %s223, %s225
    %p229 = scmp.eq.s32.totalorder %s21, 0
    %p230 = por %p228, %p229
    %p231 = scmp.ne.s32.totalorder %s223, %s225
    %p232 = scmp.eq.s32.totalorder %s26, 1
    %p233 = por %p231, %p232
    %p234 = scmp.ne.s32.totalorder %s225, %s226
    %p235 = scmp.eq.s32.totalorder %s26, 0
    %p236 = por %p234, %p235
    %p237 = scmp.ne.s32.totalorder %s225, %s226
    %p238 = scmp.eq.s32.totalorder %s27, 1
    %p239 = por %p237, %p238
    %p241 = scmp.ne.s32.totalorder %s226, %s240
    %p242 = scmp.eq.s32.totalorder %s27, 0
    %p243 = por %p241, %p242
    %s245 = sadd.s32 %s244, 1
    %p248 = scmp.eq.s32.totalorder %s21, 1
    %p249 = scmp.ne.s32.totalorder %s244, %s246
    %p250 = scmp.eq.s32.totalorder %s21, 0
    %p251 = por %p249, %p250
    %p252 = scmp.ne.s32.totalorder %s244, %s246
    %p253 = scmp.eq.s32.totalorder %s26, 1
    %p254 = por %p252, %p253
    %p255 = scmp.ne.s32.totalorder %s246, %s247
    %p256 = scmp.eq.s32.totalorder %s26, 0
    %p257 = por %p255, %p256
    %p258 = scmp.ne.s32.totalorder %s246, %s247
    %p259 = scmp.eq.s32.totalorder %s27, 1
    %p260 = por %p258, %p259
    %p262 = scmp.ne.s32.totalorder %s247, %s261
    %p263 = scmp.eq.s32.totalorder %s27, 0
    %p264 = por %p262, %p263
    %s265 = ssub.s32 %s21, %s28
    %p266 = scmp.eq.s32.totalorder %s265, 0
    %s268 = sadd.s32 %s267, 1
    %s269 = scalar_select %p266, %s267, %s268
    %p272 = pneg %p266
    %p273 = scmp.eq.s32.totalorder %s21, 1
    %p274 = por %p272, %p273
    %p275 = scmp.ne.s32.totalorder %s267, %s270
    %p276 = scmp.eq.s32.totalorder %s21, 0
    %p277 = por %p275, %p276
    %p278 = scmp.ne.s32.totalorder %s267, %s270
    %p279 = scmp.eq.s32.totalorder %s26, 1
    %p280 = por %p278, %p279
    %p281 = scmp.ne.s32.totalorder %s270, %s271
    %p282 = scmp.eq.s32.totalorder %s26, 0
    %p283 = por %p281, %p282
    %p284 = scmp.ne.s32.totalorder %s270, %s271
    %p285 = scmp.eq.s32.totalorder %s27, 1
    %p286 = por %p284, %p285
    %p288 = scmp.ne.s32.totalorder %s271, %s287
    %p289 = scmp.eq.s32.totalorder %s27, 0
    %p290 = por %p288, %p289
    %s291 = ssub.s32 %s21, %s28
    %p292 = scmp.eq.s32.totalorder %s291, 0
    %s294 = sadd.s32 %s293, 1
    %s295 = scalar_select %p292, %s293, %s294
    %p298 = pneg %p292
    %p299 = scmp.eq.s32.totalorder %s21, 1
    %p300 = por %p298, %p299
    %p301 = scmp.ne.s32.totalorder %s293, %s296
    %p302 = scmp.eq.s32.totalorder %s21, 0
    %p303 = por %p301, %p302
    %p304 = scmp.ne.s32.totalorder %s293, %s296
    %p305 = scmp.eq.s32.totalorder %s26, 1
    %p306 = por %p304, %p305
    %p307 = scmp.ne.s32.totalorder %s296, %s297
    %p308 = scmp.eq.s32.totalorder %s26, 0
    %p309 = por %p307, %p308
    %p310 = scmp.ne.s32.totalorder %s296, %s297
    %p311 = scmp.eq.s32.totalorder %s27, 1
    %p312 = por %p310, %p311
    %p314 = scmp.ne.s32.totalorder %s297, %s313
    %p315 = scmp.eq.s32.totalorder %s27, 0
    %p316 = por %p314, %p315
    %s317 = ssub.s32 %s21, %s28
    %p318 = scmp.eq.s32.totalorder %s317, 0
    %s320 = sadd.s32 %s319, 1
    %s321 = scalar_select %p318, %s319, %s320
    %p324 = pneg %p318
    %p325 = scmp.eq.s32.totalorder %s21, 1
    %p326 = por %p324, %p325
    %p327 = scmp.ne.s32.totalorder %s319, %s322
    %p328 = scmp.eq.s32.totalorder %s21, 0
    %p329 = por %p327, %p328
    %p330 = scmp.ne.s32.totalorder %s319, %s322
    %p331 = scmp.eq.s32.totalorder %s26, 1
    %p332 = por %p330, %p331
    %p333 = scmp.ne.s32.totalorder %s322, %s323
    %p334 = scmp.eq.s32.totalorder %s26, 0
    %p335 = por %p333, %p334
    %p336 = scmp.ne.s32.totalorder %s322, %s323
    %p337 = scmp.eq.s32.totalorder %s27, 1
    %p338 = por %p336, %p337
    %p340 = scmp.ne.s32.totalorder %s323, %s339
    %p341 = scmp.eq.s32.totalorder %s27, 0
    %p342 = por %p340, %p341
    %s343 = ssub.s32 %s21, %s28
    %p344 = scmp.eq.s32.totalorder %s343, 0
    %s346 = sadd.s32 %s345, 1
    %s347 = scalar_select %p344, %s345, %s346
    %p350 = pneg %p344
    %p351 = scmp.eq.s32.totalorder %s21, 1
    %p352 = por %p350, %p351
    %p353 = scmp.ne.s32.totalorder %s345, %s348
    %p354 = scmp.eq.s32.totalorder %s21, 0
    %p355 = por %p353, %p354
    %p356 = scmp.ne.s32.totalorder %s345, %s348
    %p357 = scmp.eq.s32.totalorder %s26, 1
    %p358 = por %p356, %p357
    %p359 = scmp.ne.s32.totalorder %s348, %s349
    %p360 = scmp.eq.s32.totalorder %s26, 0
    %p361 = por %p359, %p360
    %p362 = scmp.ne.s32.totalorder %s348, %s349
    %p363 = scmp.eq.s32.totalorder %s27, 1
    %p364 = por %p362, %p363
    %p366 = scmp.ne.s32.totalorder %s349, %s365
    %p367 = scmp.eq.s32.totalorder %s27, 0
    %p368 = por %p366, %p367
    %p369 = scmp.le.s32.totalorder 1, %s21
    %p370 = scmp.lt.s32.totalorder %s21, 3
    %p371 = pnand %p369, %p370
    %p372 = pneg %p371
    // Predicated region
    $region9: #{_pipeline.3} parent=5 // pred_check
      _
    $region10: #{_pipeline.3} parent=5 // pred_check_branch
      %374 = sbr.rel (%p371) target = $region12
    $region11: #{_pipeline.3} parent=5 // pred_region
      %s375 = ssub.s32 %s21, 1
      // Predicated region
      $region13: #{_pipeline.3} parent=11 // pred_check
        %p376 = pneg %p68
      $region14: #{_pipeline.3} parent=11 // pred_check_branch
        %378 = sbr.rel (%p376) target = $region16
      $region15: #{_pipeline.3} parent=11 // pred_region
        _
      $region16: #{_pipeline.3} parent=11 // pred_fallthru
        _
      // Predicated region
      $region17: #{_pipeline.3} parent=11 // pred_check
        %p379 = pneg %p89
      $region18: #{_pipeline.3} parent=11 // pred_check_branch
        %381 = sbr.rel (%p379) target = $region20
      $region19: #{_pipeline.3} parent=11 // pred_region
        _
      $region20: #{_pipeline.3} parent=11 // pred_fallthru
        _
      // Predicated region
      $region21: #{_pipeline.3} parent=11 // pred_check
        %p382 = pneg %p110
      $region22: #{_pipeline.3} parent=11 // pred_check_branch
        %384 = sbr.rel (%p382) target = $region24
      $region23: #{_pipeline.3} parent=11 // pred_region
        _
      $region24: #{_pipeline.3} parent=11 // pred_fallthru
        _
      // Predicated region
      $region25: #{_pipeline.3} parent=11 // pred_check
        %p385 = pneg %p131
      $region26: #{_pipeline.3} parent=11 // pred_check_branch
        %387 = sbr.rel (%p385) target = $region28
      $region27: #{_pipeline.3} parent=11 // pred_region
        _
      $region28: #{_pipeline.3} parent=11 // pred_fallthru
        _
      // Predicated region
      $region29: #{_pipeline.3} parent=11 // pred_check
        %p388 = pneg %p152
      $region30: #{_pipeline.3} parent=11 // pred_check_branch
        %390 = sbr.rel (%p388) target = $region32
      $region31: #{_pipeline.3} parent=11 // pred_region
        _
      $region32: #{_pipeline.3} parent=11 // pred_fallthru
        _
      // Predicated region
      $region33: #{_pipeline.3} parent=11 // pred_check
        %p391 = pneg %p173
      $region34: #{_pipeline.3} parent=11 // pred_check_branch
        %393 = sbr.rel (%p391) target = $region36
      $region35: #{_pipeline.3} parent=11 // pred_region
        _
      $region36: #{_pipeline.3} parent=11 // pred_fallthru
        _
      // Predicated region
      $region37: #{_pipeline.3} parent=11 // pred_check
        %p394 = pneg %p194
      $region38: #{_pipeline.3} parent=11 // pred_check_branch
        %396 = sbr.rel (%p394) target = $region40
      $region39: #{_pipeline.3} parent=11 // pred_region
        _
      $region40: #{_pipeline.3} parent=11 // pred_fallthru
        _
      // Predicated region
      $region41: #{_pipeline.3} parent=11 // pred_check
        %p397 = pneg %p215
      $region42: #{_pipeline.3} parent=11 // pred_check_branch
        %399 = sbr.rel (%p397) target = $region44
      $region43: #{_pipeline.3} parent=11 // pred_region
        _
      $region44: #{_pipeline.3} parent=11 // pred_fallthru
        _
      // Predicated region
      $region45: #{_pipeline.3} parent=11 // pred_check
        %p400 = pneg %p236
      $region46: #{_pipeline.3} parent=11 // pred_check_branch
        %402 = sbr.rel (%p400) target = $region48
      $region47: #{_pipeline.3} parent=11 // pred_region
        _
      $region48: #{_pipeline.3} parent=11 // pred_fallthru
        _
      // Predicated region
      $region49: #{_pipeline.3} parent=11 // pred_check
        %p403 = pneg %p257
      $region50: #{_pipeline.3} parent=11 // pred_check_branch
        %405 = sbr.rel (%p403) target = $region52
      $region51: #{_pipeline.3} parent=11 // pred_region
        _
      $region52: #{_pipeline.3} parent=11 // pred_fallthru
        _
    $region12: #{_pipeline.3} parent=5 // pred_fallthru
      _
    %p406 = scmp.lt.s32.totalorder %s21, 2
    // Predicated region
    $region53: #{_pipeline.3} parent=5 // pred_check
      %p407 = pneg %p406
    $region54: #{_pipeline.3} parent=5 // pred_check_branch
      %409 = sbr.rel (%p407) target = $region56
    $region55: #{_pipeline.3} parent=5 // pred_region
      // Predicated region
      $region57: #{_pipeline.3} parent=55 // pred_check
        %p410 = pneg %p41
      $region58: #{_pipeline.3} parent=55 // pred_check_branch
        %412 = sbr.rel (%p410) target = $region60
      $region59: #{_pipeline.3} parent=55 // pred_region
        %p413 = scmp.lt.s32.totalorder %s21, 1
        %s414 = scalar_select %p413, %s21, 1
        %s415 = smul.addr %s414, 2
        %s416 = smul.addr %s415, 8
        %s417 = scalar_lea.vmem %s0, %s416
      $region60: #{_pipeline.3} parent=55 // pred_fallthru
        _
    $region56: #{_pipeline.3} parent=5 // pred_fallthru
      _
    %p418 = scmp.le.s32.totalorder 1, %s21
    %p419 = scmp.lt.s32.totalorder %s21, 3
    %p420 = pnand %p418, %p419
    %p421 = pneg %p420
    // Predicated region
    $region61: #{_pipeline.3} parent=5 // pred_check
      _
    $region62: #{_pipeline.3} parent=5 // pred_check_branch
      %423 = sbr.rel (%p420) target = $region64
    $region63: #{_pipeline.3} parent=5 // pred_region
      %s424 = ssub.s32 %s21, 1
      %p425 = scmp.lt.s32.totalorder %s26, 1
      %s426 = scalar_select %p425, %s26, 1
      %s427 = smul.addr %s426, 2
      %s428 = smul.addr %s427, 8
      %s429 = scalar_lea.vmem %s0, %s428
      %p430 = pneg %p47
      %p431 = pneg %p44
      %p432 = pneg %p68
      %p433 = pneg %p65
      %p434 = pneg %p89
      %p435 = pneg %p86
      %p436 = pneg %p110
      %p437 = pneg %p107
      %p438 = pneg %p131
      %p439 = pneg %p128
      %p440 = pneg %p152
      %p441 = pneg %p149
      %p442 = pneg %p173
      %p443 = pneg %p170
      %p444 = pneg %p194
      %p445 = pneg %p191
      %p446 = pneg %p215
      %p447 = pneg %p212
      %p448 = pneg %p236
      %p449 = pneg %p233
      %p450 = pneg %p257
      %p451 = pneg %p254
      %p452 = pneg %p283
      %p453 = pneg %p280
      %p454 = scmp.lt.s32.totalorder %s26, 1
      %s455 = scalar_select %p454, %s26, 1
      %s456 = smul.addr %s455, 16
      %s457 = smul.addr %s456, 8
      %s458 = scalar_lea.vmem %s11, %s457
      %p459 = pneg %p309
      %p460 = pneg %p306
      %p461 = scmp.lt.s32.totalorder %s26, 1
      %s462 = scalar_select %p461, %s26, 1
      %s463 = smul.addr %s462, 2
      %s464 = smul.addr %s463, 8
      %s465 = scalar_lea.vmem %s12, %s464
      %p466 = pneg %p335
      %p467 = pneg %p332
      %p468 = scmp.lt.s32.totalorder %s26, 1
      %s469 = scalar_select %p468, %s26, 1
      %s470 = smul.addr %s469, 2
      %s471 = smul.addr %s470, 8
      %s472 = scalar_lea.vmem %s13, %s471
      %p473 = pneg %p361
      %p474 = pneg %p358
      %p475 = scmp.lt.s32.totalorder %s26, 1
      %s476 = scalar_select %p475, %s26, 1
      %s477 = smul.addr %s476, 2
      %s478 = smul.addr %s477, 2
      %s479 = scalar_lea.vmem %s14, %s478
      %p480 = scmp.lt.s32.totalorder %s26, 1
      %s481 = scalar_select %p480, %s26, 1
      %s482 = smul.addr %s481, 2
      %s483 = smul.addr %s482, 8
      %s484 = scalar_lea.vmem %s0, %s483
      %p485 = scmp.lt.s32.totalorder %s26, 1
      %s486 = scalar_select %p485, %s26, 1
      %s487 = smul.addr %s486, 16
      %s488 = smul.addr %s487, 8
      %s489 = scalar_lea.vmem %s11, %s488
      %p490 = scmp.lt.s32.totalorder %s26, 1
      %s491 = scalar_select %p490, %s26, 1
      %s492 = smul.addr %s491, 2
      %s493 = smul.addr %s492, 8
      %s494 = scalar_lea.vmem %s12, %s493
      %p495 = scmp.lt.s32.totalorder %s26, 1
      %s496 = scalar_select %p495, %s26, 1
      %s497 = smul.addr %s496, 2
      %s498 = smul.addr %s497, 8
      %s499 = scalar_lea.vmem %s13, %s498
      %p500 = scmp.lt.s32.totalorder %s26, 1
      %s501 = scalar_select %p500, %s26, 1
      %s502 = smul.addr %s501, 2
      %s503 = smul.addr %s502, 2
      %s504 = scalar_lea.vmem %s14, %s503
      %v508 = vld [vmem:[%s484] sm:$0xff]
      %v509 = vld [vmem:[%s484 + $0x8] sm:$0xff]
      %v510 = vpack.c.bf16 %v508, %v508
      %v511 = vpack.c.bf16 %v509, %v509
      %v512 = vld [vmem:[%s1] sm:$0xf]
      %v513 = vld [vmem:[%s1 + $0x4] sm:$0xf]
      %v514 = vld [vmem:[%s1 + $0x8] sm:$0xf]
      %v515 = vld [vmem:[%s1 + $0xc] sm:$0xf]
      %v516 = vld [vmem:[%s1 + $0x10] sm:$0xf]
      %v517 = vld [vmem:[%s1 + $0x14] sm:$0xf]
      %v518 = vld [vmem:[%s1 + $0x18] sm:$0xf]
      %v519 = vld [vmem:[%s1 + $0x1c] sm:$0xf]
      %v520 = vld [vmem:[%s2] sm:$0xff]
      %v521 = vld [vmem:[%s2 + $0x8] sm:$0xff]
      %v522 = vld [vmem:[%s2 + $0x10] sm:$0xff]
      %v523 = vld [vmem:[%s2 + $0x18] sm:$0xff]
      %v524 = vld [vmem:[%s2 + $0x20] sm:$0xff]
      %v525 = vld [vmem:[%s2 + $0x28] sm:$0xff]
      %v526 = vld [vmem:[%s2 + $0x30] sm:$0xff]
      %v527 = vld [vmem:[%s2 + $0x38] sm:$0xff]
      %529 = vset.pattern.permute.xlu0 0
      %530 = vperm.xlu0 %529, %v520
      %v531 = vpop.permute.xlu0 %530
      %534 = vset.pattern.permute.xlu0 0
      %535 = vperm.xlu0 %534, %v521
      %v536 = vpop.permute.xlu0 %535
      %539 = vset.pattern.permute.xlu0 0
      %540 = vperm.xlu0 %539, %v522
      %v541 = vpop.permute.xlu0 %540
      %544 = vset.pattern.permute.xlu0 0
      %545 = vperm.xlu0 %544, %v523
      %v546 = vpop.permute.xlu0 %545
      %549 = vset.pattern.permute.xlu0 0
      %550 = vperm.xlu0 %549, %v524
      %v551 = vpop.permute.xlu0 %550
      %554 = vset.pattern.permute.xlu0 0
      %555 = vperm.xlu0 %554, %v525
      %v556 = vpop.permute.xlu0 %555
      %559 = vset.pattern.permute.xlu0 0
      %560 = vperm.xlu0 %559, %v526
      %v561 = vpop.permute.xlu0 %560
      %564 = vset.pattern.permute.xlu0 0
      %565 = vperm.xlu0 %564, %v527
      %v566 = vpop.permute.xlu0 %565
      %v576 = vunpack.c.l.b16 %v512
      %v577 = vunpack.c.l.b16 %v513
      %v578 = vunpack.c.l.b16 %v514
      %v579 = vunpack.c.l.b16 %v515
      %v580 = vunpack.c.l.b16 %v516
      %v581 = vunpack.c.l.b16 %v517
      %v582 = vunpack.c.l.b16 %v518
      %v583 = vunpack.c.l.b16 %v519
      %v584 = vpack.c.b16 %v577, %v576
      %v585 = vpack.c.b16 %v579, %v578
      %v586 = vpack.c.b16 %v581, %v580
      %v587 = vpack.c.b16 %v583, %v582
      %vm588 = vcmask 64512
      %v590 = vsel %vm588, %v584, 0
      %v593 = vsel %vm588, %v585, 0
      %v596 = vsel %vm588, %v586, 0
      %v599 = vsel %vm588, %v587, 0
      %vm601 = vcmask 1043456
      %v603 = vsel %vm601, %v510, 0
      %v606 = vsel %vm601, %v511, 0
      %608 = vmatprep.subr.bf16.mxu0 %v606
      %609 = vmatpush1.bf16.msra.mxu0 %v603
      %610 = vmatprep.subr.bf16.mxu0 0
      %611 = vmatpush1.bf16.msra.mxu0 0
      %612 = vmatprep.subr.bf16.mxu0 0
      %613 = vmatpush1.bf16.msra.mxu0 0
      %614 = vmatprep.subr.bf16.mxu0 0
      %615 = vmatpush1.bf16.msra.mxu0 0
      %616 = vmatprep.subr.bf16.mxu0 0
      %617 = vmatpush1.bf16.msra.mxu0 0
      %618 = vmatprep.subr.bf16.mxu0 0
      %619 = vmatpush1.bf16.msra.mxu0 0
      %620 = vmatprep.subr.bf16.mxu0 0
      %621 = vmatpush1.bf16.msra.mxu0 0
      %622 = vmatprep.subr.bf16.mxu0 0
      %623 = vmatpush1.bf16.msra.mxu0 0
      %624 = vmatprep.subr.bf16.mxu0 0
      %625 = vmatpush1.bf16.msra.mxu0 0
      %626 = vmatprep.subr.bf16.mxu0 0
      %627 = vmatpush1.bf16.msra.mxu0 0
      %628 = vmatprep.subr.bf16.mxu0 0
      %629 = vmatpush1.bf16.msra.mxu0 0
      %630 = vmatprep.subr.bf16.mxu0 0
      %631 = vmatpush1.bf16.msra.mxu0 0
      %632 = vmatprep.subr.bf16.mxu0 0
      %633 = vmatpush1.bf16.msra.mxu0 0
      %634 = vmatprep.subr.bf16.mxu0 0
      %635 = vmatpush1.bf16.msra.mxu0 0
      %636 = vmatprep.subr.bf16.mxu0 0
      %637 = vmatpush1.bf16.msra.mxu0 0
      %638 = vmatprep.subr.bf16.mxu0 0
      %639 = vmatpush1.bf16.msra.mxu0 0
      %640 = vmatprep.mubr.bf16.mxu0 0
      %641 = vmatmul.mubr.bf16.gmra.mrb[0].mxu0 %v590
      %v642 = vpop.f32.mrb[0].mxu0
      %v643 = vadd.f32 %v531, %v642
      %v644 = vpop.f32.mrb[0].mxu0
      %v645 = vadd.f32 %v531, %v644
      %v646 = vpop.f32.mrb[0].mxu0
      %v647 = vadd.f32 %v536, %v646
      %v648 = vpop.f32.mrb[0].mxu0
      %v649 = vadd.f32 %v536, %v648
      %650 = vmatprep.mubr.bf16.mxu0 0
      %651 = vmatmul.mubr.bf16.gmra.mrb[0].mxu0 %v593
      %v652 = vpop.f32.mrb[0].mxu0
      %v653 = vadd.f32 %v541, %v652
      %v654 = vpop.f32.mrb[0].mxu0
      %v655 = vadd.f32 %v541, %v654
      %v656 = vpop.f32.mrb[0].mxu0
      %v657 = vadd.f32 %v546, %v656
      %v658 = vpop.f32.mrb[0].mxu0
      %v659 = vadd.f32 %v546, %v658
      %660 = vmatprep.mubr.bf16.mxu0 0
      %661 = vmatmul.mubr.bf16.gmra.mrb[0].mxu0 %v596
      %v662 = vpop.f32.mrb[0].mxu0
      %v663 = vadd.f32 %v551, %v662
      %v664 = vpop.f32.mrb[0].mxu0
      %v665 = vadd.f32 %v551, %v664
      %v666 = vpop.f32.mrb[0].mxu0
      %v667 = vadd.f32 %v556, %v666
      %v668 = vpop.f32.mrb[0].mxu0
      %v669 = vadd.f32 %v556, %v668
      %670 = vmatprep.mubr.bf16.mxu0 0
      %671 = vmatmul.mubr.bf16.gmra.mrb[0].mxu0 %v599
      %v672 = vpop.f32.mrb[0].mxu0
      %v673 = vadd.f32 %v561, %v672
      %v674 = vpop.f32.mrb[0].mxu0
      %v675 = vadd.f32 %v561, %v674
      %v676 = vpop.f32.mrb[0].mxu0
      %v677 = vadd.f32 %v566, %v676
      %v678 = vpop.f32.mrb[0].mxu0
      %v679 = vadd.f32 %v566, %v678
      %680 = vdwg.mxu0
      %v681 = vlaneseq
      %v682 = vand.u32 %v681, 127
      %v683 = vadd.s32 %v682, 128
      %vm684 = vcmp.lt.s32.totalorder %v682, 0
      %v685 = vsub.s32 0, %v682
      %v686 = vsel %vm684, %v685, %v682
      %v687 = vshrl.u32 %v686, 7
      %v688 = vand.u32 %v686, 127
      %v689 = vsub.s32 0, %v688
      %v690 = vsel %vm684, %v689, %v688
      %vm691 = vcmp.lt.s32.totalorder %v683, 0
      %v692 = vsub.s32 0, %v683
      %v693 = vsel %vm691, %v692, %v683
      %v694 = vshrl.u32 %v693, 7
      %v695 = vand.u32 %v693, 127
      %v696 = vsub.s32 0, %v695
      %v697 = vsel %vm691, %v696, %v695
      %vm698 = vcmp.ne.s32.totalorder %v690, 0
      %vm699 = vcmp.ne.s32.totalorder %v697, 0
      %vm700 = vcmp.lt.s32.totalorder %v690, 0
      %vm701 = vcmp.lt.s32.totalorder %v697, 0
      %vm702 = vmand %vm700, %vm698
      %vm703 = vmand %vm701, %vm699
      %v704 = vadd.s32 %v690, 128
      %v705 = vadd.s32 %v697, 128
      %v706 = vsel %vm702, %v704, %v690
      %v707 = vsel %vm703, %v705, %v697
      %v708 = vpack.c.bf16 %v647, %v643
      %v709 = vpack.c.bf16 %v649, %v645
      %v710 = vpack.c.bf16 %v657, %v653
      %v711 = vpack.c.bf16 %v659, %v655
      %v712 = vpack.c.bf16 %v667, %v663
      %v713 = vpack.c.bf16 %v669, %v665
      %v714 = vpack.c.bf16 %v677, %v673
      %v715 = vpack.c.bf16 %v679, %v675
      %vm716 = vcmp.ge.s32.totalorder %v706, 1
      %vm717 = vcmp.ge.s32.totalorder %v707, 1
      %726 = vrot.lane.b32.xlu0 %v708, 1
      %v727 = vpop.permute.xlu0 %726
      %728 = vrot.lane.b32.xlu0 %v709, 1
      %v729 = vpop.permute.xlu0 %728
      %730 = vrot.lane.b32.xlu0 %v710, 1
      %v731 = vpop.permute.xlu0 %730
      %732 = vrot.lane.b32.xlu0 %v711, 1
      %v733 = vpop.permute.xlu0 %732
      %734 = vrot.lane.b32.xlu0 %v712, 1
      %v735 = vpop.permute.xlu0 %734
      %736 = vrot.lane.b32.xlu0 %v713, 1
      %v737 = vpop.permute.xlu0 %736
      %738 = vrot.lane.b32.xlu0 %v714, 1
      %v739 = vpop.permute.xlu0 %738
      %740 = vrot.lane.b32.xlu0 %v715, 1
      %v741 = vpop.permute.xlu0 %740
      %vm742 = vcmask 7168
      %v743 = vsel %vm742, %v727, %v729
      %v744 = vsel %vm742, %v731, %v733
      %v745 = vsel %vm742, %v735, %v737
      %v746 = vsel %vm742, %v739, %v741
      %vm751 = vcmask 7168
      %v754 = vsel %vm751, 0, %v727
      %v757 = vsel %vm751, 0, %v731
      %v760 = vsel %vm751, 0, %v735
      %v763 = vsel %vm751, 0, %v739
      %v765 = vsel %vm716, 1, 0
      %v766 = vsel %vm717, 1, 0
      %vm767 = vcmp.eq.s32.totalorder %v765, 1
      %vm768 = vcmp.eq.s32.totalorder %v766, 1
      %vm769 = vmpackc.low %vm768, %vm767
      %v770 = vsel %vm769, 65537, 0
      %v771 = vlaneseq
      %v772 = vshrl.u32 %v771, 7
      %v773 = vsub.s32 0, %v772
      %v774 = vrot.slane %v770, %v773
      %v775 = vlaneseq
      %v776 = vshrl.u32 %v775, 7
      %v777 = vsub.s32 4, %v776
      %v778 = vrot.slane %v770, %v777
      %vm779 = vcmp.ne.s16.totalorder %v774, 0
      %vm780 = vcmp.ne.s16.totalorder %v778, 0
      %v781 = vsel %vm779, %v754, 0
      %v782 = vsel %vm780, %v743, 0
      %v783 = vsel %vm779, %v757, 0
      %v784 = vsel %vm780, %v744, 0
      %v785 = vsel %vm779, %v760, 0
      %v786 = vsel %vm780, %v745, 0
      %v787 = vsel %vm779, %v763, 0
      %v788 = vsel %vm780, %v746, 0
      %vm789 = vcmp.lt.s32.totalorder %v706, 127
      %vm790 = vcmp.lt.s32.totalorder %v707, 127
      %791 = vrot.lane.b32.xlu0 %v708, 127
      %v792 = vpop.permute.xlu0 %791
      %793 = vrot.lane.b32.xlu0 %v709, 127
      %v794 = vpop.permute.xlu0 %793
      %795 = vrot.lane.b32.xlu0 %v710, 127
      %v796 = vpop.permute.xlu0 %795
      %797 = vrot.lane.b32.xlu0 %v711, 127
      %v798 = vpop.permute.xlu0 %797
      %799 = vrot.lane.b32.xlu0 %v712, 127
      %v800 = vpop.permute.xlu0 %799
      %801 = vrot.lane.b32.xlu0 %v713, 127
      %v802 = vpop.permute.xlu0 %801
      %803 = vrot.lane.b32.xlu0 %v714, 127
      %v804 = vpop.permute.xlu0 %803
      %805 = vrot.lane.b32.xlu0 %v715, 127
      %v806 = vpop.permute.xlu0 %805
      %vm807 = vcmask 1039360
      %v808 = vsel %vm807, %v792, %v794
      %v809 = vsel %vm807, %v796, %v798
      %v810 = vsel %vm807, %v800, %v802
      %v811 = vsel %vm807, %v804, %v806
      %vm816 = vcmask 1039360
      %v818 = vsel %vm816, %v794, 0
      %v821 = vsel %vm816, %v798, 0
      %v824 = vsel %vm816, %v802, 0
      %v827 = vsel %vm816, %v806, 0
      %v829 = vsel %vm789, 1, 0
      %v830 = vsel %vm790, 1, 0
      %vm831 = vcmp.eq.s32.totalorder %v829, 1
      %vm832 = vcmp.eq.s32.totalorder %v830, 1
      %vm833 = vmpackc.low %vm832, %vm831
      %v834 = vsel %vm833, 65537, 0
      %v835 = vlaneseq
      %v836 = vshrl.u32 %v835, 7
      %v837 = vsub.s32 0, %v836
      %v838 = vrot.slane %v834, %v837
      %v839 = vlaneseq
      %v840 = vshrl.u32 %v839, 7
      %v841 = vsub.s32 4, %v840
      %v842 = vrot.slane %v834, %v841
      %vm843 = vcmp.ne.s16.totalorder %v838, 0
      %vm844 = vcmp.ne.s16.totalorder %v842, 0
      %v845 = vsel %vm843, %v808, 0
      %v846 = vsel %vm844, %v818, 0
      %v847 = vsel %vm843, %v809, 0
      %v848 = vsel %vm844, %v821, 0
      %v849 = vsel %vm843, %v810, 0
      %v850 = vsel %vm844, %v824, 0
      %v851 = vsel %vm843, %v811, 0
      %v852 = vsel %vm844, %v827, 0
      %v853 = vld [vmem:[%s3] sm:$0xff]
      %v854 = vld [vmem:[%s3 + $0x8] sm:$0xff]
      %v855 = vld [vmem:[%s3 + $0x10] sm:$0xff]
      %v856 = vld [vmem:[%s3 + $0x18] sm:$0xff]
      %v857 = vld [vmem:[%s3 + $0x20] sm:$0xff]
      %v858 = vld [vmem:[%s3 + $0x28] sm:$0xff]
      %v859 = vld [vmem:[%s3 + $0x30] sm:$0xff]
      %v860 = vld [vmem:[%s3 + $0x38] sm:$0xff]
      %v861 = vld [vmem:[%s4] sm:$0xff]
      %v862 = vld [vmem:[%s4 + $0x8] sm:$0xff]
      %v863 = vld [vmem:[%s4 + $0x10] sm:$0xff]
      %v864 = vld [vmem:[%s4 + $0x18] sm:$0xff]
      %v865 = vld [vmem:[%s4 + $0x20] sm:$0xff]
      %v866 = vld [vmem:[%s4 + $0x28] sm:$0xff]
      %v867 = vld [vmem:[%s4 + $0x30] sm:$0xff]
      %v868 = vld [vmem:[%s4 + $0x38] sm:$0xff]
      %870 = vset.pattern.permute.xlu0 0
      %871 = vperm.xlu0 %870, %v861
      %v872 = vpop.permute.xlu0 %871
      %875 = vset.pattern.permute.xlu0 0
      %876 = vperm.xlu0 %875, %v862
      %v877 = vpop.permute.xlu0 %876
      %880 = vset.pattern.permute.xlu0 0
      %881 = vperm.xlu0 %880, %v863
      %v882 = vpop.permute.xlu0 %881
      %885 = vset.pattern.permute.xlu0 0
      %886 = vperm.xlu0 %885, %v864
      %v887 = vpop.permute.xlu0 %886
      %890 = vset.pattern.permute.xlu0 0
      %891 = vperm.xlu0 %890, %v865
      %v892 = vpop.permute.xlu0 %891
      %895 = vset.pattern.permute.xlu0 0
      %896 = vperm.xlu0 %895, %v866
      %v897 = vpop.permute.xlu0 %896
      %900 = vset.pattern.permute.xlu0 0
      %901 = vperm.xlu0 %900, %v867
      %v902 = vpop.permute.xlu0 %901
      %905 = vset.pattern.permute.xlu0 0
      %906 = vperm.xlu0 %905, %v868
      %v907 = vpop.permute.xlu0 %906
      %v917 = vunpack.c.l.b16 %v853
      %v918 = vunpack.c.h.b16 %v853
      %v919 = vunpack.c.l.b16 %v854
      %v920 = vunpack.c.h.b16 %v854
      %v921 = vunpack.c.l.b16 %v855
      %v922 = vunpack.c.h.b16 %v855
      %v923 = vunpack.c.l.b16 %v856
      %v924 = vunpack.c.h.b16 %v856
      %v925 = vunpack.c.l.b16 %v857
      %v926 = vunpack.c.h.b16 %v857
      %v927 = vunpack.c.l.b16 %v858
      %v928 = vunpack.c.h.b16 %v858
      %v929 = vunpack.c.l.b16 %v859
      %v930 = vunpack.c.h.b16 %v859
      %v931 = vunpack.c.l.b16 %v860
      %v932 = vunpack.c.h.b16 %v860
      %v933 = vpack.c.b16 %v919, %v917
      %v934 = vpack.c.b16 %v920, %v918
      %v935 = vpack.c.b16 %v923, %v921
      %v936 = vpack.c.b16 %v924, %v922
      %v937 = vpack.c.b16 %v927, %v925
      %v938 = vpack.c.b16 %v928, %v926
      %v939 = vpack.c.b16 %v931, %v929
      %v940 = vpack.c.b16 %v932, %v930
      %vm945 = vcmask 523264
      %v947 = vsel %vm945, %v934, 0
      %v950 = vsel %vm945, %v936, 0
      %v953 = vsel %vm945, %v938, 0
      %v956 = vsel %vm945, %v940, 0
      %958 = vmatprep.subr.bf16.mxu0 %v782
      %959 = vmatpush1.bf16.msra.mxu0 %v781
      %960 = vmatprep.subr.bf16.mxu0 %v784
      %961 = vmatpush1.bf16.msra.mxu0 %v783
      %962 = vmatprep.subr.bf16.mxu0 %v786
      %963 = vmatpush1.bf16.msra.mxu0 %v785
      %964 = vmatprep.subr.bf16.mxu0 %v788
      %965 = vmatpush1.bf16.msra.mxu0 %v787
      %966 = vmatprep.subr.bf16.mxu0 %v709
      %967 = vmatpush1.bf16.msra.mxu0 %v708
      %968 = vmatprep.subr.bf16.mxu0 %v711
      %969 = vmatpush1.bf16.msra.mxu0 %v710
      %970 = vmatprep.subr.bf16.mxu0 %v713
      %971 = vmatpush1.bf16.msra.mxu0 %v712
      %972 = vmatprep.subr.bf16.mxu0 %v715
      %973 = vmatpush1.bf16.msra.mxu0 %v714
      %974 = vmatprep.subr.bf16.mxu0 %v846
      %975 = vmatpush1.bf16.msra.mxu0 %v845
      %976 = vmatprep.subr.bf16.mxu0 %v848
      %977 = vmatpush1.bf16.msra.mxu0 %v847
      %978 = vmatprep.subr.bf16.mxu0 %v850
      %979 = vmatpush1.bf16.msra.mxu0 %v849
      %980 = vmatprep.subr.bf16.mxu0 %v852
      %981 = vmatpush1.bf16.msra.mxu0 %v851
      %982 = vmatprep.subr.bf16.mxu0 0
      %983 = vmatpush1.bf16.msra.mxu0 0
      %984 = vmatprep.subr.bf16.mxu0 0
      %985 = vmatpush1.bf16.msra.mxu0 0
      %986 = vmatprep.subr.bf16.mxu0 0
      %987 = vmatpush1.bf16.msra.mxu0 0
      %988 = vmatprep.subr.bf16.mxu0 0
      %989 = vmatpush1.bf16.msra.mxu0 0
      %990 = vmatprep.mubr.bf16.mxu0 %v947
      %991 = vmatmul.mubr.bf16.gmra.mrb[0].mxu0 %v933
      %v992 = vpop.f32.mrb[0].mxu0
      %v993 = vadd.f32 %v872, %v992
      %v994 = vpop.f32.mrb[0].mxu0
      %v995 = vadd.f32 %v872, %v994
      %v996 = vpop.f32.mrb[0].mxu0
      %v997 = vadd.f32 %v877, %v996
      %v998 = vpop.f32.mrb[0].mxu0
      %v999 = vadd.f32 %v877, %v998
      %1000 = vmatprep.mubr.bf16.mxu0 %v950
      %1001 = vmatmul.mubr.bf16.gmra.mrb[0].mxu0 %v935
      %v1002 = vpop.f32.mrb[0].mxu0
      %v1003 = vadd.f32 %v882, %v1002
      %v1004 = vpop.f32.mrb[0].mxu0
      %v1005 = vadd.f32 %v882, %v1004
      %v1006 = vpop.f32.mrb[0].mxu0
      %v1007 = vadd.f32 %v887, %v1006
      %v1008 = vpop.f32.mrb[0].mxu0
      %v1009 = vadd.f32 %v887, %v1008
      %1010 = vmatprep.mubr.bf16.mxu0 %v953
      %1011 = vmatmul.mubr.bf16.gmra.mrb[0].mxu0 %v937
      %v1012 = vpop.f32.mrb[0].mxu0
      %v1013 = vadd.f32 %v892, %v1012
      %v1014 = vpop.f32.mrb[0].mxu0
      %v1015 = vadd.f32 %v892, %v1014
      %v1016 = vpop.f32.mrb[0].mxu0
      %v1017 = vadd.f32 %v897, %v1016
      %v1018 = vpop.f32.mrb[0].mxu0
      %v1019 = vadd.f32 %v897, %v1018
      %1020 = vmatprep.mubr.bf16.mxu0 %v956
      %1021 = vmatmul.mubr.bf16.gmra.mrb[0].mxu0 %v939
      %v1022 = vpop.f32.mrb[0].mxu0
      %v1023 = vadd.f32 %v902, %v1022
      %v1024 = vpop.f32.mrb[0].mxu0
      %v1025 = vadd.f32 %v902, %v1024
      %v1026 = vpop.f32.mrb[0].mxu0
      %v1027 = vadd.f32 %v907, %v1026
      %v1028 = vpop.f32.mrb[0].mxu0
      %v1029 = vadd.f32 %v907, %v1028
      %1030 = vdwg.mxu0
      %v1031 = vmax.f32 %v993, 0.0
      %v1032 = vmax.f32 %v995, 0.0
      %v1033 = vmax.f32 %v997, 0.0
      %v1034 = vmax.f32 %v999, 0.0
      %v1035 = vmax.f32 %v1003, 0.0
      %v1036 = vmax.f32 %v1005, 0.0
      %v1037 = vmax.f32 %v1007, 0.0
      %v1038 = vmax.f32 %v1009, 0.0
      %v1039 = vmax.f32 %v1013, 0.0
      %v1040 = vmax.f32 %v1015, 0.0
      %v1041 = vmax.f32 %v1017, 0.0
      %v1042 = vmax.f32 %v1019, 0.0
      %v1043 = vmax.f32 %v1023, 0.0
      %v1044 = vmax.f32 %v1025, 0.0
      %v1045 = vmax.f32 %v1027, 0.0
      %v1046 = vmax.f32 %v1029, 0.0
      %v1047 = vld [vmem:[%s5] sm:$0xf]
      %v1048 = vld [vmem:[%s5 + $0x4] sm:$0xf]
      %v1049 = vld [vmem:[%s5 + $0x8] sm:$0xf]
      %v1050 = vld [vmem:[%s5 + $0xc] sm:$0xf]
      %v1051 = vld [vmem:[%s5 + $0x10] sm:$0xf]
      %v1052 = vld [vmem:[%s5 + $0x14] sm:$0xf]
      %v1053 = vld [vmem:[%s5 + $0x18] sm:$0xf]
      %v1054 = vld [vmem:[%s5 + $0x1c] sm:$0xf]
      %v1055 = vpack.c.bf16 %v1033, %v1031
      %v1056 = vpack.c.bf16 %v1034, %v1032
      %v1057 = vpack.c.bf16 %v1037, %v1035
      %v1058 = vpack.c.bf16 %v1038, %v1036
      %v1059 = vpack.c.bf16 %v1041, %v1039
      %v1060 = vpack.c.bf16 %v1042, %v1040
      %v1061 = vpack.c.bf16 %v1045, %v1043
      %v1062 = vpack.c.bf16 %v1046, %v1044
      %v1063 = vld [vmem:[%s6] sm:$0xff]
      %v1064 = vld [vmem:[%s6 + $0x8] sm:$0xff]
      %v1065 = vld [vmem:[%s6 + $0x10] sm:$0xff]
      %v1066 = vld [vmem:[%s6 + $0x18] sm:$0xff]
      %v1067 = vld [vmem:[%s6 + $0x20] sm:$0xff]
      %v1068 = vld [vmem:[%s6 + $0x28] sm:$0xff]
      %v1069 = vld [vmem:[%s6 + $0x30] sm:$0xff]
      %v1070 = vld [vmem:[%s6 + $0x38] sm:$0xff]
      %1072 = vset.pattern.permute.xlu0 0
      %1073 = vperm.xlu0 %1072, %v1063
      %v1074 = vpop.permute.xlu0 %1073
      %1077 = vset.pattern.permute.xlu0 0
      %1078 = vperm.xlu0 %1077, %v1064
      %v1079 = vpop.permute.xlu0 %1078
      %1082 = vset.pattern.permute.xlu0 0
      %1083 = vperm.xlu0 %1082, %v1065
      %v1084 = vpop.permute.xlu0 %1083
      %1087 = vset.pattern.permute.xlu0 0
      %1088 = vperm.xlu0 %1087, %v1066
      %v1089 = vpop.permute.xlu0 %1088
      %1092 = vset.pattern.permute.xlu0 0
      %1093 = vperm.xlu0 %1092, %v1067
      %v1094 = vpop.permute.xlu0 %1093
      %1097 = vset.pattern.permute.xlu0 0
      %1098 = vperm.xlu0 %1097, %v1068
      %v1099 = vpop.permute.xlu0 %1098
      %1102 = vset.pattern.permute.xlu0 0
      %1103 = vperm.xlu0 %1102, %v1069
      %v1104 = vpop.permute.xlu0 %1103
      %1107 = vset.pattern.permute.xlu0 0
      %1108 = vperm.xlu0 %1107, %v1070
      %v1109 = vpop.permute.xlu0 %1108
      %v1119 = vunpack.c.l.b16 %v1047
      %v1120 = vunpack.c.l.b16 %v1048
      %v1121 = vunpack.c.l.b16 %v1049
      %v1122 = vunpack.c.l.b16 %v1050
      %v1123 = vunpack.c.l.b16 %v1051
      %v1124 = vunpack.c.l.b16 %v1052
      %v1125 = vunpack.c.l.b16 %v1053
      %v1126 = vunpack.c.l.b16 %v1054
      %v1127 = vpack.c.b16 %v1120, %v1119
      %v1128 = vpack.c.b16 %v1122, %v1121
      %v1129 = vpack.c.b16 %v1124, %v1123
      %v1130 = vpack.c.b16 %v1126, %v1125
      %v1132 = vsel %vm945, %v1127, 0
      %v1135 = vsel %vm945, %v1128, 0
      %v1138 = vsel %vm945, %v1129, 0
      %v1141 = vsel %vm945, %v1130, 0
      %1143 = vmatprep.subr.bf16.mxu0 %v1056
      %1144 = vmatpush1.bf16.msra.mxu0 %v1055
      %1145 = vmatprep.subr.bf16.mxu0 %v1058
      %1146 = vmatpush1.bf16.msra.mxu0 %v1057
      %1147 = vmatprep.subr.bf16.mxu0 %v1060
      %1148 = vmatpush1.bf16.msra.mxu0 %v1059
      %1149 = vmatprep.subr.bf16.mxu0 %v1062
      %1150 = vmatpush1.bf16.msra.mxu0 %v1061
      %1151 = vmatprep.subr.bf16.mxu0 0
      %1152 = vmatpush1.bf16.msra.mxu0 0
      %1153 = vmatprep.subr.bf16.mxu0 0
      %1154 = vmatpush1.bf16.msra.mxu0 0
      %1155 = vmatprep.subr.bf16.mxu0 0
      %1156 = vmatpush1.bf16.msra.mxu0 0
      %1157 = vmatprep.subr.bf16.mxu0 0
      %1158 = vmatpush1.bf16.msra.mxu0 0
      %1159 = vmatprep.subr.bf16.mxu0 0
      %1160 = vmatpush1.bf16.msra.mxu0 0
      %1161 = vmatprep.subr.bf16.mxu0 0
      %1162 = vmatpush1.bf16.msra.mxu0 0
      %1163 = vmatprep.subr.bf16.mxu0 0
      %1164 = vmatpush1.bf16.msra.mxu0 0
      %1165 = vmatprep.subr.bf16.mxu0 0
      %1166 = vmatpush1.bf16.msra.mxu0 0
      %1167 = vmatprep.subr.bf16.mxu0 0
      %1168 = vmatpush1.bf16.msra.mxu0 0
      %1169 = vmatprep.subr.bf16.mxu0 0
      %1170 = vmatpush1.bf16.msra.mxu0 0
      %1171 = vmatprep.subr.bf16.mxu0 0
      %1172 = vmatpush1.bf16.msra.mxu0 0
      %1173 = vmatprep.subr.bf16.mxu0 0
      %1174 = vmatpush1.bf16.msra.mxu0 0
      %1175 = vmatprep.mubr.bf16.mxu0 0
      %1176 = vmatmul.mubr.bf16.gmra.mrb[0].mxu0 %v1132
      %v1177 = vpop.f32.mrb[0].mxu0
      %v1178 = vadd.f32 %v1074, %v1177
      %v1179 = vpop.f32.mrb[0].mxu0
      %v1180 = vadd.f32 %v1074, %v1179
      %v1181 = vpop.f32.mrb[0].mxu0
      %v1182 = vadd.f32 %v1079, %v1181
      %v1183 = vpop.f32.mrb[0].mxu0
      %v1184 = vadd.f32 %v1079, %v1183
      %1185 = vmatprep.mubr.bf16.mxu0 0
      %1186 = vmatmul.mubr.bf16.gmra.mrb[0].mxu0 %v1135
      %v1187 = vpop.f32.mrb[0].mxu0
      %v1188 = vadd.f32 %v1084, %v1187
      %v1189 = vpop.f32.mrb[0].mxu0
      %v1190 = vadd.f32 %v1084, %v1189
      %v1191 = vpop.f32.mrb[0].mxu0
      %v1192 = vadd.f32 %v1089, %v1191
      %v1193 = vpop.f32.mrb[0].mxu0
      %v1194 = vadd.f32 %v1089, %v1193
      %1195 = vmatprep.mubr.bf16.mxu0 0
      %1196 = vmatmul.mubr.bf16.gmra.mrb[0].mxu0 %v1138
      %v1197 = vpop.f32.mrb[0].mxu0
      %v1198 = vadd.f32 %v1094, %v1197
      %v1199 = vpop.f32.mrb[0].mxu0
      %v1200 = vadd.f32 %v1094, %v1199
      %v1201 = vpop.f32.mrb[0].mxu0
      %v1202 = vadd.f32 %v1099, %v1201
      %v1203 = vpop.f32.mrb[0].mxu0
      %v1204 = vadd.f32 %v1099, %v1203
      %1205 = vmatprep.mubr.bf16.mxu0 0
      %1206 = vmatmul.mubr.bf16.gmra.mrb[0].mxu0 %v1141
      %v1207 = vpop.f32.mrb[0].mxu0
      %v1208 = vadd.f32 %v1104, %v1207
      %v1209 = vpop.f32.mrb[0].mxu0
      %v1210 = vadd.f32 %v1104, %v1209
      %v1211 = vpop.f32.mrb[0].mxu0
      %v1212 = vadd.f32 %v1109, %v1211
      %v1213 = vpop.f32.mrb[0].mxu0
      %v1214 = vadd.f32 %v1109, %v1213
      %1215 = vdwg.mxu0
      %v1216 = vadd.f32 %v643, %v1178
      %v1217 = vadd.f32 %v645, %v1180
      %v1218 = vadd.f32 %v647, %v1182
      %v1219 = vadd.f32 %v649, %v1184
      %v1220 = vadd.f32 %v653, %v1188
      %v1221 = vadd.f32 %v655, %v1190
      %v1222 = vadd.f32 %v657, %v1192
      %v1223 = vadd.f32 %v659, %v1194
      %v1224 = vadd.f32 %v663, %v1198
      %v1225 = vadd.f32 %v665, %v1200
      %v1226 = vadd.f32 %v667, %v1202
      %v1227 = vadd.f32 %v669, %v1204
      %v1228 = vadd.f32 %v673, %v1208
      %v1229 = vadd.f32 %v675, %v1210
      %v1230 = vadd.f32 %v677, %v1212
      %v1231 = vadd.f32 %v679, %v1214
      %v1232 = vpack.c.bf16 %v1218, %v1216
      %v1233 = vpack.c.bf16 %v1219, %v1217
      %v1234 = vpack.c.bf16 %v1222, %v1220
      %v1235 = vpack.c.bf16 %v1223, %v1221
      %v1236 = vpack.c.bf16 %v1226, %v1224
      %v1237 = vpack.c.bf16 %v1227, %v1225
      %v1238 = vpack.c.bf16 %v1230, %v1228
      %v1239 = vpack.c.bf16 %v1231, %v1229
      %vm1240 = vcmp.ge.s32.totalorder %v706, 2
      %vm1241 = vcmp.ge.s32.totalorder %v707, 2
      %1250 = vrot.lane.b32.xlu0 %v1232, 2
      %v1251 = vpop.permute.xlu0 %1250
      %1252 = vrot.lane.b32.xlu0 %v1233, 2
      %v1253 = vpop.permute.xlu0 %1252
      %1254 = vrot.lane.b32.xlu0 %v1234, 2
      %v1255 = vpop.permute.xlu0 %1254
      %1256 = vrot.lane.b32.xlu0 %v1235, 2
      %v1257 = vpop.permute.xlu0 %1256
      %1258 = vrot.lane.b32.xlu0 %v1236, 2
      %v1259 = vpop.permute.xlu0 %1258
      %1260 = vrot.lane.b32.xlu0 %v1237, 2
      %v1261 = vpop.permute.xlu0 %1260
      %1262 = vrot.lane.b32.xlu0 %v1238, 2
      %v1263 = vpop.permute.xlu0 %1262
      %1264 = vrot.lane.b32.xlu0 %v1239, 2
      %v1265 = vpop.permute.xlu0 %1264
      %vm1266 = vcmask 15360
      %v1267 = vsel %vm1266, %v1251, %v1253
      %v1268 = vsel %vm1266, %v1255, %v1257
      %v1269 = vsel %vm1266, %v1259, %v1261
      %v1270 = vsel %vm1266, %v1263, %v1265
      %vm1275 = vcmask 15360
      %v1277 = vsel %vm1275, 0, %v1251
      %v1280 = vsel %vm1275, 0, %v1255
      %v1283 = vsel %vm1275, 0, %v1259
      %v1286 = vsel %vm1275, 0, %v1263
      %v1288 = vsel %vm1240, 1, 0
      %v1289 = vsel %vm1241, 1, 0
      %vm1290 = vcmp.eq.s32.totalorder %v1288, 1
      %vm1291 = vcmp.eq.s32.totalorder %v1289, 1
      %vm1292 = vmpackc.low %vm1291, %vm1290
      %v1293 = vsel %vm1292, 65537, 0
      %v1294 = vlaneseq
      %v1295 = vshrl.u32 %v1294, 7
      %v1296 = vsub.s32 0, %v1295
      %v1297 = vrot.slane %v1293, %v1296
      %v1298 = vlaneseq
      %v1299 = vshrl.u32 %v1298, 7
      %v1300 = vsub.s32 4, %v1299
      %v1301 = vrot.slane %v1293, %v1300
      %vm1302 = vcmp.ne.s16.totalorder %v1297, 0
      %vm1303 = vcmp.ne.s16.totalorder %v1301, 0
      %v1304 = vsel %vm1302, %v1277, 0
      %v1305 = vsel %vm1303, %v1267, 0
      %v1306 = vsel %vm1302, %v1280, 0
      %v1307 = vsel %vm1303, %v1268, 0
      %v1308 = vsel %vm1302, %v1283, 0
      %v1309 = vsel %vm1303, %v1269, 0
      %v1310 = vsel %vm1302, %v1286, 0
      %v1311 = vsel %vm1303, %v1270, 0
      %vm1312 = vcmp.lt.s32.totalorder %v706, 126
      %vm1313 = vcmp.lt.s32.totalorder %v707, 126
      %1314 = vrot.lane.b32.xlu0 %v1232, 126
      %v1315 = vpop.permute.xlu0 %1314
      %1316 = vrot.lane.b32.xlu0 %v1233, 126
      %v1317 = vpop.permute.xlu0 %1316
      %1318 = vrot.lane.b32.xlu0 %v1234, 126
      %v1319 = vpop.permute.xlu0 %1318
      %1320 = vrot.lane.b32.xlu0 %v1235, 126
      %v1321 = vpop.permute.xlu0 %1320
      %1322 = vrot.lane.b32.xlu0 %v1236, 126
      %v1323 = vpop.permute.xlu0 %1322
      %1324 = vrot.lane.b32.xlu0 %v1237, 126
      %v1325 = vpop.permute.xlu0 %1324
      %1326 = vrot.lane.b32.xlu0 %v1238, 126
      %v1327 = vpop.permute.xlu0 %1326
      %1328 = vrot.lane.b32.xlu0 %v1239, 126
      %v1329 = vpop.permute.xlu0 %1328
      %vm1330 = vcmask 1031168
      %v1331 = vsel %vm1330, %v1315, %v1317
      %v1332 = vsel %vm1330, %v1319, %v1321
      %v1333 = vsel %vm1330, %v1323, %v1325
      %v1334 = vsel %vm1330, %v1327, %v1329
      %vm1339 = vcmask 1031168
      %v1341 = vsel %vm1339, %v1317, 0
      %v1344 = vsel %vm1339, %v1321, 0
      %v1347 = vsel %vm1339, %v1325, 0
      %v1350 = vsel %vm1339, %v1329, 0
      %v1352 = vsel %vm1312, 1, 0
      %v1353 = vsel %vm1313, 1, 0
      %vm1354 = vcmp.eq.s32.totalorder %v1352, 1
      %vm1355 = vcmp.eq.s32.totalorder %v1353, 1
      %vm1356 = vmpackc.low %vm1355, %vm1354
      %v1357 = vsel %vm1356, 65537, 0
      %v1358 = vlaneseq
      %v1359 = vshrl.u32 %v1358, 7
      %v1360 = vsub.s32 0, %v1359
      %v1361 = vrot.slane %v1357, %v1360
      %v1362 = vlaneseq
      %v1363 = vshrl.u32 %v1362, 7
      %v1364 = vsub.s32 4, %v1363
      %v1365 = vrot.slane %v1357, %v1364
      %vm1366 = vcmp.ne.s16.totalorder %v1361, 0
      %vm1367 = vcmp.ne.s16.totalorder %v1365, 0
      %v1368 = vsel %vm1366, %v1331, 0
      %v1369 = vsel %vm1367, %v1341, 0
      %v1370 = vsel %vm1366, %v1332, 0
      %v1371 = vsel %vm1367, %v1344, 0
      %v1372 = vsel %vm1366, %v1333, 0
      %v1373 = vsel %vm1367, %v1347, 0
      %v1374 = vsel %vm1366, %v1334, 0
      %v1375 = vsel %vm1367, %v1350, 0
      %s1376 = scalar_lea.vmem %s3, 64
      %v1377 = vld [vmem:[%s1376] sm:$0xff]
      %v1378 = vld [vmem:[%s1376 + $0x8] sm:$0xff]
      %v1379 = vld [vmem:[%s1376 + $0x10] sm:$0xff]
      %v1380 = vld [vmem:[%s1376 + $0x18] sm:$0xff]
      %v1381 = vld [vmem:[%s1376 + $0x20] sm:$0xff]
      %v1382 = vld [vmem:[%s1376 + $0x28] sm:$0xff]
      %v1383 = vld [vmem:[%s1376 + $0x30] sm:$0xff]
      %v1384 = vld [vmem:[%s1376 + $0x38] sm:$0xff]
      %s1385 = scalar_lea.vmem %s4, 64
      %v1386 = vld [vmem:[%s1385] sm:$0xff]
      %v1387 = vld [vmem:[%s1385 + $0x8] sm:$0xff]
      %v1388 = vld [vmem:[%s1385 + $0x10] sm:$0xff]
      %v1389 = vld [vmem:[%s1385 + $0x18] sm:$0xff]
      %v1390 = vld [vmem:[%s1385 + $0x20] sm:$0xff]
      %v1391 = vld [vmem:[%s1385 + $0x28] sm:$0xff]
      %v1392 = vld [vmem:[%s1385 + $0x30] sm:$0xff]
      %v1393 = vld [vmem:[%s1385 + $0x38] sm:$0xff]
      %1395 = vset.pattern.permute.xlu0 0
      %1396 = vperm.xlu0 %1395, %v1386
      %v1397 = vpop.permute.xlu0 %1396
      %1400 = vset.pattern.permute.xlu0 0
      %1401 = vperm.xlu0 %1400, %v1387
      %v1402 = vpop.permute.xlu0 %1401
      %1405 = vset.pattern.permute.xlu0 0
      %1406 = vperm.xlu0 %1405, %v1388
      %v1407 = vpop.permute.xlu0 %1406
      %1410 = vset.pattern.permute.xlu0 0
      %1411 = vperm.xlu0 %1410, %v1389
      %v1412 = vpop.permute.xlu0 %1411
      %1415 = vset.pattern.permute.xlu0 0
      %1416 = vperm.xlu0 %1415, %v1390
      %v1417 = vpop.permute.xlu0 %1416
      %1420 = vset.pattern.permute.xlu0 0
      %1421 = vperm.xlu0 %1420, %v1391
      %v1422 = vpop.permute.xlu0 %1421
      %1425 = vset.pattern.permute.xlu0 0
      %1426 = vperm.xlu0 %1425, %v1392
      %v1427 = vpop.permute.xlu0 %1426
      %1430 = vset.pattern.permute.xlu0 0
      %1431 = vperm.xlu0 %1430, %v1393
      %v1432 = vpop.permute.xlu0 %1431
      %v1442 = vunpack.c.l.b16 %v1377
      %v1443 = vunpack.c.h.b16 %v1377
      %v1444 = vunpack.c.l.b16 %v1378
      %v1445 = vunpack.c.h.b16 %v1378
      %v1446 = vunpack.c.l.b16 %v1379
      %v1447 = vunpack.c.h.b16 %v1379
      %v1448 = vunpack.c.l.b16 %v1380
      %v1449 = vunpack.c.h.b16 %v1380
      %v1450 = vunpack.c.l.b16 %v1381
      %v1451 = vunpack.c.h.b16 %v1381
      %v1452 = vunpack.c.l.b16 %v1382
      %v1453 = vunpack.c.h.b16 %v1382
      %v1454 = vunpack.c.l.b16 %v1383
      %v1455 = vunpack.c.h.b16 %v1383
      %v1456 = vunpack.c.l.b16 %v1384
      %v1457 = vunpack.c.h.b16 %v1384
      %v1458 = vpack.c.b16 %v1444, %v1442
      %v1459 = vpack.c.b16 %v1445, %v1443
      %v1460 = vpack.c.b16 %v1448, %v1446
      %v1461 = vpack.c.b16 %v1449, %v1447
      %v1462 = vpack.c.b16 %v1452, %v1450
      %v1463 = vpack.c.b16 %v1453, %v1451
      %v1464 = vpack.c.b16 %v1456, %v1454
      %v1465 = vpack.c.b16 %v1457, %v1455
      %v1471 = vsel %vm945, %v1459, 0
      %v1474 = vsel %vm945, %v1461, 0
      %v1477 = vsel %vm945, %v1463, 0
      %v1480 = vsel %vm945, %v1465, 0
      %1482 = vmatprep.subr.bf16.mxu0 %v1305
      %1483 = vmatpush1.bf16.msra.mxu0 %v1304
      %1484 = vmatprep.subr.bf16.mxu0 %v1307
      %1485 = vmatpush1.bf16.msra.mxu0 %v1306
      %1486 = vmatprep.subr.bf16.mxu0 %v1309
      %1487 = vmatpush1.bf16.msra.mxu0 %v1308
      %1488 = vmatprep.subr.bf16.mxu0 %v1311
      %1489 = vmatpush1.bf16.msra.mxu0 %v1310
      %1490 = vmatprep.subr.bf16.mxu0 %v1233
      %1491 = vmatpush1.bf16.msra.mxu0 %v1232
      %1492 = vmatprep.subr.bf16.mxu0 %v1235
      %1493 = vmatpush1.bf16.msra.mxu0 %v1234
      %1494 = vmatprep.subr.bf16.mxu0 %v1237
      %1495 = vmatpush1.bf16.msra.mxu0 %v1236
      %1496 = vmatprep.subr.bf16.mxu0 %v1239
      %1497 = vmatpush1.bf16.msra.mxu0 %v1238
      %1498 = vmatprep.subr.bf16.mxu0 %v1369
      %1499 = vmatpush1.bf16.msra.mxu0 %v1368
      %1500 = vmatprep.subr.bf16.mxu0 %v1371
      %1501 = vmatpush1.bf16.msra.mxu0 %v1370
      %1502 = vmatprep.subr.bf16.mxu0 %v1373
      %1503 = vmatpush1.bf16.msra.mxu0 %v1372
      %1504 = vmatprep.subr.bf16.mxu0 %v1375
      %1505 = vmatpush1.bf16.msra.mxu0 %v1374
      %1506 = vmatprep.subr.bf16.mxu0 0
      %1507 = vmatpush1.bf16.msra.mxu0 0
      %1508 = vmatprep.subr.bf16.mxu0 0
      %1509 = vmatpush1.bf16.msra.mxu0 0
      %1510 = vmatprep.subr.bf16.mxu0 0
      %1511 = vmatpush1.bf16.msra.mxu0 0
      %1512 = vmatprep.subr.bf16.mxu0 0
      %1513 = vmatpush1.bf16.msra.mxu0 0
      %1514 = vmatprep.mubr.bf16.mxu0 %v1471
      %1515 = vmatmul.mubr.bf16.gmra.mrb[0].mxu0 %v1458
      %v1516 = vpop.f32.mrb[0].mxu0
      %v1517 = vadd.f32 %v1397, %v1516
      %v1518 = vpop.f32.mrb[0].mxu0
      %v1519 = vadd.f32 %v1397, %v1518
      %v1520 = vpop.f32.mrb[0].mxu0
      %v1521 = vadd.f32 %v1402, %v1520
      %v1522 = vpop.f32.mrb[0].mxu0
      %v1523 = vadd.f32 %v1402, %v1522
      %1524 = vmatprep.mubr.bf16.mxu0 %v1474
      %1525 = vmatmul.mubr.bf16.gmra.mrb[0].mxu0 %v1460
      %v1526 = vpop.f32.mrb[0].mxu0
      %v1527 = vadd.f32 %v1407, %v1526
      %v1528 = vpop.f32.mrb[0].mxu0
      %v1529 = vadd.f32 %v1407, %v1528
      %v1530 = vpop.f32.mrb[0].mxu0
      %v1531 = vadd.f32 %v1412, %v1530
      %v1532 = vpop.f32.mrb[0].mxu0
      %v1533 = vadd.f32 %v1412, %v1532
      %1534 = vmatprep.mubr.bf16.mxu0 %v1477
      %1535 = vmatmul.mubr.bf16.gmra.mrb[0].mxu0 %v1462
      %v1536 = vpop.f32.mrb[0].mxu0
      %v1537 = vadd.f32 %v1417, %v1536
      %v1538 = vpop.f32.mrb[0].mxu0
      %v1539 = vadd.f32 %v1417, %v1538
      %v1540 = vpop.f32.mrb[0].mxu0
      %v1541 = vadd.f32 %v1422, %v1540
      %v1542 = vpop.f32.mrb[0].mxu0
      %v1543 = vadd.f32 %v1422, %v1542
      %1544 = vmatprep.mubr.bf16.mxu0 %v1480
      %1545 = vmatmul.mubr.bf16.gmra.mrb[0].mxu0 %v1464
      %v1546 = vpop.f32.mrb[0].mxu0
      %v1547 = vadd.f32 %v1427, %v1546
      %v1548 = vpop.f32.mrb[0].mxu0
      %v1549 = vadd.f32 %v1427, %v1548
      %v1550 = vpop.f32.mrb[0].mxu0
      %v1551 = vadd.f32 %v1432, %v1550
      %v1552 = vpop.f32.mrb[0].mxu0
      %v1553 = vadd.f32 %v1432, %v1552
      %1554 = vdwg.mxu0
      %v1555 = vmax.f32 %v1517, 0.0
      %v1556 = vmax.f32 %v1519, 0.0
      %v1557 = vmax.f32 %v1521, 0.0
      %v1558 = vmax.f32 %v1523, 0.0
      %v1559 = vmax.f32 %v1527, 0.0
      %v1560 = vmax.f32 %v1529, 0.0
      %v1561 = vmax.f32 %v1531, 0.0
      %v1562 = vmax.f32 %v1533, 0.0
      %v1563 = vmax.f32 %v1537, 0.0
      %v1564 = vmax.f32 %v1539, 0.0
      %v1565 = vmax.f32 %v1541, 0.0
      %v1566 = vmax.f32 %v1543, 0.0
      %v1567 = vmax.f32 %v1547, 0.0
      %v1568 = vmax.f32 %v1549, 0.0
      %v1569 = vmax.f32 %v1551, 0.0
      %v1570 = vmax.f32 %v1553, 0.0
      %s1571 = scalar_lea.vmem %s5, 32
      %v1572 = vld [vmem:[%s1571] sm:$0xf]
      %v1573 = vld [vmem:[%s1571 + $0x4] sm:$0xf]
      %v1574 = vld [vmem:[%s1571 + $0x8] sm:$0xf]
      %v1575 = vld [vmem:[%s1571 + $0xc] sm:$0xf]
      %v1576 = vld [vmem:[%s1571 + $0x10] sm:$0xf]
      %v1577 = vld [vmem:[%s1571 + $0x14] sm:$0xf]
      %v1578 = vld [vmem:[%s1571 + $0x18] sm:$0xf]
      %v1579 = vld [vmem:[%s1571 + $0x1c] sm:$0xf]
      %v1580 = vpack.c.bf16 %v1557, %v1555
      %v1581 = vpack.c.bf16 %v1558, %v1556
      %v1582 = vpack.c.bf16 %v1561, %v1559
      %v1583 = vpack.c.bf16 %v1562, %v1560
      %v1584 = vpack.c.bf16 %v1565, %v1563
      %v1585 = vpack.c.bf16 %v1566, %v1564
      %v1586 = vpack.c.bf16 %v1569, %v1567
      %v1587 = vpack.c.bf16 %v1570, %v1568
      %s1588 = scalar_lea.vmem %s6, 64
      %v1589 = vld [vmem:[%s1588] sm:$0xff]
      %v1590 = vld [vmem:[%s1588 + $0x8] sm:$0xff]
      %v1591 = vld [vmem:[%s1588 + $0x10] sm:$0xff]
      %v1592 = vld [vmem:[%s1588 + $0x18] sm:$0xff]
      %v1593 = vld [vmem:[%s1588 + $0x20] sm:$0xff]
      %v1594 = vld [vmem:[%s1588 + $0x28] sm:$0xff]
      %v1595 = vld [vmem:[%s1588 + $0x30] sm:$0xff]
      %v1596 = vld [vmem:[%s1588 + $0x38] sm:$0xff]
      %1598 = vset.pattern.permute.xlu0 0
      %1599 = vperm.xlu0 %1598, %v1589
      %v1600 = vpop.permute.xlu0 %1599
      %1603 = vset.pattern.permute.xlu0 0
      %1604 = vperm.xlu0 %1603, %v1590
      %v1605 = vpop.permute.xlu0 %1604
      %1608 = vset.pattern.permute.xlu0 0
      %1609 = vperm.xlu0 %1608, %v1591
      %v1610 = vpop.permute.xlu0 %1609
      %1613 = vset.pattern.permute.xlu0 0
      %1614 = vperm.xlu0 %1613, %v1592
      %v1615 = vpop.permute.xlu0 %1614
      %1618 = vset.pattern.permute.xlu0 0
      %1619 = vperm.xlu0 %1618, %v1593
      %v1620 = vpop.permute.xlu0 %1619
      %1623 = vset.pattern.permute.xlu0 0
      %1624 = vperm.xlu0 %1623, %v1594
      %v1625 = vpop.permute.xlu0 %1624
      %1628 = vset.pattern.permute.xlu0 0
      %1629 = vperm.xlu0 %1628, %v1595
      %v1630 = vpop.permute.xlu0 %1629
      %1633 = vset.pattern.permute.xlu0 0
      %1634 = vperm.xlu0 %1633, %v1596
      %v1635 = vpop.permute.xlu0 %1634
      %v1645 = vunpack.c.l.b16 %v1572
      %v1646 = vunpack.c.l.b16 %v1573
      %v1647 = vunpack.c.l.b16 %v1574
      %v1648 = vunpack.c.l.b16 %v1575
      %v1649 = vunpack.c.l.b16 %v1576
      %v1650 = vunpack.c.l.b16 %v1577
      %v1651 = vunpack.c.l.b16 %v1578
      %v1652 = vunpack.c.l.b16 %v1579
      %v1653 = vpack.c.b16 %v1646, %v1645
      %v1654 = vpack.c.b16 %v1648, %v1647
      %v1655 = vpack.c.b16 %v1650, %v1649
      %v1656 = vpack.c.b16 %v1652, %v1651
      %v1658 = vsel %vm945, %v1653, 0
      %v1661 = vsel %vm945, %v1654, 0
      %v1664 = vsel %vm945, %v1655, 0
      %v1667 = vsel %vm945, %v1656, 0
      %1669 = vmatprep.subr.bf16.mxu0 %v1581
      %1670 = vmatpush1.bf16.msra.mxu0 %v1580
      %1671 = vmatprep.subr.bf16.mxu0 %v1583
      %1672 = vmatpush1.bf16.msra.mxu0 %v1582
      %1673 = vmatprep.subr.bf16.mxu0 %v1585
      %1674 = vmatpush1.bf16.msra.mxu0 %v1584
      %1675 = vmatprep.subr.bf16.mxu0 %v1587
      %1676 = vmatpush1.bf16.msra.mxu0 %v1586
      %1677 = vmatprep.subr.bf16.mxu0 0
      %1678 = vmatpush1.bf16.msra.mxu0 0
      %1679 = vmatprep.subr.bf16.mxu0 0
      %1680 = vmatpush1.bf16.msra.mxu0 0
      %1681 = vmatprep.subr.bf16.mxu0 0
      %1682 = vmatpush1.bf16.msra.mxu0 0
      %1683 = vmatprep.subr.bf16.mxu0 0
      %1684 = vmatpush1.bf16.msra.mxu0 0
      %1685 = vmatprep.subr.bf16.mxu0 0
      %1686 = vmatpush1.bf16.msra.mxu0 0
      %1687 = vmatprep.subr.bf16.mxu0 0
      %1688 = vmatpush1.bf16.msra.mxu0 0
      %1689 = vmatprep.subr.bf16.mxu0 0
      %1690 = vmatpush1.bf16.msra.mxu0 0
      %1691 = vmatprep.subr.bf16.mxu0 0
      %1692 = vmatpush1.bf16.msra.mxu0 0
      %1693 = vmatprep.subr.bf16.mxu0 0
      %1694 = vmatpush1.bf16.msra.mxu0 0
      %1695 = vmatprep.subr.bf16.mxu0 0
      %1696 = vmatpush1.bf16.msra.mxu0 0
      %1697 = vmatprep.subr.bf16.mxu0 0
      %1698 = vmatpush1.bf16.msra.mxu0 0
      %1699 = vmatprep.subr.bf16.mxu0 0
      %1700 = vmatpush1.bf16.msra.mxu0 0
      %1701 = vmatprep.mubr.bf16.mxu0 0
      %1702 = vmatmul.mubr.bf16.gmra.mrb[0].mxu0 %v1658
      %v1703 = vpop.f32.mrb[0].mxu0
      %v1704 = vadd.f32 %v1600, %v1703
      %v1705 = vpop.f32.mrb[0].mxu0
      %v1706 = vadd.f32 %v1600, %v1705
      %v1707 = vpop.f32.mrb[0].mxu0
      %v1708 = vadd.f32 %v1605, %v1707
      %v1709 = vpop.f32.mrb[0].mxu0
      %v1710 = vadd.f32 %v1605, %v1709
      %1711 = vmatprep.mubr.bf16.mxu0 0
      %1712 = vmatmul.mubr.bf16.gmra.mrb[0].mxu0 %v1661
      %v1713 = vpop.f32.mrb[0].mxu0
      %v1714 = vadd.f32 %v1610, %v1713
      %v1715 = vpop.f32.mrb[0].mxu0
      %v1716 = vadd.f32 %v1610, %v1715
      %v1717 = vpop.f32.mrb[0].mxu0
      %v1718 = vadd.f32 %v1615, %v1717
      %v1719 = vpop.f32.mrb[0].mxu0
      %v1720 = vadd.f32 %v1615, %v1719
      %1721 = vmatprep.mubr.bf16.mxu0 0
      %1722 = vmatmul.mubr.bf16.gmra.mrb[0].mxu0 %v1664
      %v1723 = vpop.f32.mrb[0].mxu0
      %v1724 = vadd.f32 %v1620, %v1723
      %v1725 = vpop.f32.mrb[0].mxu0
      %v1726 = vadd.f32 %v1620, %v1725
      %v1727 = vpop.f32.mrb[0].mxu0
      %v1728 = vadd.f32 %v1625, %v1727
      %v1729 = vpop.f32.mrb[0].mxu0
      %v1730 = vadd.f32 %v1625, %v1729
      %1731 = vmatprep.mubr.bf16.mxu0 0
      %1732 = vmatmul.mubr.bf16.gmra.mrb[0].mxu0 %v1667
      %v1733 = vpop.f32.mrb[0].mxu0
      %v1734 = vadd.f32 %v1630, %v1733
      %v1735 = vpop.f32.mrb[0].mxu0
      %v1736 = vadd.f32 %v1630, %v1735
      %v1737 = vpop.f32.mrb[0].mxu0
      %v1738 = vadd.f32 %v1635, %v1737
      %v1739 = vpop.f32.mrb[0].mxu0
      %v1740 = vadd.f32 %v1635, %v1739
      %1741 = vdwg.mxu0
      %v1742 = vadd.f32 %v1216, %v1704
      %v1743 = vadd.f32 %v1217, %v1706
      %v1744 = vadd.f32 %v1218, %v1708
      %v1745 = vadd.f32 %v1219, %v1710
      %v1746 = vadd.f32 %v1220, %v1714
      %v1747 = vadd.f32 %v1221, %v1716
      %v1748 = vadd.f32 %v1222, %v1718
      %v1749 = vadd.f32 %v1223, %v1720
      %v1750 = vadd.f32 %v1224, %v1724
      %v1751 = vadd.f32 %v1225, %v1726
      %v1752 = vadd.f32 %v1226, %v1728
      %v1753 = vadd.f32 %v1227, %v1730
      %v1754 = vadd.f32 %v1228, %v1734
      %v1755 = vadd.f32 %v1229, %v1736
      %v1756 = vadd.f32 %v1230, %v1738
      %v1757 = vadd.f32 %v1231, %v1740
      %v1758 = vpack.c.bf16 %v1744, %v1742
      %v1759 = vpack.c.bf16 %v1745, %v1743
      %v1760 = vpack.c.bf16 %v1748, %v1746
      %v1761 = vpack.c.bf16 %v1749, %v1747
      %v1762 = vpack.c.bf16 %v1752, %v1750
      %v1763 = vpack.c.bf16 %v1753, %v1751
      %v1764 = vpack.c.bf16 %v1756, %v1754
      %v1765 = vpack.c.bf16 %v1757, %v1755
      %vm1766 = vcmp.ge.s32.totalorder %v706, 4
      %vm1767 = vcmp.ge.s32.totalorder %v707, 4
      %1776 = vrot.lane.b32.xlu0 %v1758, 4
      %v1777 = vpop.permute.xlu0 %1776
      %1778 = vrot.lane.b32.xlu0 %v1759, 4
      %v1779 = vpop.permute.xlu0 %1778
      %1780 = vrot.lane.b32.xlu0 %v1760, 4
      %v1781 = vpop.permute.xlu0 %1780
      %1782 = vrot.lane.b32.xlu0 %v1761, 4
      %v1783 = vpop.permute.xlu0 %1782
      %1784 = vrot.lane.b32.xlu0 %v1762, 4
      %v1785 = vpop.permute.xlu0 %1784
      %1786 = vrot.lane.b32.xlu0 %v1763, 4
      %v1787 = vpop.permute.xlu0 %1786
      %1788 = vrot.lane.b32.xlu0 %v1764, 4
      %v1789 = vpop.permute.xlu0 %1788
      %1790 = vrot.lane.b32.xlu0 %v1765, 4
      %v1791 = vpop.permute.xlu0 %1790
      %vm1792 = vcmask 31744
      %v1793 = vsel %vm1792, %v1777, %v1779
      %v1794 = vsel %vm1792, %v1781, %v1783
      %v1795 = vsel %vm1792, %v1785, %v1787
      %v1796 = vsel %vm1792, %v1789, %v1791
      %vm1801 = vcmask 31744
      %v1803 = vsel %vm1801, 0, %v1777
      %v1806 = vsel %vm1801, 0, %v1781
      %v1809 = vsel %vm1801, 0, %v1785
      %v1812 = vsel %vm1801, 0, %v1789
      %v1814 = vsel %vm1766, 1, 0
      %v1815 = vsel %vm1767, 1, 0
      %vm1816 = vcmp.eq.s32.totalorder %v1814, 1
      %vm1817 = vcmp.eq.s32.totalorder %v1815, 1
      %vm1818 = vmpackc.low %vm1817, %vm1816
      %v1819 = vsel %vm1818, 65537, 0
      %v1820 = vlaneseq
      %v1821 = vshrl.u32 %v1820, 7
      %v1822 = vsub.s32 0, %v1821
      %v1823 = vrot.slane %v1819, %v1822
      %v1824 = vlaneseq
      %v1825 = vshrl.u32 %v1824, 7
      %v1826 = vsub.s32 4, %v1825
      %v1827 = vrot.slane %v1819, %v1826
      %vm1828 = vcmp.ne.s16.totalorder %v1823, 0
      %vm1829 = vcmp.ne.s16.totalorder %v1827, 0
      %v1830 = vsel %vm1828, %v1803, 0
      %v1831 = vsel %vm1829, %v1793, 0
      %v1832 = vsel %vm1828, %v1806, 0
      %v1833 = vsel %vm1829, %v1794, 0
      %v1834 = vsel %vm1828, %v1809, 0
      %v1835 = vsel %vm1829, %v1795, 0
      %v1836 = vsel %vm1828, %v1812, 0
      %v1837 = vsel %vm1829, %v1796, 0
      %vm1838 = vcmp.lt.s32.totalorder %v706, 124
      %vm1839 = vcmp.lt.s32.totalorder %v707, 124
      %1840 = vrot.lane.b32.xlu0 %v1758, 124
      %v1841 = vpop.permute.xlu0 %1840
      %1842 = vrot.lane.b32.xlu0 %v1759, 124
      %v1843 = vpop.permute.xlu0 %1842
      %1844 = vrot.lane.b32.xlu0 %v1760, 124
      %v1845 = vpop.permute.xlu0 %1844
      %1846 = vrot.lane.b32.xlu0 %v1761, 124
      %v1847 = vpop.permute.xlu0 %1846
      %1848 = vrot.lane.b32.xlu0 %v1762, 124
      %v1849 = vpop.permute.xlu0 %1848
      %1850 = vrot.lane.b32.xlu0 %v1763, 124
      %v1851 = vpop.permute.xlu0 %1850
      %1852 = vrot.lane.b32.xlu0 %v1764, 124
      %v1853 = vpop.permute.xlu0 %1852
      %1854 = vrot.lane.b32.xlu0 %v1765, 124
      %v1855 = vpop.permute.xlu0 %1854
      %vm1856 = vcmask 1014784
      %v1857 = vsel %vm1856, %v1841, %v1843
      %v1858 = vsel %vm1856, %v1845, %v1847
      %v1859 = vsel %vm1856, %v1849, %v1851
      %v1860 = vsel %vm1856, %v1853, %v1855
      %vm1865 = vcmask 1014784
      %v1867 = vsel %vm1865, %v1843, 0
      %v1870 = vsel %vm1865, %v1847, 0
      %v1873 = vsel %vm1865, %v1851, 0
      %v1876 = vsel %vm1865, %v1855, 0
      %v1878 = vsel %vm1838, 1, 0
      %v1879 = vsel %vm1839, 1, 0
      %vm1880 = vcmp.eq.s32.totalorder %v1878, 1
      %vm1881 = vcmp.eq.s32.totalorder %v1879, 1
      %vm1882 = vmpackc.low %vm1881, %vm1880
      %v1883 = vsel %vm1882, 65537, 0
      %v1884 = vlaneseq
      %v1885 = vshrl.u32 %v1884, 7
      %v1886 = vsub.s32 0, %v1885
      %v1887 = vrot.slane %v1883, %v1886
      %v1888 = vlaneseq
      %v1889 = vshrl.u32 %v1888, 7
      %v1890 = vsub.s32 4, %v1889
      %v1891 = vrot.slane %v1883, %v1890
      %vm1892 = vcmp.ne.s16.totalorder %v1887, 0
      %vm1893 = vcmp.ne.s16.totalorder %v1891, 0
      %v1894 = vsel %vm1892, %v1857, 0
      %v1895 = vsel %vm1893, %v1867, 0
      %v1896 = vsel %vm1892, %v1858, 0
      %v1897 = vsel %vm1893, %v1870, 0
      %v1898 = vsel %vm1892, %v1859, 0
      %v1899 = vsel %vm1893, %v1873, 0
      %v1900 = vsel %vm1892, %v1860, 0
      %v1901 = vsel %vm1893, %v1876, 0
      %s1902 = scalar_lea.vmem %s3, 128
      %v1903 = vld [vmem:[%s1902] sm:$0xff]
      %v1904 = vld [vmem:[%s1902 + $0x8] sm:$0xff]
      %v1905 = vld [vmem:[%s1902 + $0x10] sm:$0xff]
      %v1906 = vld [vmem:[%s1902 + $0x18] sm:$0xff]
      %v1907 = vld [vmem:[%s1902 + $0x20] sm:$0xff]
      %v1908 = vld [vmem:[%s1902 + $0x28] sm:$0xff]
      %v1909 = vld [vmem:[%s1902 + $0x30] sm:$0xff]
      %v1910 = vld [vmem:[%s1902 + $0x38] sm:$0xff]
      %s1911 = scalar_lea.vmem %s4, 128
      %v1912 = vld [vmem:[%s1911] sm:$0xff]
      %v1913 = vld [vmem:[%s1911 + $0x8] sm:$0xff]
      %v1914 = vld [vmem:[%s1911 + $0x10] sm:$0xff]
      %v1915 = vld [vmem:[%s1911 + $0x18] sm:$0xff]
      %v1916 = vld [vmem:[%s1911 + $0x20] sm:$0xff]
      %v1917 = vld [vmem:[%s1911 + $0x28] sm:$0xff]
      %v1918 = vld [vmem:[%s1911 + $0x30] sm:$0xff]
      %v1919 = vld [vmem:[%s1911 + $0x38] sm:$0xff]
      %1921 = vset.pattern.permute.xlu0 0
      %1922 = vperm.xlu0 %1921, %v1912
      %v1923 = vpop.permute.xlu0 %1922
      %1926 = vset.pattern.permute.xlu0 0
      %1927 = vperm.xlu0 %1926, %v1913
      %v1928 = vpop.permute.xlu0 %1927
      %1931 = vset.pattern.permute.xlu0 0
      %1932 = vperm.xlu0 %1931, %v1914
      %v1933 = vpop.permute.xlu0 %1932
      %1936 = vset.pattern.permute.xlu0 0
      %1937 = vperm.xlu0 %1936, %v1915
      %v1938 = vpop.permute.xlu0 %1937
      %1941 = vset.pattern.permute.xlu0 0
      %1942 = vperm.xlu0 %1941, %v1916
      %v1943 = vpop.permute.xlu0 %1942
      %1946 = vset.pattern.permute.xlu0 0
      %1947 = vperm.xlu0 %1946, %v1917
      %v1948 = vpop.permute.xlu0 %1947
      %1951 = vset.pattern.permute.xlu0 0
      %1952 = vperm.xlu0 %1951, %v1918
      %v1953 = vpop.permute.xlu0 %1952
      %1956 = vset.pattern.permute.xlu0 0
      %1957 = vperm.xlu0 %1956, %v1919
      %v1958 = vpop.permute.xlu0 %1957
      %v1968 = vunpack.c.l.b16 %v1903
      %v1969 = vunpack.c.h.b16 %v1903
      %v1970 = vunpack.c.l.b16 %v1904
      %v1971 = vunpack.c.h.b16 %v1904
      %v1972 = vunpack.c.l.b16 %v1905
      %v1973 = vunpack.c.h.b16 %v1905
      %v1974 = vunpack.c.l.b16 %v1906
      %v1975 = vunpack.c.h.b16 %v1906
      %v1976 = vunpack.c.l.b16 %v1907
      %v1977 = vunpack.c.h.b16 %v1907
      %v1978 = vunpack.c.l.b16 %v1908
      %v1979 = vunpack.c.h.b16 %v1908
      %v1980 = vunpack.c.l.b16 %v1909
      %v1981 = vunpack.c.h.b16 %v1909
      %v1982 = vunpack.c.l.b16 %v1910
      %v1983 = vunpack.c.h.b16 %v1910
      %v1984 = vpack.c.b16 %v1970, %v1968
      %v1985 = vpack.c.b16 %v1971, %v1969
      %v1986 = vpack.c.b16 %v1974, %v1972
      %v1987 = vpack.c.b16 %v1975, %v1973
      %v1988 = vpack.c.b16 %v1978, %v1976
      %v1989 = vpack.c.b16 %v1979, %v1977
      %v1990 = vpack.c.b16 %v1982, %v1980
      %v1991 = vpack.c.b16 %v1983, %v1981
      %v1997 = vsel %vm945, %v1985, 0
      %v2000 = vsel %vm945, %v1987, 0
      %v2003 = vsel %vm945, %v1989, 0
      %v2006 = vsel %vm945, %v1991, 0
      %2008 = vmatprep.subr.bf16.mxu0 %v1831
      %2009 = vmatpush1.bf16.msra.mxu0 %v1830
      %2010 = vmatprep.subr.bf16.mxu0 %v1833
      %2011 = vmatpush1.bf16.msra.mxu0 %v1832
      %2012 = vmatprep.subr.bf16.mxu0 %v1835
      %2013 = vmatpush1.bf16.msra.mxu0 %v1834
      %2014 = vmatprep.subr.bf16.mxu0 %v1837
      %2015 = vmatpush1.bf16.msra.mxu0 %v1836
      %2016 = vmatprep.subr.bf16.mxu0 %v1759
      %2017 = vmatpush1.bf16.msra.mxu0 %v1758
      %2018 = vmatprep.subr.bf16.mxu0 %v1761
      %2019 = vmatpush1.bf16.msra.mxu0 %v1760
      %2020 = vmatprep.subr.bf16.mxu0 %v1763
      %2021 = vmatpush1.bf16.msra.mxu0 %v1762
      %2022 = vmatprep.subr.bf16.mxu0 %v1765
      %2023 = vmatpush1.bf16.msra.mxu0 %v1764
      %2024 = vmatprep.subr.bf16.mxu0 %v1895
      %2025 = vmatpush1.bf16.msra.mxu0 %v1894
      %2026 = vmatprep.subr.bf16.mxu0 %v1897
      %2027 = vmatpush1.bf16.msra.mxu0 %v1896
      %2028 = vmatprep.subr.bf16.mxu0 %v1899
      %2029 = vmatpush1.bf16.msra.mxu0 %v1898
      %2030 = vmatprep.subr.bf16.mxu0 %v1901
      %2031 = vmatpush1.bf16.msra.mxu0 %v1900
      %2032 = vmatprep.subr.bf16.mxu0 0
      %2033 = vmatpush1.bf16.msra.mxu0 0
      %2034 = vmatprep.subr.bf16.mxu0 0
      %2035 = vmatpush1.bf16.msra.mxu0 0
      %2036 = vmatprep.subr.bf16.mxu0 0
      %2037 = vmatpush1.bf16.msra.mxu0 0
      %2038 = vmatprep.subr.bf16.mxu0 0
      %2039 = vmatpush1.bf16.msra.mxu0 0
      %2040 = vmatprep.mubr.bf16.mxu0 %v1997
      %2041 = vmatmul.mubr.bf16.gmra.mrb[0].mxu0 %v1984
      %v2042 = vpop.f32.mrb[0].mxu0
      %v2043 = vadd.f32 %v1923, %v2042
      %v2044 = vpop.f32.mrb[0].mxu0
      %v2045 = vadd.f32 %v1923, %v2044
      %v2046 = vpop.f32.mrb[0].mxu0
      %v2047 = vadd.f32 %v1928, %v2046
      %v2048 = vpop.f32.mrb[0].mxu0
      %v2049 = vadd.f32 %v1928, %v2048
      %2050 = vmatprep.mubr.bf16.mxu0 %v2000
      %2051 = vmatmul.mubr.bf16.gmra.mrb[0].mxu0 %v1986
      %v2052 = vpop.f32.mrb[0].mxu0
      %v2053 = vadd.f32 %v1933, %v2052
      %v2054 = vpop.f32.mrb[0].mxu0
      %v2055 = vadd.f32 %v1933, %v2054
      %v2056 = vpop.f32.mrb[0].mxu0
      %v2057 = vadd.f32 %v1938, %v2056
      %v2058 = vpop.f32.mrb[0].mxu0
      %v2059 = vadd.f32 %v1938, %v2058
      %2060 = vmatprep.mubr.bf16.mxu0 %v2003
      %2061 = vmatmul.mubr.bf16.gmra.mrb[0].mxu0 %v1988
      %v2062 = vpop.f32.mrb[0].mxu0
      %v2063 = vadd.f32 %v1943, %v2062
      %v2064 = vpop.f32.mrb[0].mxu0
      %v2065 = vadd.f32 %v1943, %v2064
      %v2066 = vpop.f32.mrb[0].mxu0
      %v2067 = vadd.f32 %v1948, %v2066
      %v2068 = vpop.f32.mrb[0].mxu0
      %v2069 = vadd.f32 %v1948, %v2068
      %2070 = vmatprep.mubr.bf16.mxu0 %v2006
      %2071 = vmatmul.mubr.bf16.gmra.mrb[0].mxu0 %v1990
      %v2072 = vpop.f32.mrb[0].mxu0
      %v2073 = vadd.f32 %v1953, %v2072
      %v2074 = vpop.f32.mrb[0].mxu0
      %v2075 = vadd.f32 %v1953, %v2074
      %v2076 = vpop.f32.mrb[0].mxu0
      %v2077 = vadd.f32 %v1958, %v2076
      %v2078 = vpop.f32.mrb[0].mxu0
      %v2079 = vadd.f32 %v1958, %v2078
      %2080 = vdwg.mxu0
      %v2081 = vmax.f32 %v2043, 0.0
      %v2082 = vmax.f32 %v2045, 0.0
      %v2083 = vmax.f32 %v2047, 0.0
      %v2084 = vmax.f32 %v2049, 0.0
      %v2085 = vmax.f32 %v2053, 0.0
      %v2086 = vmax.f32 %v2055, 0.0
      %v2087 = vmax.f32 %v2057, 0.0
      %v2088 = vmax.f32 %v2059, 0.0
      %v2089 = vmax.f32 %v2063, 0.0
      %v2090 = vmax.f32 %v2065, 0.0
      %v2091 = vmax.f32 %v2067, 0.0
      %v2092 = vmax.f32 %v2069, 0.0
      %v2093 = vmax.f32 %v2073, 0.0
      %v2094 = vmax.f32 %v2075, 0.0
      %v2095 = vmax.f32 %v2077, 0.0
      %v2096 = vmax.f32 %v2079, 0.0
      %s2097 = scalar_lea.vmem %s5, 64
      %v2098 = vld [vmem:[%s2097] sm:$0xf]
      %v2099 = vld [vmem:[%s2097 + $0x4] sm:$0xf]
      %v2100 = vld [vmem:[%s2097 + $0x8] sm:$0xf]
      %v2101 = vld [vmem:[%s2097 + $0xc] sm:$0xf]
      %v2102 = vld [vmem:[%s2097 + $0x10] sm:$0xf]
      %v2103 = vld [vmem:[%s2097 + $0x14] sm:$0xf]
      %v2104 = vld [vmem:[%s2097 + $0x18] sm:$0xf]
      %v2105 = vld [vmem:[%s2097 + $0x1c] sm:$0xf]
      %v2106 = vpack.c.bf16 %v2083, %v2081
      %v2107 = vpack.c.bf16 %v2084, %v2082
      %v2108 = vpack.c.bf16 %v2087, %v2085
      %v2109 = vpack.c.bf16 %v2088, %v2086
      %v2110 = vpack.c.bf16 %v2091, %v2089
      %v2111 = vpack.c.bf16 %v2092, %v2090
      %v2112 = vpack.c.bf16 %v2095, %v2093
      %v2113 = vpack.c.bf16 %v2096, %v2094
      %s2114 = scalar_lea.vmem %s6, 128
      %v2115 = vld [vmem:[%s2114] sm:$0xff]
      %v2116 = vld [vmem:[%s2114 + $0x8] sm:$0xff]
      %v2117 = vld [vmem:[%s2114 + $0x10] sm:$0xff]
      %v2118 = vld [vmem:[%s2114 + $0x18] sm:$0xff]
      %v2119 = vld [vmem:[%s2114 + $0x20] sm:$0xff]
      %v2120 = vld [vmem:[%s2114 + $0x28] sm:$0xff]
      %v2121 = vld [vmem:[%s2114 + $0x30] sm:$0xff]
      %v2122 = vld [vmem:[%s2114 + $0x38] sm:$0xff]
      %2124 = vset.pattern.permute.xlu0 0
      %2125 = vperm.xlu0 %2124, %v2115
      %v2126 = vpop.permute.xlu0 %2125
      %2129 = vset.pattern.permute.xlu0 0
      %2130 = vperm.xlu0 %2129, %v2116
      %v2131 = vpop.permute.xlu0 %2130
      %2134 = vset.pattern.permute.xlu0 0
      %2135 = vperm.xlu0 %2134, %v2117
      %v2136 = vpop.permute.xlu0 %2135
      %2139 = vset.pattern.permute.xlu0 0
      %2140 = vperm.xlu0 %2139, %v2118
      %v2141 = vpop.permute.xlu0 %2140
      %2144 = vset.pattern.permute.xlu0 0
      %2145 = vperm.xlu0 %2144, %v2119
      %v2146 = vpop.permute.xlu0 %2145
      %2149 = vset.pattern.permute.xlu0 0
      %2150 = vperm.xlu0 %2149, %v2120
      %v2151 = vpop.permute.xlu0 %2150
      %2154 = vset.pattern.permute.xlu0 0
      %2155 = vperm.xlu0 %2154, %v2121
      %v2156 = vpop.permute.xlu0 %2155
      %2159 = vset.pattern.permute.xlu0 0
      %2160 = vperm.xlu0 %2159, %v2122
      %v2161 = vpop.permute.xlu0 %2160
      %v2171 = vunpack.c.l.b16 %v2098
      %v2172 = vunpack.c.l.b16 %v2099
      %v2173 = vunpack.c.l.b16 %v2100
      %v2174 = vunpack.c.l.b16 %v2101
      %v2175 = vunpack.c.l.b16 %v2102
      %v2176 = vunpack.c.l.b16 %v2103
      %v2177 = vunpack.c.l.b16 %v2104
      %v2178 = vunpack.c.l.b16 %v2105
      %v2179 = vpack.c.b16 %v2172, %v2171
      %v2180 = vpack.c.b16 %v2174, %v2173
      %v2181 = vpack.c.b16 %v2176, %v2175
      %v2182 = vpack.c.b16 %v2178, %v2177
      %v2184 = vsel %vm945, %v2179, 0
      %v2187 = vsel %vm945, %v2180, 0
      %v2190 = vsel %vm945, %v2181, 0
      %v2193 = vsel %vm945, %v2182, 0
      %2195 = vmatprep.subr.bf16.mxu0 %v2107
      %2196 = vmatpush1.bf16.msra.mxu0 %v2106
      %2197 = vmatprep.subr.bf16.mxu0 %v2109
      %2198 = vmatpush1.bf16.msra.mxu0 %v2108
      %2199 = vmatprep.subr.bf16.mxu0 %v2111
      %2200 = vmatpush1.bf16.msra.mxu0 %v2110
      %2201 = vmatprep.subr.bf16.mxu0 %v2113
      %2202 = vmatpush1.bf16.msra.mxu0 %v2112
      %2203 = vmatprep.subr.bf16.mxu0 0
      %2204 = vmatpush1.bf16.msra.mxu0 0
      %2205 = vmatprep.subr.bf16.mxu0 0
      %2206 = vmatpush1.bf16.msra.mxu0 0
      %2207 = vmatprep.subr.bf16.mxu0 0
      %2208 = vmatpush1.bf16.msra.mxu0 0
      %2209 = vmatprep.subr.bf16.mxu0 0
      %2210 = vmatpush1.bf16.msra.mxu0 0
      %2211 = vmatprep.subr.bf16.mxu0 0
      %2212 = vmatpush1.bf16.msra.mxu0 0
      %2213 = vmatprep.subr.bf16.mxu0 0
      %2214 = vmatpush1.bf16.msra.mxu0 0
      %2215 = vmatprep.subr.bf16.mxu0 0
      %2216 = vmatpush1.bf16.msra.mxu0 0
      %2217 = vmatprep.subr.bf16.mxu0 0
      %2218 = vmatpush1.bf16.msra.mxu0 0
      %2219 = vmatprep.subr.bf16.mxu0 0
      %2220 = vmatpush1.bf16.msra.mxu0 0
      %2221 = vmatprep.subr.bf16.mxu0 0
      %2222 = vmatpush1.bf16.msra.mxu0 0
      %2223 = vmatprep.subr.bf16.mxu0 0
      %2224 = vmatpush1.bf16.msra.mxu0 0
      %2225 = vmatprep.subr.bf16.mxu0 0
      %2226 = vmatpush1.bf16.msra.mxu0 0
      %2227 = vmatprep.mubr.bf16.mxu0 0
      %2228 = vmatmul.mubr.bf16.gmra.mrb[0].mxu0 %v2184
      %v2229 = vpop.f32.mrb[0].mxu0
      %v2230 = vadd.f32 %v2126, %v2229
      %v2231 = vpop.f32.mrb[0].mxu0
      %v2232 = vadd.f32 %v2126, %v2231
      %v2233 = vpop.f32.mrb[0].mxu0
      %v2234 = vadd.f32 %v2131, %v2233
      %v2235 = vpop.f32.mrb[0].mxu0
      %v2236 = vadd.f32 %v2131, %v2235
      %2237 = vmatprep.mubr.bf16.mxu0 0
      %2238 = vmatmul.mubr.bf16.gmra.mrb[0].mxu0 %v2187
      %v2239 = vpop.f32.mrb[0].mxu0
      %v2240 = vadd.f32 %v2136, %v2239
      %v2241 = vpop.f32.mrb[0].mxu0
      %v2242 = vadd.f32 %v2136, %v2241
      %v2243 = vpop.f32.mrb[0].mxu0
      %v2244 = vadd.f32 %v2141, %v2243
      %v2245 = vpop.f32.mrb[0].mxu0
      %v2246 = vadd.f32 %v2141, %v2245
      %2247 = vmatprep.mubr.bf16.mxu0 0
      %2248 = vmatmul.mubr.bf16.gmra.mrb[0].mxu0 %v2190
      %v2249 = vpop.f32.mrb[0].mxu0
      %v2250 = vadd.f32 %v2146, %v2249
      %v2251 = vpop.f32.mrb[0].mxu0
      %v2252 = vadd.f32 %v2146, %v2251
      %v2253 = vpop.f32.mrb[0].mxu0
      %v2254 = vadd.f32 %v2151, %v2253
      %v2255 = vpop.f32.mrb[0].mxu0
      %v2256 = vadd.f32 %v2151, %v2255
      %2257 = vmatprep.mubr.bf16.mxu0 0
      %2258 = vmatmul.mubr.bf16.gmra.mrb[0].mxu0 %v2193
      %v2259 = vpop.f32.mrb[0].mxu0
      %v2260 = vadd.f32 %v2156, %v2259
      %v2261 = vpop.f32.mrb[0].mxu0
      %v2262 = vadd.f32 %v2156, %v2261
      %v2263 = vpop.f32.mrb[0].mxu0
      %v2264 = vadd.f32 %v2161, %v2263
      %v2265 = vpop.f32.mrb[0].mxu0
      %v2266 = vadd.f32 %v2161, %v2265
      %2267 = vdwg.mxu0
      %v2268 = vadd.f32 %v1742, %v2230
      %v2269 = vadd.f32 %v1743, %v2232
      %v2270 = vadd.f32 %v1744, %v2234
      %v2271 = vadd.f32 %v1745, %v2236
      %v2272 = vadd.f32 %v1746, %v2240
      %v2273 = vadd.f32 %v1747, %v2242
      %v2274 = vadd.f32 %v1748, %v2244
      %v2275 = vadd.f32 %v1749, %v2246
      %v2276 = vadd.f32 %v1750, %v2250
      %v2277 = vadd.f32 %v1751, %v2252
      %v2278 = vadd.f32 %v1752, %v2254
      %v2279 = vadd.f32 %v1753, %v2256
      %v2280 = vadd.f32 %v1754, %v2260
      %v2281 = vadd.f32 %v1755, %v2262
      %v2282 = vadd.f32 %v1756, %v2264
      %v2283 = vadd.f32 %v1757, %v2266
      %2284 = vst [vmem:[%s489] sm:$0xff] %v2268
      %2285 = vst [vmem:[%s489 + $0x8] sm:$0xff] %v2269
      %2286 = vst [vmem:[%s489 + $0x10] sm:$0xff] %v2270
      %2287 = vst [vmem:[%s489 + $0x18] sm:$0xff] %v2271
      %2288 = vst [vmem:[%s489 + $0x20] sm:$0xff] %v2272
      %2289 = vst [vmem:[%s489 + $0x28] sm:$0xff] %v2273
      %2290 = vst [vmem:[%s489 + $0x30] sm:$0xff] %v2274
      %2291 = vst [vmem:[%s489 + $0x38] sm:$0xff] %v2275
      %2292 = vst [vmem:[%s489 + $0x40] sm:$0xff] %v2276
      %2293 = vst [vmem:[%s489 + $0x48] sm:$0xff] %v2277
      %2294 = vst [vmem:[%s489 + $0x50] sm:$0xff] %v2278
      %2295 = vst [vmem:[%s489 + $0x58] sm:$0xff] %v2279
      %2296 = vst [vmem:[%s489 + $0x60] sm:$0xff] %v2280
      %2297 = vst [vmem:[%s489 + $0x68] sm:$0xff] %v2281
      %2298 = vst [vmem:[%s489 + $0x70] sm:$0xff] %v2282
      %2299 = vst [vmem:[%s489 + $0x78] sm:$0xff] %v2283
      %v2300 = vpack.c.bf16 %v2270, %v2268
      %v2301 = vpack.c.bf16 %v2271, %v2269
      %v2302 = vpack.c.bf16 %v2274, %v2272
      %v2303 = vpack.c.bf16 %v2275, %v2273
      %v2304 = vpack.c.bf16 %v2278, %v2276
      %v2305 = vpack.c.bf16 %v2279, %v2277
      %v2306 = vpack.c.bf16 %v2282, %v2280
      %v2307 = vpack.c.bf16 %v2283, %v2281
      %v2308 = vld [vmem:[%s7] sm:$0xf]
      %v2309 = vld [vmem:[%s7 + $0x4] sm:$0xf]
      %v2310 = vld [vmem:[%s7 + $0x8] sm:$0xf]
      %v2311 = vld [vmem:[%s7 + $0xc] sm:$0xf]
      %v2312 = vld [vmem:[%s7 + $0x10] sm:$0xf]
      %v2313 = vld [vmem:[%s7 + $0x14] sm:$0xf]
      %v2314 = vld [vmem:[%s7 + $0x18] sm:$0xf]
      %v2315 = vld [vmem:[%s7 + $0x1c] sm:$0xf]
      %v2316 = vld [vmem:[%s7 + $0x20] sm:$0xf]
      %v2317 = vld [vmem:[%s8] sm:$0xff]
      %v2318 = vld [vmem:[%s8 + $0x8] sm:$0xff]
      %v2319 = vld [vmem:[%s8 + $0x10] sm:$0xff]
      %v2320 = vld [vmem:[%s8 + $0x18] sm:$0xff]
      %v2321 = vld [vmem:[%s8 + $0x20] sm:$0xff]
      %v2322 = vld [vmem:[%s8 + $0x28] sm:$0xff]
      %v2323 = vld [vmem:[%s8 + $0x30] sm:$0xff]
      %v2324 = vld [vmem:[%s8 + $0x38] sm:$0xff]
      %v2325 = vld [vmem:[%s8 + $0x40] sm:$0xff]
      %2327 = vset.pattern.permute.xlu0 0
      %2328 = vperm.xlu0 %2327, %v2317
      %v2329 = vpop.permute.xlu0 %2328
      %2332 = vset.pattern.permute.xlu0 0
      %2333 = vperm.xlu0 %2332, %v2318
      %v2334 = vpop.permute.xlu0 %2333
      %2337 = vset.pattern.permute.xlu0 0
      %2338 = vperm.xlu0 %2337, %v2319
      %v2339 = vpop.permute.xlu0 %2338
      %2342 = vset.pattern.permute.xlu0 0
      %2343 = vperm.xlu0 %2342, %v2320
      %v2344 = vpop.permute.xlu0 %2343
      %2347 = vset.pattern.permute.xlu0 0
      %2348 = vperm.xlu0 %2347, %v2321
      %v2349 = vpop.permute.xlu0 %2348
      %2352 = vset.pattern.permute.xlu0 0
      %2353 = vperm.xlu0 %2352, %v2322
      %v2354 = vpop.permute.xlu0 %2353
      %2357 = vset.pattern.permute.xlu0 0
      %2358 = vperm.xlu0 %2357, %v2323
      %v2359 = vpop.permute.xlu0 %2358
      %2362 = vset.pattern.permute.xlu0 0
      %2363 = vperm.xlu0 %2362, %v2324
      %v2364 = vpop.permute.xlu0 %2363
      %2367 = vset.pattern.permute.xlu0 0
      %2368 = vperm.xlu0 %2367, %v2325
      %v2369 = vpop.permute.xlu0 %2368
      %v2380 = vunpack.c.l.b16 %v2308
      %v2381 = vunpack.c.l.b16 %v2309
      %v2382 = vunpack.c.l.b16 %v2310
      %v2383 = vunpack.c.l.b16 %v2311
      %v2384 = vunpack.c.l.b16 %v2312
      %v2385 = vunpack.c.l.b16 %v2313
      %v2386 = vunpack.c.l.b16 %v2314
      %v2387 = vunpack.c.l.b16 %v2315
      %v2388 = vunpack.c.l.b16 %v2316
      %v2389 = vpack.c.b16 %v2381, %v2380
      %v2390 = vpack.c.b16 %v2383, %v2382
      %v2391 = vpack.c.b16 %v2385, %v2384
      %v2392 = vpack.c.b16 %v2387, %v2386
      %v2393 = vpack.c.b16 %v2388, %v2388
      %v2395 = vsel %vm945, %v2389, 0
      %v2398 = vsel %vm945, %v2390, 0
      %v2401 = vsel %vm945, %v2391, 0
      %v2404 = vsel %vm945, %v2392, 0
      %v2407 = vsel %vm945, %v2393, 0
      %2409 = vmatprep.subr.bf16.mxu0 %v2301
      %2410 = vmatpush1.bf16.msra.mxu0 %v2300
      %2411 = vmatprep.subr.bf16.mxu0 %v2303
      %2412 = vmatpush1.bf16.msra.mxu0 %v2302
      %2413 = vmatprep.subr.bf16.mxu0 %v2305
      %2414 = vmatpush1.bf16.msra.mxu0 %v2304
      %2415 = vmatprep.subr.bf16.mxu0 %v2307
      %2416 = vmatpush1.bf16.msra.mxu0 %v2306
      %2417 = vmatprep.subr.bf16.mxu0 0
      %2418 = vmatpush1.bf16.msra.mxu0 0
      %2419 = vmatprep.subr.bf16.mxu0 0
      %2420 = vmatpush1.bf16.msra.mxu0 0
      %2421 = vmatprep.subr.bf16.mxu0 0
      %2422 = vmatpush1.bf16.msra.mxu0 0
      %2423 = vmatprep.subr.bf16.mxu0 0
      %2424 = vmatpush1.bf16.msra.mxu0 0
      %2425 = vmatprep.subr.bf16.mxu0 0
      %2426 = vmatpush1.bf16.msra.mxu0 0
      %2427 = vmatprep.subr.bf16.mxu0 0
      %2428 = vmatpush1.bf16.msra.mxu0 0
      %2429 = vmatprep.subr.bf16.mxu0 0
      %2430 = vmatpush1.bf16.msra.mxu0 0
      %2431 = vmatprep.subr.bf16.mxu0 0
      %2432 = vmatpush1.bf16.msra.mxu0 0
      %2433 = vmatprep.subr.bf16.mxu0 0
      %2434 = vmatpush1.bf16.msra.mxu0 0
      %2435 = vmatprep.subr.bf16.mxu0 0
      %2436 = vmatpush1.bf16.msra.mxu0 0
      %2437 = vmatprep.subr.bf16.mxu0 0
      %2438 = vmatpush1.bf16.msra.mxu0 0
      %2439 = vmatprep.subr.bf16.mxu0 0
      %2440 = vmatpush1.bf16.msra.mxu0 0
      %2441 = vmatprep.mubr.bf16.mxu0 0
      %2442 = vmatmul.mubr.bf16.gmra.mrb[0].mxu0 %v2395
      %v2443 = vpop.f32.mrb[0].mxu0
      %v2444 = vadd.f32 %v2329, %v2443
      %v2445 = vpop.f32.mrb[0].mxu0
      %v2446 = vadd.f32 %v2329, %v2445
      %v2447 = vpop.f32.mrb[0].mxu0
      %v2448 = vadd.f32 %v2334, %v2447
      %v2449 = vpop.f32.mrb[0].mxu0
      %v2450 = vadd.f32 %v2334, %v2449
      %2451 = vmatprep.mubr.bf16.mxu0 0
      %2452 = vmatmul.mubr.bf16.gmra.mrb[0].mxu0 %v2398
      %v2453 = vpop.f32.mrb[0].mxu0
      %v2454 = vadd.f32 %v2339, %v2453
      %v2455 = vpop.f32.mrb[0].mxu0
      %v2456 = vadd.f32 %v2339, %v2455
      %v2457 = vpop.f32.mrb[0].mxu0
      %v2458 = vadd.f32 %v2344, %v2457
      %v2459 = vpop.f32.mrb[0].mxu0
      %v2460 = vadd.f32 %v2344, %v2459
      %2461 = vmatprep.mubr.bf16.mxu0 0
      %2462 = vmatmul.mubr.bf16.gmra.mrb[0].mxu0 %v2401
      %v2463 = vpop.f32.mrb[0].mxu0
      %v2464 = vadd.f32 %v2349, %v2463
      %v2465 = vpop.f32.mrb[0].mxu0
      %v2466 = vadd.f32 %v2349, %v2465
      %v2467 = vpop.f32.mrb[0].mxu0
      %v2468 = vadd.f32 %v2354, %v2467
      %v2469 = vpop.f32.mrb[0].mxu0
      %v2470 = vadd.f32 %v2354, %v2469
      %2471 = vmatprep.mubr.bf16.mxu0 0
      %2472 = vmatmul.mubr.bf16.gmra.mrb[0].mxu0 %v2404
      %v2473 = vpop.f32.mrb[0].mxu0
      %v2474 = vadd.f32 %v2359, %v2473
      %v2475 = vpop.f32.mrb[0].mxu0
      %v2476 = vadd.f32 %v2359, %v2475
      %v2477 = vpop.f32.mrb[0].mxu0
      %v2478 = vadd.f32 %v2364, %v2477
      %v2479 = vpop.f32.mrb[0].mxu0
      %v2480 = vadd.f32 %v2364, %v2479
      %2481 = vmatprep.mubr.bf16.mxu0 0
      %2482 = vmatmul.mubr.bf16.gmra.mrb[0].mxu0 %v2407
      %v2483 = vpop.f32.mrb[0].mxu0
      %v2484 = vadd.f32 %v2369, %v2483
      %v2485 = vpop.f32.mrb[0].mxu0
      %v2486 = vadd.f32 %v2369, %v2485
      %v2487 = vpop.f32.mrb[0].mxu0
      %v2488 = vpop.f32.mrb[0].mxu0
      %2489 = vdwg.mxu0
      %2490 = vst [vmem:[%s494] sm:$0xff] %v2444
      %2491 = vst [vmem:[%s494 + $0x8] sm:$0xff] %v2446
      %v2492 = vmax.f32 %v2448, 0.0
      %v2493 = vmax.f32 %v2450, 0.0
      %v2494 = vmax.f32 %v2454, 0.0
      %v2495 = vmax.f32 %v2456, 0.0
      %v2496 = vmax.f32 %v2458, 0.0
      %v2497 = vmax.f32 %v2460, 0.0
      %v2498 = vmax.f32 %v2464, 0.0
      %v2499 = vmax.f32 %v2466, 0.0
      %v2500 = vmax.f32 %v2468, 0.0
      %v2501 = vmax.f32 %v2470, 0.0
      %v2502 = vmax.f32 %v2474, 0.0
      %v2503 = vmax.f32 %v2476, 0.0
      %v2504 = vmax.f32 %v2478, 0.0
      %v2505 = vmax.f32 %v2480, 0.0
      %v2506 = vmax.f32 %v2484, 0.0
      %v2507 = vmax.f32 %v2486, 0.0
      %v2508 = vrot.slane %v2444, 4
      %v2509 = vmax.f32 %v2444, %v2508
      %v2510 = vrot.slane %v2509, 2
      %v2511 = vmax.f32 %v2509, %v2510
      %v2512 = vrot.slane %v2511, 1
      %v2513 = vmax.f32 %v2511, %v2512
      %v2514 = vrot.slane %v2446, 4
      %v2515 = vmax.f32 %v2446, %v2514
      %v2516 = vrot.slane %v2515, 2
      %v2517 = vmax.f32 %v2515, %v2516
      %v2518 = vrot.slane %v2517, 1
      %v2519 = vmax.f32 %v2517, %v2518
      %v2520 = vsub.f32 %v2444, %v2513
      %v2521 = vsub.f32 %v2446, %v2519
      %v2522 = vmul.f32 %v2520, 1.442695
      %v2523 = vpow.pop %v2522
      %v2524 = vmul.f32 %v2521, 1.442695
      %v2525 = vpow.pop %v2524
      %v2526 = vrot.slane %v2523, 4
      %v2527 = vadd.f32 %v2523, %v2526
      %v2528 = vrot.slane %v2527, 2
      %v2529 = vadd.f32 %v2527, %v2528
      %v2530 = vrot.slane %v2529, 1
      %v2531 = vadd.f32 %v2529, %v2530
      %v2532 = vrot.slane %v2525, 4
      %v2533 = vadd.f32 %v2525, %v2532
      %v2534 = vrot.slane %v2533, 2
      %v2535 = vadd.f32 %v2533, %v2534
      %v2536 = vrot.slane %v2535, 1
      %v2537 = vadd.f32 %v2535, %v2536
      %v2538 = vrcp.pop %v2531
      %v2539 = vmul.f32 %v2523, %v2538
      %v2540 = vrcp.pop %v2537
      %v2541 = vmul.f32 %v2525, %v2540
      %2542 = vst [vmem:[%s499] sm:$0xff] %v2539
      %2543 = vst [vmem:[%s499 + $0x8] sm:$0xff] %v2541
      %v2544 = vld [vmem:[%s9] sm:$0x1]
      %v2545 = vpack.c.bf16 %v2494, %v2492
      %v2546 = vpack.c.bf16 %v2495, %v2493
      %v2547 = vpack.c.bf16 %v2498, %v2496
      %v2548 = vpack.c.bf16 %v2499, %v2497
      %v2549 = vpack.c.bf16 %v2502, %v2500
      %v2550 = vpack.c.bf16 %v2503, %v2501
      %v2551 = vpack.c.bf16 %v2506, %v2504
      %v2552 = vpack.c.bf16 %v2507, %v2505
      %v2553 = vld [vmem:[%s10] sm:$0x3]
      %2555 = vset.pattern.permute.xlu0 0
      %2556 = vperm.xlu0 %2555, %v2553
      %v2557 = vpop.permute.xlu0 %2556
      %v2560 = vsel %vm945, %v2544, 0
      %2562 = vmatprep.subr.bf16.mxu0 %v2546
      %2563 = vmatpush1.bf16.msra.mxu0 %v2545
      %2564 = vmatprep.subr.bf16.mxu0 %v2548
      %2565 = vmatpush1.bf16.msra.mxu0 %v2547
      %2566 = vmatprep.subr.bf16.mxu0 %v2550
      %2567 = vmatpush1.bf16.msra.mxu0 %v2549
      %2568 = vmatprep.subr.bf16.mxu0 %v2552
      %2569 = vmatpush1.bf16.msra.mxu0 %v2551
      %2570 = vmatprep.subr.bf16.mxu0 0
      %2571 = vmatpush1.bf16.msra.mxu0 0
      %2572 = vmatprep.subr.bf16.mxu0 0
      %2573 = vmatpush1.bf16.msra.mxu0 0
      %2574 = vmatprep.subr.bf16.mxu0 0
      %2575 = vmatpush1.bf16.msra.mxu0 0
      %2576 = vmatprep.subr.bf16.mxu0 0
      %2577 = vmatpush1.bf16.msra.mxu0 0
      %2578 = vmatprep.subr.bf16.mxu0 0
      %2579 = vmatpush1.bf16.msra.mxu0 0
      %2580 = vmatprep.subr.bf16.mxu0 0
      %2581 = vmatpush1.bf16.msra.mxu0 0
      %2582 = vmatprep.subr.bf16.mxu0 0
      %2583 = vmatpush1.bf16.msra.mxu0 0
      %2584 = vmatprep.subr.bf16.mxu0 0
      %2585 = vmatpush1.bf16.msra.mxu0 0
      %2586 = vmatprep.subr.bf16.mxu0 0
      %2587 = vmatpush1.bf16.msra.mxu0 0
      %2588 = vmatprep.subr.bf16.mxu0 0
      %2589 = vmatpush1.bf16.msra.mxu0 0
      %2590 = vmatprep.subr.bf16.mxu0 0
      %2591 = vmatpush1.bf16.msra.mxu0 0
      %2592 = vmatprep.subr.bf16.mxu0 0
      %2593 = vmatpush1.bf16.msra.mxu0 0
      %2594 = vmatprep.mubr.bf16.mxu0 0
      %2595 = vmatmul.mubr.bf16.gmra.mrb[0].mxu0 %v2560
      %v2596 = vpop.f32.mrb[0].mxu0
      %v2597 = vadd.f32 %v2557, %v2596
      %v2598 = vpop.f32.mrb[0].mxu0
      %v2599 = vadd.f32 %v2557, %v2598
      %v2600 = vpop.f32.mrb[0].mxu0
      %v2601 = vpop.f32.mrb[0].mxu0
      %2602 = vdwg.mxu0
      %v2605 = vcombine.low %v2597, %v2599
      %v2607 = vunpack.c.l.s4 1983009808
      %v2608 = vunpack.c.0.s8 %v2607
      %v2609 = vlaneseq
      %v2610 = vshrl.u32 %v2609, 7
      %v2611 = vsub.s32 %v2608, %v2610
      %v2612 = vrot.slane %v2605, %v2611
      %2614 = vst [vmem:[%s504] sm:$0xf] %v2612
      %p2615 = scmp.lt.s32.totalorder %s26, 1
      %s2616 = scalar_select %p2615, %s26, 1
      %s2617 = smul.addr %s2616, 16
      %s2618 = smul.addr %s2617, 8
      %s2619 = scalar_lea.vmem %s11, %s2618
      %p2620 = scmp.lt.s32.totalorder %s26, 1
      %s2621 = scalar_select %p2620, %s26, 1
      %s2622 = smul.addr %s2621, 2
      %s2623 = smul.addr %s2622, 8
      %s2624 = scalar_lea.vmem %s12, %s2623
      %p2625 = scmp.lt.s32.totalorder %s26, 1
      %s2626 = scalar_select %p2625, %s26, 1
      %s2627 = smul.addr %s2626, 2
      %s2628 = smul.addr %s2627, 8
      %s2629 = scalar_lea.vmem %s13, %s2628
      %p2630 = scmp.lt.s32.totalorder %s26, 1
      %s2631 = scalar_select %p2630, %s26, 1
      %s2632 = smul.addr %s2631, 2
      %s2633 = smul.addr %s2632, 2
      %s2634 = scalar_lea.vmem %s14, %s2633
      // Predicated region
      $region65: #{_pipeline.3} parent=63 // pred_check
        %p2635 = pneg %p280
      $region66: #{_pipeline.3} parent=63 // pred_check_branch
        %2637 = sbr.rel (%p2635) target = $region68
      $region67: #{_pipeline.3} parent=63 // pred_region
        _
      $region68: #{_pipeline.3} parent=63 // pred_fallthru
        _
      // Predicated region
      $region69: #{_pipeline.3} parent=63 // pred_check
        %p2638 = pneg %p306
      $region70: #{_pipeline.3} parent=63 // pred_check_branch
        %2640 = sbr.rel (%p2638) target = $region72
      $region71: #{_pipeline.3} parent=63 // pred_region
        _
      $region72: #{_pipeline.3} parent=63 // pred_fallthru
        _
      // Predicated region
      $region73: #{_pipeline.3} parent=63 // pred_check
        %p2641 = pneg %p332
      $region74: #{_pipeline.3} parent=63 // pred_check_branch
        %2643 = sbr.rel (%p2641) target = $region76
      $region75: #{_pipeline.3} parent=63 // pred_region
        _
      $region76: #{_pipeline.3} parent=63 // pred_fallthru
        _
      // Predicated region
      $region77: #{_pipeline.3} parent=63 // pred_check
        %p2644 = pneg %p358
      $region78: #{_pipeline.3} parent=63 // pred_check_branch
        %2646 = sbr.rel (%p2644) target = $region80
      $region79: #{_pipeline.3} parent=63 // pred_region
        _
      $region80: #{_pipeline.3} parent=63 // pred_fallthru
        _
    $region64: #{_pipeline.3} parent=5 // pred_fallthru
      _
    %p2647 = scmp.le.s32.totalorder 2, %s21
    // Predicated region
    $region81: #{_pipeline.3} parent=5 // pred_check
      %p2648 = pneg %p2647
    $region82: #{_pipeline.3} parent=5 // pred_check_branch
      %2650 = sbr.rel (%p2648) target = $region84
    $region83: #{_pipeline.3} parent=5 // pred_region
      %s2651 = ssub.s32 %s21, 2
      // Predicated region
      $region85: #{_pipeline.3} parent=83 // pred_check
        %p2652 = pneg %p286
      $region86: #{_pipeline.3} parent=83 // pred_check_branch
        %2654 = sbr.rel (%p2652) target = $region88
      $region87: #{_pipeline.3} parent=83 // pred_region
        %p2655 = scmp.lt.s32.totalorder %s27, 1
        %s2656 = scalar_select %p2655, %s27, 1
        %s2657 = smul.addr %s2656, 16
        %s2658 = smul.addr %s2657, 8
        %s2659 = scalar_lea.vmem %s11, %s2658
      $region88: #{_pipeline.3} parent=83 // pred_fallthru
        _
      // Predicated region
      $region89: #{_pipeline.3} parent=83 // pred_check
        %p2660 = pneg %p312
      $region90: #{_pipeline.3} parent=83 // pred_check_branch
        %2662 = sbr.rel (%p2660) target = $region92
      $region91: #{_pipeline.3} parent=83 // pred_region
        %p2663 = scmp.lt.s32.totalorder %s27, 1
        %s2664 = scalar_select %p2663, %s27, 1
        %s2665 = smul.addr %s2664, 2
        %s2666 = smul.addr %s2665, 8
        %s2667 = scalar_lea.vmem %s12, %s2666
      $region92: #{_pipeline.3} parent=83 // pred_fallthru
        _
      // Predicated region
      $region93: #{_pipeline.3} parent=83 // pred_check
        %p2668 = pneg %p338
      $region94: #{_pipeline.3} parent=83 // pred_check_branch
        %2670 = sbr.rel (%p2668) target = $region96
      $region95: #{_pipeline.3} parent=83 // pred_region
        %p2671 = scmp.lt.s32.totalorder %s27, 1
        %s2672 = scalar_select %p2671, %s27, 1
        %s2673 = smul.addr %s2672, 2
        %s2674 = smul.addr %s2673, 8
        %s2675 = scalar_lea.vmem %s13, %s2674
      $region96: #{_pipeline.3} parent=83 // pred_fallthru
        _
      // Predicated region
      $region97: #{_pipeline.3} parent=83 // pred_check
        %p2676 = pneg %p364
      $region98: #{_pipeline.3} parent=83 // pred_check_branch
        %2678 = sbr.rel (%p2676) target = $region100
      $region99: #{_pipeline.3} parent=83 // pred_region
        %p2679 = scmp.lt.s32.totalorder %s27, 1
        %s2680 = scalar_select %p2679, %s27, 1
        %s2681 = smul.addr %s2680, 2
        %s2682 = smul.addr %s2681, 2
        %s2683 = scalar_lea.vmem %s14, %s2682
      $region100: #{_pipeline.3} parent=83 // pred_fallthru
        _
    $region84: #{_pipeline.3} parent=5 // pred_fallthru
      _
  $region6: #{_pipeline.3} parent=0 // loop_footer
    %s25 = sadd.s32 1, %s21
  $region7: #{_pipeline.3} parent=0 // loop_footer_branch
    %20 = sbr.rel target = $region3
  $region8: #{_pipeline.3} parent=0 // loop_exit
    _

// kernel: _pipeline.2
$region0: #{_pipeline.2}
  #allocation0 [shape = 'u32[]', space=smem, size = 0x4, offset = 0x4, fixed_abs, tag = 'smem constant byte address 0x4 - core index']
  #allocation1 [shape = 'u32[144,128]{1,0:T(1,128)}', space=vmem, size = 0x12000, scoped, tag = 'internal scratch']
  %s0 = inlined_call_operand.vmem [shape: f32[2,16,256], index: 0, kind: input, shape index: {}]
  %s1 = inlined_call_operand.vmem [shape: bf16[64,16], index: 1, kind: input, shape index: {}]
  %s2 = inlined_call_operand.vmem [shape: f32[64,1], index: 2, kind: input, shape index: {}]
  %s3 = inlined_call_operand.vmem [shape: bf16[3,64,192], index: 3, kind: input, shape index: {}]
  %s4 = inlined_call_operand.vmem [shape: f32[3,64,1], index: 4, kind: input, shape index: {}]
  %s5 = inlined_call_operand.vmem [shape: bf16[3,64,64], index: 5, kind: input, shape index: {}]
  %s6 = inlined_call_operand.vmem [shape: f32[3,64,1], index: 6, kind: input, shape index: {}]
  %s7 = inlined_call_operand.vmem [shape: bf16[72,64], index: 7, kind: input, shape index: {}]
  %s8 = inlined_call_operand.vmem [shape: f32[72,1], index: 8, kind: input, shape index: {}]
  %s9 = inlined_call_operand.vmem [shape: bf16[2,64], index: 9, kind: input, shape index: {}]
  %s10 = inlined_call_operand.vmem [shape: f32[2,1], index: 10, kind: input, shape index: {}]
  %s11 = inlined_call_operand.vmem [shape: f32[2,64,256], index: 11, kind: output, shape index: {0}]
  %s12 = inlined_call_operand.vmem [shape: f32[2,8,256], index: 12, kind: output, shape index: {1}]
  %s13 = inlined_call_operand.vmem [shape: f32[2,8,256], index: 13, kind: output, shape index: {2}]
  %s14 = inlined_call_operand.vmem [shape: f32[2,2,256], index: 14, kind: output, shape index: {3}]
  %15 = xla_tuple %s11, %s12, %s13, %s14
  %s16 = sld [smem:[#allocation0]]
  $region101: #{_pipeline.2} parent=0
    _
  %s18 = ssub.s32 1, %s16
  %s19 = scalar_select 0, %s18, %s16
  loop: start=0, step=1, limit=4
  $region2: #{_pipeline.2} parent=0 // loop_pre_header
    _
  $region3: #{_pipeline.2} parent=0 // loop_header
    %s21 = sphi 0, %s25
    %p22 = scmp.ge.s32.totalorder %s21, 4
    %s31 = sphi 0, %s33
    %s34 = sphi 0, %s31
    %s35 = sphi 0, %s34
    %s51 = sphi 0, %s35
    %s55 = sphi 0, %s55
    %s57 = sphi 0, %s55
    %s58 = sphi 0, %s57
    %s72 = sphi 0, %s58
    %s76 = sphi 0, %s76
    %s78 = sphi 0, %s76
    %s79 = sphi 0, %s78
    %s93 = sphi 0, %s79
    %s97 = sphi 0, %s97
    %s99 = sphi 0, %s97
    %s100 = sphi 0, %s99
    %s114 = sphi 0, %s100
    %s118 = sphi 0, %s118
    %s120 = sphi 0, %s118
    %s121 = sphi 0, %s120
    %s135 = sphi 0, %s121
    %s139 = sphi 0, %s139
    %s141 = sphi 0, %s139
    %s142 = sphi 0, %s141
    %s156 = sphi 0, %s142
    %s160 = sphi 0, %s160
    %s162 = sphi 0, %s160
    %s163 = sphi 0, %s162
    %s177 = sphi 0, %s163
    %s181 = sphi 0, %s181
    %s183 = sphi 0, %s181
    %s184 = sphi 0, %s183
    %s198 = sphi 0, %s184
    %s202 = sphi 0, %s202
    %s204 = sphi 0, %s202
    %s205 = sphi 0, %s204
    %s219 = sphi 0, %s205
    %s223 = sphi 0, %s223
    %s225 = sphi 0, %s223
    %s226 = sphi 0, %s225
    %s240 = sphi 0, %s226
    %s244 = sphi 0, %s244
    %s246 = sphi 0, %s244
    %s247 = sphi 0, %s246
    %s261 = sphi 0, %s247
    %s267 = sphi 0, %s269
    %s270 = sphi 0, %s267
    %s271 = sphi 0, %s270
    %s287 = sphi 0, %s271
    %s293 = sphi 0, %s295
    %s296 = sphi 0, %s293
    %s297 = sphi 0, %s296
    %s313 = sphi 0, %s297
    %s319 = sphi 0, %s321
    %s322 = sphi 0, %s319
    %s323 = sphi 0, %s322
    %s339 = sphi 0, %s323
    %s345 = sphi 0, %s347
    %s348 = sphi 0, %s345
    %s349 = sphi 0, %s348
    %s365 = sphi 0, %s349
  $region4: #{_pipeline.2} parent=0 // loop_header_branch
    %24 = sbr.rel (%p22) target = $region8
  $region5: #{_pipeline.2} parent=0 // loop_body
    %s26 = ssub.s32 %s21, 1
    %s27 = ssub.s32 %s21, 2
    %s28 = sadd.s32 %s21, 1
    %s29 = ssub.s32 %s21, %s28
    %p30 = scmp.eq.s32.totalorder %s29, 0
    %s32 = sadd.s32 %s31, 1
    %s33 = scalar_select %p30, %s31, %s32
    %p36 = pneg %p30
    %p37 = scmp.eq.s32.totalorder %s21, 1
    %p38 = por %p36, %p37
    %p39 = scmp.ne.s32.totalorder %s31, %s34
    %p40 = scmp.eq.s32.totalorder %s21, 0
    %p41 = por %p39, %p40
    %p42 = scmp.ne.s32.totalorder %s31, %s34
    %p43 = scmp.eq.s32.totalorder %s26, 1
    %p44 = por %p42, %p43
    %p45 = scmp.ne.s32.totalorder %s34, %s35
    %p46 = scmp.eq.s32.totalorder %s26, 0
    %p47 = por %p45, %p46
    %p48 = scmp.ne.s32.totalorder %s34, %s35
    %p49 = scmp.eq.s32.totalorder %s27, 1
    %p50 = por %p48, %p49
    %p52 = scmp.ne.s32.totalorder %s35, %s51
    %p53 = scmp.eq.s32.totalorder %s27, 0
    %p54 = por %p52, %p53
    %s56 = sadd.s32 %s55, 1
    %p59 = scmp.eq.s32.totalorder %s21, 1
    %p60 = scmp.ne.s32.totalorder %s55, %s57
    %p61 = scmp.eq.s32.totalorder %s21, 0
    %p62 = por %p60, %p61
    %p63 = scmp.ne.s32.totalorder %s55, %s57
    %p64 = scmp.eq.s32.totalorder %s26, 1
    %p65 = por %p63, %p64
    %p66 = scmp.ne.s32.totalorder %s57, %s58
    %p67 = scmp.eq.s32.totalorder %s26, 0
    %p68 = por %p66, %p67
    %p69 = scmp.ne.s32.totalorder %s57, %s58
    %p70 = scmp.eq.s32.totalorder %s27, 1
    %p71 = por %p69, %p70
    %p73 = scmp.ne.s32.totalorder %s58, %s72
    %p74 = scmp.eq.s32.totalorder %s27, 0
    %p75 = por %p73, %p74
    %s77 = sadd.s32 %s76, 1
    %p80 = scmp.eq.s32.totalorder %s21, 1
    %p81 = scmp.ne.s32.totalorder %s76, %s78
    %p82 = scmp.eq.s32.totalorder %s21, 0
    %p83 = por %p81, %p82
    %p84 = scmp.ne.s32.totalorder %s76, %s78
    %p85 = scmp.eq.s32.totalorder %s26, 1
    %p86 = por %p84, %p85
    %p87 = scmp.ne.s32.totalorder %s78, %s79
    %p88 = scmp.eq.s32.totalorder %s26, 0
    %p89 = por %p87, %p88
    %p90 = scmp.ne.s32.totalorder %s78, %s79
    %p91 = scmp.eq.s32.totalorder %s27, 1
    %p92 = por %p90, %p91
    %p94 = scmp.ne.s32.totalorder %s79, %s93
    %p95 = scmp.eq.s32.totalorder %s27, 0
    %p96 = por %p94, %p95
    %s98 = sadd.s32 %s97, 1
    %p101 = scmp.eq.s32.totalorder %s21, 1
    %p102 = scmp.ne.s32.totalorder %s97, %s99
    %p103 = scmp.eq.s32.totalorder %s21, 0
    %p104 = por %p102, %p103
    %p105 = scmp.ne.s32.totalorder %s97, %s99
    %p106 = scmp.eq.s32.totalorder %s26, 1
    %p107 = por %p105, %p106
    %p108 = scmp.ne.s32.totalorder %s99, %s100
    %p109 = scmp.eq.s32.totalorder %s26, 0
    %p110 = por %p108, %p109
    %p111 = scmp.ne.s32.totalorder %s99, %s100
    %p112 = scmp.eq.s32.totalorder %s27, 1
    %p113 = por %p111, %p112
    %p115 = scmp.ne.s32.totalorder %s100, %s114
    %p116 = scmp.eq.s32.totalorder %s27, 0
    %p117 = por %p115, %p116
    %s119 = sadd.s32 %s118, 1
    %p122 = scmp.eq.s32.totalorder %s21, 1
    %p123 = scmp.ne.s32.totalorder %s118, %s120
    %p124 = scmp.eq.s32.totalorder %s21, 0
    %p125 = por %p123, %p124
    %p126 = scmp.ne.s32.totalorder %s118, %s120
    %p127 = scmp.eq.s32.totalorder %s26, 1
    %p128 = por %p126, %p127
    %p129 = scmp.ne.s32.totalorder %s120, %s121
    %p130 = scmp.eq.s32.totalorder %s26, 0
    %p131 = por %p129, %p130
    %p132 = scmp.ne.s32.totalorder %s120, %s121
    %p133 = scmp.eq.s32.totalorder %s27, 1
    %p134 = por %p132, %p133
    %p136 = scmp.ne.s32.totalorder %s121, %s135
    %p137 = scmp.eq.s32.totalorder %s27, 0
    %p138 = por %p136, %p137
    %s140 = sadd.s32 %s139, 1
    %p143 = scmp.eq.s32.totalorder %s21, 1
    %p144 = scmp.ne.s32.totalorder %s139, %s141
    %p145 = scmp.eq.s32.totalorder %s21, 0
    %p146 = por %p144, %p145
    %p147 = scmp.ne.s32.totalorder %s139, %s141
    %p148 = scmp.eq.s32.totalorder %s26, 1
    %p149 = por %p147, %p148
    %p150 = scmp.ne.s32.totalorder %s141, %s142
    %p151 = scmp.eq.s32.totalorder %s26, 0
    %p152 = por %p150, %p151
    %p153 = scmp.ne.s32.totalorder %s141, %s142
    %p154 = scmp.eq.s32.totalorder %s27, 1
    %p155 = por %p153, %p154
    %p157 = scmp.ne.s32.totalorder %s142, %s156
    %p158 = scmp.eq.s32.totalorder %s27, 0
    %p159 = por %p157, %p158
    %s161 = sadd.s32 %s160, 1
    %p164 = scmp.eq.s32.totalorder %s21, 1
    %p165 = scmp.ne.s32.totalorder %s160, %s162
    %p166 = scmp.eq.s32.totalorder %s21, 0
    %p167 = por %p165, %p166
    %p168 = scmp.ne.s32.totalorder %s160, %s162
    %p169 = scmp.eq.s32.totalorder %s26, 1
    %p170 = por %p168, %p169
    %p171 = scmp.ne.s32.totalorder %s162, %s163
    %p172 = scmp.eq.s32.totalorder %s26, 0
    %p173 = por %p171, %p172
    %p174 = scmp.ne.s32.totalorder %s162, %s163
    %p175 = scmp.eq.s32.totalorder %s27, 1
    %p176 = por %p174, %p175
    %p178 = scmp.ne.s32.totalorder %s163, %s177
    %p179 = scmp.eq.s32.totalorder %s27, 0
    %p180 = por %p178, %p179
    %s182 = sadd.s32 %s181, 1
    %p185 = scmp.eq.s32.totalorder %s21, 1
    %p186 = scmp.ne.s32.totalorder %s181, %s183
    %p187 = scmp.eq.s32.totalorder %s21, 0
    %p188 = por %p186, %p187
    %p189 = scmp.ne.s32.totalorder %s181, %s183
    %p190 = scmp.eq.s32.totalorder %s26, 1
    %p191 = por %p189, %p190
    %p192 = scmp.ne.s32.totalorder %s183, %s184
    %p193 = scmp.eq.s32.totalorder %s26, 0
    %p194 = por %p192, %p193
    %p195 = scmp.ne.s32.totalorder %s183, %s184
    %p196 = scmp.eq.s32.totalorder %s27, 1
    %p197 = por %p195, %p196
    %p199 = scmp.ne.s32.totalorder %s184, %s198
    %p200 = scmp.eq.s32.totalorder %s27, 0
    %p201 = por %p199, %p200
    %s203 = sadd.s32 %s202, 1
    %p206 = scmp.eq.s32.totalorder %s21, 1
    %p207 = scmp.ne.s32.totalorder %s202, %s204
    %p208 = scmp.eq.s32.totalorder %s21, 0
    %p209 = por %p207, %p208
    %p210 = scmp.ne.s32.totalorder %s202, %s204
    %p211 = scmp.eq.s32.totalorder %s26, 1
    %p212 = por %p210, %p211
    %p213 = scmp.ne.s32.totalorder %s204, %s205
    %p214 = scmp.eq.s32.totalorder %s26, 0
    %p215 = por %p213, %p214
    %p216 = scmp.ne.s32.totalorder %s204, %s205
    %p217 = scmp.eq.s32.totalorder %s27, 1
    %p218 = por %p216, %p217
    %p220 = scmp.ne.s32.totalorder %s205, %s219
    %p221 = scmp.eq.s32.totalorder %s27, 0
    %p222 = por %p220, %p221
    %s224 = sadd.s32 %s223, 1
    %p227 = scmp.eq.s32.totalorder %s21, 1
    %p228 = scmp.ne.s32.totalorder %s223, %s225
    %p229 = scmp.eq.s32.totalorder %s21, 0
    %p230 = por %p228, %p229
    %p231 = scmp.ne.s32.totalorder %s223, %s225
    %p232 = scmp.eq.s32.totalorder %s26, 1
    %p233 = por %p231, %p232
    %p234 = scmp.ne.s32.totalorder %s225, %s226
    %p235 = scmp.eq.s32.totalorder %s26, 0
    %p236 = por %p234, %p235
    %p237 = scmp.ne.s32.totalorder %s225, %s226
    %p238 = scmp.eq.s32.totalorder %s27, 1
    %p239 = por %p237, %p238
    %p241 = scmp.ne.s32.totalorder %s226, %s240
    %p242 = scmp.eq.s32.totalorder %s27, 0
    %p243 = por %p241, %p242
    %s245 = sadd.s32 %s244, 1
    %p248 = scmp.eq.s32.totalorder %s21, 1
    %p249 = scmp.ne.s32.totalorder %s244, %s246
    %p250 = scmp.eq.s32.totalorder %s21, 0
    %p251 = por %p249, %p250
    %p252 = scmp.ne.s32.totalorder %s244, %s246
    %p253 = scmp.eq.s32.totalorder %s26, 1
    %p254 = por %p252, %p253
    %p255 = scmp.ne.s32.totalorder %s246, %s247
    %p256 = scmp.eq.s32.totalorder %s26, 0
    %p257 = por %p255, %p256
    %p258 = scmp.ne.s32.totalorder %s246, %s247
    %p259 = scmp.eq.s32.totalorder %s27, 1
    %p260 = por %p258, %p259
    %p262 = scmp.ne.s32.totalorder %s247, %s261
    %p263 = scmp.eq.s32.totalorder %s27, 0
    %p264 = por %p262, %p263
    %s265 = ssub.s32 %s21, %s28
    %p266 = scmp.eq.s32.totalorder %s265, 0
    %s268 = sadd.s32 %s267, 1
    %s269 = scalar_select %p266, %s267, %s268
    %p272 = pneg %p266
    %p273 = scmp.eq.s32.totalorder %s21, 1
    %p274 = por %p272, %p273
    %p275 = scmp.ne.s32.totalorder %s267, %s270
    %p276 = scmp.eq.s32.totalorder %s21, 0
    %p277 = por %p275, %p276
    %p278 = scmp.ne.s32.totalorder %s267, %s270
    %p279 = scmp.eq.s32.totalorder %s26, 1
    %p280 = por %p278, %p279
    %p281 = scmp.ne.s32.totalorder %s270, %s271
    %p282 = scmp.eq.s32.totalorder %s26, 0
    %p283 = por %p281, %p282
    %p284 = scmp.ne.s32.totalorder %s270, %s271
    %p285 = scmp.eq.s32.totalorder %s27, 1
    %p286 = por %p284, %p285
    %p288 = scmp.ne.s32.totalorder %s271, %s287
    %p289 = scmp.eq.s32.totalorder %s27, 0
    %p290 = por %p288, %p289
    %s291 = ssub.s32 %s21, %s28
    %p292 = scmp.eq.s32.totalorder %s291, 0
    %s294 = sadd.s32 %s293, 1
    %s295 = scalar_select %p292, %s293, %s294
    %p298 = pneg %p292
    %p299 = scmp.eq.s32.totalorder %s21, 1
    %p300 = por %p298, %p299
    %p301 = scmp.ne.s32.totalorder %s293, %s296
    %p302 = scmp.eq.s32.totalorder %s21, 0
    %p303 = por %p301, %p302
    %p304 = scmp.ne.s32.totalorder %s293, %s296
    %p305 = scmp.eq.s32.totalorder %s26, 1
    %p306 = por %p304, %p305
    %p307 = scmp.ne.s32.totalorder %s296, %s297
    %p308 = scmp.eq.s32.totalorder %s26, 0
    %p309 = por %p307, %p308
    %p310 = scmp.ne.s32.totalorder %s296, %s297
    %p311 = scmp.eq.s32.totalorder %s27, 1
    %p312 = por %p310, %p311
    %p314 = scmp.ne.s32.totalorder %s297, %s313
    %p315 = scmp.eq.s32.totalorder %s27, 0
    %p316 = por %p314, %p315
    %s317 = ssub.s32 %s21, %s28
    %p318 = scmp.eq.s32.totalorder %s317, 0
    %s320 = sadd.s32 %s319, 1
    %s321 = scalar_select %p318, %s319, %s320
    %p324 = pneg %p318
    %p325 = scmp.eq.s32.totalorder %s21, 1
    %p326 = por %p324, %p325
    %p327 = scmp.ne.s32.totalorder %s319, %s322
    %p328 = scmp.eq.s32.totalorder %s21, 0
    %p329 = por %p327, %p328
    %p330 = scmp.ne.s32.totalorder %s319, %s322
    %p331 = scmp.eq.s32.totalorder %s26, 1
    %p332 = por %p330, %p331
    %p333 = scmp.ne.s32.totalorder %s322, %s323
    %p334 = scmp.eq.s32.totalorder %s26, 0
    %p335 = por %p333, %p334
    %p336 = scmp.ne.s32.totalorder %s322, %s323
    %p337 = scmp.eq.s32.totalorder %s27, 1
    %p338 = por %p336, %p337
    %p340 = scmp.ne.s32.totalorder %s323, %s339
    %p341 = scmp.eq.s32.totalorder %s27, 0
    %p342 = por %p340, %p341
    %s343 = ssub.s32 %s21, %s28
    %p344 = scmp.eq.s32.totalorder %s343, 0
    %s346 = sadd.s32 %s345, 1
    %s347 = scalar_select %p344, %s345, %s346
    %p350 = pneg %p344
    %p351 = scmp.eq.s32.totalorder %s21, 1
    %p352 = por %p350, %p351
    %p353 = scmp.ne.s32.totalorder %s345, %s348
    %p354 = scmp.eq.s32.totalorder %s21, 0
    %p355 = por %p353, %p354
    %p356 = scmp.ne.s32.totalorder %s345, %s348
    %p357 = scmp.eq.s32.totalorder %s26, 1
    %p358 = por %p356, %p357
    %p359 = scmp.ne.s32.totalorder %s348, %s349
    %p360 = scmp.eq.s32.totalorder %s26, 0
    %p361 = por %p359, %p360
    %p362 = scmp.ne.s32.totalorder %s348, %s349
    %p363 = scmp.eq.s32.totalorder %s27, 1
    %p364 = por %p362, %p363
    %p366 = scmp.ne.s32.totalorder %s349, %s365
    %p367 = scmp.eq.s32.totalorder %s27, 0
    %p368 = por %p366, %p367
    %p369 = scmp.le.s32.totalorder 1, %s21
    %p370 = scmp.lt.s32.totalorder %s21, 3
    %p371 = pnand %p369, %p370
    %p372 = pneg %p371
    // Predicated region
    $region9: #{_pipeline.2} parent=5 // pred_check
      _
    $region10: #{_pipeline.2} parent=5 // pred_check_branch
      %374 = sbr.rel (%p371) target = $region12
    $region11: #{_pipeline.2} parent=5 // pred_region
      %s375 = ssub.s32 %s21, 1
      // Predicated region
      $region13: #{_pipeline.2} parent=11 // pred_check
        %p376 = pneg %p68
      $region14: #{_pipeline.2} parent=11 // pred_check_branch
        %378 = sbr.rel (%p376) target = $region16
      $region15: #{_pipeline.2} parent=11 // pred_region
        _
      $region16: #{_pipeline.2} parent=11 // pred_fallthru
        _
      // Predicated region
      $region17: #{_pipeline.2} parent=11 // pred_check
        %p379 = pneg %p89
      $region18: #{_pipeline.2} parent=11 // pred_check_branch
        %381 = sbr.rel (%p379) target = $region20
      $region19: #{_pipeline.2} parent=11 // pred_region
        _
      $region20: #{_pipeline.2} parent=11 // pred_fallthru
        _
      // Predicated region
      $region21: #{_pipeline.2} parent=11 // pred_check
        %p382 = pneg %p110
      $region22: #{_pipeline.2} parent=11 // pred_check_branch
        %384 = sbr.rel (%p382) target = $region24
      $region23: #{_pipeline.2} parent=11 // pred_region
        _
      $region24: #{_pipeline.2} parent=11 // pred_fallthru
        _
      // Predicated region
      $region25: #{_pipeline.2} parent=11 // pred_check
        %p385 = pneg %p131
      $region26: #{_pipeline.2} parent=11 // pred_check_branch
        %387 = sbr.rel (%p385) target = $region28
      $region27: #{_pipeline.2} parent=11 // pred_region
        _
      $region28: #{_pipeline.2} parent=11 // pred_fallthru
        _
      // Predicated region
      $region29: #{_pipeline.2} parent=11 // pred_check
        %p388 = pneg %p152
      $region30: #{_pipeline.2} parent=11 // pred_check_branch
        %390 = sbr.rel (%p388) target = $region32
      $region31: #{_pipeline.2} parent=11 // pred_region
        _
      $region32: #{_pipeline.2} parent=11 // pred_fallthru
        _
      // Predicated region
      $region33: #{_pipeline.2} parent=11 // pred_check
        %p391 = pneg %p173
      $region34: #{_pipeline.2} parent=11 // pred_check_branch
        %393 = sbr.rel (%p391) target = $region36
      $region35: #{_pipeline.2} parent=11 // pred_region
        _
      $region36: #{_pipeline.2} parent=11 // pred_fallthru
        _
      // Predicated region
      $region37: #{_pipeline.2} parent=11 // pred_check
        %p394 = pneg %p194
      $region38: #{_pipeline.2} parent=11 // pred_check_branch
        %396 = sbr.rel (%p394) target = $region40
      $region39: #{_pipeline.2} parent=11 // pred_region
        _
      $region40: #{_pipeline.2} parent=11 // pred_fallthru
        _
      // Predicated region
      $region41: #{_pipeline.2} parent=11 // pred_check
        %p397 = pneg %p215
      $region42: #{_pipeline.2} parent=11 // pred_check_branch
        %399 = sbr.rel (%p397) target = $region44
      $region43: #{_pipeline.2} parent=11 // pred_region
        _
      $region44: #{_pipeline.2} parent=11 // pred_fallthru
        _
      // Predicated region
      $region45: #{_pipeline.2} parent=11 // pred_check
        %p400 = pneg %p236
      $region46: #{_pipeline.2} parent=11 // pred_check_branch
        %402 = sbr.rel (%p400) target = $region48
      $region47: #{_pipeline.2} parent=11 // pred_region
        _
      $region48: #{_pipeline.2} parent=11 // pred_fallthru
        _
      // Predicated region
      $region49: #{_pipeline.2} parent=11 // pred_check
        %p403 = pneg %p257
      $region50: #{_pipeline.2} parent=11 // pred_check_branch
        %405 = sbr.rel (%p403) target = $region52
      $region51: #{_pipeline.2} parent=11 // pred_region
        _
      $region52: #{_pipeline.2} parent=11 // pred_fallthru
        _
    $region12: #{_pipeline.2} parent=5 // pred_fallthru
      _
    %p406 = scmp.lt.s32.totalorder %s21, 2
    // Predicated region
    $region53: #{_pipeline.2} parent=5 // pred_check
      %p407 = pneg %p406
    $region54: #{_pipeline.2} parent=5 // pred_check_branch
      %409 = sbr.rel (%p407) target = $region56
    $region55: #{_pipeline.2} parent=5 // pred_region
      // Predicated region
      $region57: #{_pipeline.2} parent=55 // pred_check
        %p410 = pneg %p41
      $region58: #{_pipeline.2} parent=55 // pred_check_branch
        %412 = sbr.rel (%p410) target = $region60
      $region59: #{_pipeline.2} parent=55 // pred_region
        %p413 = scmp.lt.s32.totalorder %s21, 1
        %s414 = scalar_select %p413, %s21, 1
        %s415 = smul.addr %s414, 4
        %s416 = smul.addr %s415, 8
        %s417 = scalar_lea.vmem %s0, %s416
      $region60: #{_pipeline.2} parent=55 // pred_fallthru
        _
    $region56: #{_pipeline.2} parent=5 // pred_fallthru
      _
    %p418 = scmp.le.s32.totalorder 1, %s21
    %p419 = scmp.lt.s32.totalorder %s21, 3
    %p420 = pnand %p418, %p419
    %p421 = pneg %p420
    // Predicated region
    $region61: #{_pipeline.2} parent=5 // pred_check
      _
    $region62: #{_pipeline.2} parent=5 // pred_check_branch
      %423 = sbr.rel (%p420) target = $region64
    $region63: #{_pipeline.2} parent=5 // pred_region
      %s424 = ssub.s32 %s21, 1
      %p425 = scmp.lt.s32.totalorder %s26, 1
      %s426 = scalar_select %p425, %s26, 1
      %s427 = smul.addr %s426, 4
      %s428 = smul.addr %s427, 8
      %s429 = scalar_lea.vmem %s0, %s428
      %p430 = pneg %p47
      %p431 = pneg %p44
      %p432 = pneg %p68
      %p433 = pneg %p65
      %p434 = pneg %p89
      %p435 = pneg %p86
      %p436 = pneg %p110
      %p437 = pneg %p107
      %p438 = pneg %p131
      %p439 = pneg %p128
      %p440 = pneg %p152
      %p441 = pneg %p149
      %p442 = pneg %p173
      %p443 = pneg %p170
      %p444 = pneg %p194
      %p445 = pneg %p191
      %p446 = pneg %p215
      %p447 = pneg %p212
      %p448 = pneg %p236
      %p449 = pneg %p233
      %p450 = pneg %p257
      %p451 = pneg %p254
      %p452 = pneg %p283
      %p453 = pneg %p280
      %p454 = scmp.lt.s32.totalorder %s26, 1
      %s455 = scalar_select %p454, %s26, 1
      %s456 = smul.addr %s455, 16
      %s457 = smul.addr %s456, 8
      %s458 = scalar_lea.vmem %s11, %s457
      %p459 = pneg %p309
      %p460 = pneg %p306
      %p461 = scmp.lt.s32.totalorder %s26, 1
      %s462 = scalar_select %p461, %s26, 1
      %s463 = smul.addr %s462, 2
      %s464 = smul.addr %s463, 8
      %s465 = scalar_lea.vmem %s12, %s464
      %p466 = pneg %p335
      %p467 = pneg %p332
      %p468 = scmp.lt.s32.totalorder %s26, 1
      %s469 = scalar_select %p468, %s26, 1
      %s470 = smul.addr %s469, 2
      %s471 = smul.addr %s470, 8
      %s472 = scalar_lea.vmem %s13, %s471
      %p473 = pneg %p361
      %p474 = pneg %p358
      %p475 = scmp.lt.s32.totalorder %s26, 1
      %s476 = scalar_select %p475, %s26, 1
      %s477 = smul.addr %s476, 2
      %s478 = smul.addr %s477, 2
      %s479 = scalar_lea.vmem %s14, %s478
      %p480 = scmp.lt.s32.totalorder %s26, 1
      %s481 = scalar_select %p480, %s26, 1
      %s482 = smul.addr %s481, 4
      %s483 = smul.addr %s482, 8
      %s484 = scalar_lea.vmem %s0, %s483
      %p485 = scmp.lt.s32.totalorder %s26, 1
      %s486 = scalar_select %p485, %s26, 1
      %s487 = smul.addr %s486, 16
      %s488 = smul.addr %s487, 8
      %s489 = scalar_lea.vmem %s11, %s488
      %p490 = scmp.lt.s32.totalorder %s26, 1
      %s491 = scalar_select %p490, %s26, 1
      %s492 = smul.addr %s491, 2
      %s493 = smul.addr %s492, 8
      %s494 = scalar_lea.vmem %s12, %s493
      %p495 = scmp.lt.s32.totalorder %s26, 1
      %s496 = scalar_select %p495, %s26, 1
      %s497 = smul.addr %s496, 2
      %s498 = smul.addr %s497, 8
      %s499 = scalar_lea.vmem %s13, %s498
      %p500 = scmp.lt.s32.totalorder %s26, 1
      %s501 = scalar_select %p500, %s26, 1
      %s502 = smul.addr %s501, 2
      %s503 = smul.addr %s502, 2
      %s504 = scalar_lea.vmem %s14, %s503
      %v508 = vld [vmem:[%s484] sm:$0xff]
      %v509 = vld [vmem:[%s484 + $0x8] sm:$0xff]
      %v510 = vld [vmem:[%s484 + $0x10] sm:$0xff]
      %v511 = vld [vmem:[%s484 + $0x18] sm:$0xff]
      %v512 = vpack.c.bf16 %v510, %v508
      %v513 = vpack.c.bf16 %v511, %v509
      %v514 = vld [vmem:[%s1] sm:$0xf]
      %v515 = vld [vmem:[%s1 + $0x4] sm:$0xf]
      %v516 = vld [vmem:[%s1 + $0x8] sm:$0xf]
      %v517 = vld [vmem:[%s1 + $0xc] sm:$0xf]
      %v518 = vld [vmem:[%s1 + $0x10] sm:$0xf]
      %v519 = vld [vmem:[%s1 + $0x14] sm:$0xf]
      %v520 = vld [vmem:[%s1 + $0x18] sm:$0xf]
      %v521 = vld [vmem:[%s1 + $0x1c] sm:$0xf]
      %v522 = vld [vmem:[%s2] sm:$0xff]
      %v523 = vld [vmem:[%s2 + $0x8] sm:$0xff]
      %v524 = vld [vmem:[%s2 + $0x10] sm:$0xff]
      %v525 = vld [vmem:[%s2 + $0x18] sm:$0xff]
      %v526 = vld [vmem:[%s2 + $0x20] sm:$0xff]
      %v527 = vld [vmem:[%s2 + $0x28] sm:$0xff]
      %v528 = vld [vmem:[%s2 + $0x30] sm:$0xff]
      %v529 = vld [vmem:[%s2 + $0x38] sm:$0xff]
      %531 = vset.pattern.permute.xlu0 0
      %532 = vperm.xlu0 %531, %v522
      %v533 = vpop.permute.xlu0 %532
      %536 = vset.pattern.permute.xlu0 0
      %537 = vperm.xlu0 %536, %v523
      %v538 = vpop.permute.xlu0 %537
      %541 = vset.pattern.permute.xlu0 0
      %542 = vperm.xlu0 %541, %v524
      %v543 = vpop.permute.xlu0 %542
      %546 = vset.pattern.permute.xlu0 0
      %547 = vperm.xlu0 %546, %v525
      %v548 = vpop.permute.xlu0 %547
      %551 = vset.pattern.permute.xlu0 0
      %552 = vperm.xlu0 %551, %v526
      %v553 = vpop.permute.xlu0 %552
      %556 = vset.pattern.permute.xlu0 0
      %557 = vperm.xlu0 %556, %v527
      %v558 = vpop.permute.xlu0 %557
      %561 = vset.pattern.permute.xlu0 0
      %562 = vperm.xlu0 %561, %v528
      %v563 = vpop.permute.xlu0 %562
      %566 = vset.pattern.permute.xlu0 0
      %567 = vperm.xlu0 %566, %v529
      %v568 = vpop.permute.xlu0 %567
      %v578 = vunpack.c.l.b16 %v514
      %v579 = vunpack.c.l.b16 %v515
      %v580 = vunpack.c.l.b16 %v516
      %v581 = vunpack.c.l.b16 %v517
      %v582 = vunpack.c.l.b16 %v518
      %v583 = vunpack.c.l.b16 %v519
      %v584 = vunpack.c.l.b16 %v520
      %v585 = vunpack.c.l.b16 %v521
      %v586 = vpack.c.b16 %v579, %v578
      %v587 = vpack.c.b16 %v581, %v580
      %v588 = vpack.c.b16 %v583, %v582
      %v589 = vpack.c.b16 %v585, %v584
      %vm590 = vcmask 130048
      %v592 = vsel %vm590, %v586, 0
      %v595 = vsel %vm590, %v587, 0
      %v598 = vsel %vm590, %v588, 0
      %v601 = vsel %vm590, %v589, 0
      %603 = vmatprep.subr.bf16.mxu0 %v513
      %604 = vmatpush1.bf16.msra.mxu0 %v512
      %605 = vmatprep.subr.bf16.mxu0 0
      %606 = vmatpush1.bf16.msra.mxu0 0
      %607 = vmatprep.subr.bf16.mxu0 0
      %608 = vmatpush1.bf16.msra.mxu0 0
      %609 = vmatprep.subr.bf16.mxu0 0
      %610 = vmatpush1.bf16.msra.mxu0 0
      %611 = vmatprep.subr.bf16.mxu0 0
      %612 = vmatpush1.bf16.msra.mxu0 0
      %613 = vmatprep.subr.bf16.mxu0 0
      %614 = vmatpush1.bf16.msra.mxu0 0
      %615 = vmatprep.subr.bf16.mxu0 0
      %616 = vmatpush1.bf16.msra.mxu0 0
      %617 = vmatprep.subr.bf16.mxu0 0
      %618 = vmatpush1.bf16.msra.mxu0 0
      %619 = vmatprep.subr.bf16.mxu0 0
      %620 = vmatpush1.bf16.msra.mxu0 0
      %621 = vmatprep.subr.bf16.mxu0 0
      %622 = vmatpush1.bf16.msra.mxu0 0
      %623 = vmatprep.subr.bf16.mxu0 0
      %624 = vmatpush1.bf16.msra.mxu0 0
      %625 = vmatprep.subr.bf16.mxu0 0
      %626 = vmatpush1.bf16.msra.mxu0 0
      %627 = vmatprep.subr.bf16.mxu0 0
      %628 = vmatpush1.bf16.msra.mxu0 0
      %629 = vmatprep.subr.bf16.mxu0 0
      %630 = vmatpush1.bf16.msra.mxu0 0
      %631 = vmatprep.subr.bf16.mxu0 0
      %632 = vmatpush1.bf16.msra.mxu0 0
      %633 = vmatprep.subr.bf16.mxu0 0
      %634 = vmatpush1.bf16.msra.mxu0 0
      %635 = vmatprep.mubr.bf16.mxu0 0
      %636 = vmatmul.mubr.bf16.gmra.mrb[0].mxu0 %v592
      %v637 = vpop.f32.mrb[0].mxu0
      %v638 = vadd.f32 %v533, %v637
      %v639 = vpop.f32.mrb[0].mxu0
      %v640 = vadd.f32 %v533, %v639
      %v641 = vpop.f32.mrb[0].mxu0
      %v642 = vadd.f32 %v538, %v641
      %v643 = vpop.f32.mrb[0].mxu0
      %v644 = vadd.f32 %v538, %v643
      %645 = vmatprep.mubr.bf16.mxu0 0
      %646 = vmatmul.mubr.bf16.gmra.mrb[0].mxu0 %v595
      %v647 = vpop.f32.mrb[0].mxu0
      %v648 = vadd.f32 %v543, %v647
      %v649 = vpop.f32.mrb[0].mxu0
      %v650 = vadd.f32 %v543, %v649
      %v651 = vpop.f32.mrb[0].mxu0
      %v652 = vadd.f32 %v548, %v651
      %v653 = vpop.f32.mrb[0].mxu0
      %v654 = vadd.f32 %v548, %v653
      %655 = vmatprep.mubr.bf16.mxu0 0
      %656 = vmatmul.mubr.bf16.gmra.mrb[0].mxu0 %v598
      %v657 = vpop.f32.mrb[0].mxu0
      %v658 = vadd.f32 %v553, %v657
      %v659 = vpop.f32.mrb[0].mxu0
      %v660 = vadd.f32 %v553, %v659
      %v661 = vpop.f32.mrb[0].mxu0
      %v662 = vadd.f32 %v558, %v661
      %v663 = vpop.f32.mrb[0].mxu0
      %v664 = vadd.f32 %v558, %v663
      %665 = vmatprep.mubr.bf16.mxu0 0
      %666 = vmatmul.mubr.bf16.gmra.mrb[0].mxu0 %v601
      %v667 = vpop.f32.mrb[0].mxu0
      %v668 = vadd.f32 %v563, %v667
      %v669 = vpop.f32.mrb[0].mxu0
      %v670 = vadd.f32 %v563, %v669
      %v671 = vpop.f32.mrb[0].mxu0
      %v672 = vadd.f32 %v568, %v671
      %v673 = vpop.f32.mrb[0].mxu0
      %v674 = vadd.f32 %v568, %v673
      %675 = vdwg.mxu0
      %v676 = vlaneseq
      %v677 = vand.u32 %v676, 127
      %v678 = vadd.s32 %v677, 128
      %vm679 = vcmp.lt.s32.totalorder %v677, 0
      %v680 = vsub.s32 0, %v677
      %v681 = vsel %vm679, %v680, %v677
      %v682 = vshrl.u32 %v681, 7
      %v683 = vand.u32 %v681, 127
      %v684 = vsub.s32 0, %v683
      %v685 = vsel %vm679, %v684, %v683
      %vm686 = vcmp.lt.s32.totalorder %v678, 0
      %v687 = vsub.s32 0, %v678
      %v688 = vsel %vm686, %v687, %v678
      %v689 = vshrl.u32 %v688, 7
      %v690 = vand.u32 %v688, 127
      %v691 = vsub.s32 0, %v690
      %v692 = vsel %vm686, %v691, %v690
      %vm693 = vcmp.ne.s32.totalorder %v685, 0
      %vm694 = vcmp.ne.s32.totalorder %v692, 0
      %vm695 = vcmp.lt.s32.totalorder %v685, 0
      %vm696 = vcmp.lt.s32.totalorder %v692, 0
      %vm697 = vmand %vm695, %vm693
      %vm698 = vmand %vm696, %vm694
      %v699 = vadd.s32 %v685, 128
      %v700 = vadd.s32 %v692, 128
      %v701 = vsel %vm697, %v699, %v685
      %v702 = vsel %vm698, %v700, %v692
      %v703 = vpack.c.bf16 %v642, %v638
      %v704 = vpack.c.bf16 %v644, %v640
      %v705 = vpack.c.bf16 %v652, %v648
      %v706 = vpack.c.bf16 %v654, %v650
      %v707 = vpack.c.bf16 %v662, %v658
      %v708 = vpack.c.bf16 %v664, %v660
      %v709 = vpack.c.bf16 %v672, %v668
      %v710 = vpack.c.bf16 %v674, %v670
      %vm711 = vcmp.ge.s32.totalorder %v701, 1
      %vm712 = vcmp.ge.s32.totalorder %v702, 1
      %721 = vrot.lane.b32.xlu0 %v703, 1
      %v722 = vpop.permute.xlu0 %721
      %723 = vrot.lane.b32.xlu0 %v704, 1
      %v724 = vpop.permute.xlu0 %723
      %725 = vrot.lane.b32.xlu0 %v705, 1
      %v726 = vpop.permute.xlu0 %725
      %727 = vrot.lane.b32.xlu0 %v706, 1
      %v728 = vpop.permute.xlu0 %727
      %729 = vrot.lane.b32.xlu0 %v707, 1
      %v730 = vpop.permute.xlu0 %729
      %731 = vrot.lane.b32.xlu0 %v708, 1
      %v732 = vpop.permute.xlu0 %731
      %733 = vrot.lane.b32.xlu0 %v709, 1
      %v734 = vpop.permute.xlu0 %733
      %735 = vrot.lane.b32.xlu0 %v710, 1
      %v736 = vpop.permute.xlu0 %735
      %vm737 = vcmask 7168
      %v738 = vsel %vm737, %v722, %v724
      %v739 = vsel %vm737, %v726, %v728
      %v740 = vsel %vm737, %v730, %v732
      %v741 = vsel %vm737, %v734, %v736
      %vm746 = vcmask 7168
      %v749 = vsel %vm746, 0, %v722
      %v752 = vsel %vm746, 0, %v726
      %v755 = vsel %vm746, 0, %v730
      %v758 = vsel %vm746, 0, %v734
      %v760 = vsel %vm711, 1, 0
      %v761 = vsel %vm712, 1, 0
      %vm762 = vcmp.eq.s32.totalorder %v760, 1
      %vm763 = vcmp.eq.s32.totalorder %v761, 1
      %vm764 = vmpackc.low %vm763, %vm762
      %v765 = vsel %vm764, 65537, 0
      %v766 = vlaneseq
      %v767 = vshrl.u32 %v766, 7
      %v768 = vsub.s32 0, %v767
      %v769 = vrot.slane %v765, %v768
      %v770 = vlaneseq
      %v771 = vshrl.u32 %v770, 7
      %v772 = vsub.s32 4, %v771
      %v773 = vrot.slane %v765, %v772
      %vm774 = vcmp.ne.s16.totalorder %v769, 0
      %vm775 = vcmp.ne.s16.totalorder %v773, 0
      %v776 = vsel %vm774, %v749, 0
      %v777 = vsel %vm775, %v738, 0
      %v778 = vsel %vm774, %v752, 0
      %v779 = vsel %vm775, %v739, 0
      %v780 = vsel %vm774, %v755, 0
      %v781 = vsel %vm775, %v740, 0
      %v782 = vsel %vm774, %v758, 0
      %v783 = vsel %vm775, %v741, 0
      %vm784 = vcmp.lt.s32.totalorder %v701, 127
      %vm785 = vcmp.lt.s32.totalorder %v702, 127
      %786 = vrot.lane.b32.xlu0 %v703, 127
      %v787 = vpop.permute.xlu0 %786
      %788 = vrot.lane.b32.xlu0 %v704, 127
      %v789 = vpop.permute.xlu0 %788
      %790 = vrot.lane.b32.xlu0 %v705, 127
      %v791 = vpop.permute.xlu0 %790
      %792 = vrot.lane.b32.xlu0 %v706, 127
      %v793 = vpop.permute.xlu0 %792
      %794 = vrot.lane.b32.xlu0 %v707, 127
      %v795 = vpop.permute.xlu0 %794
      %796 = vrot.lane.b32.xlu0 %v708, 127
      %v797 = vpop.permute.xlu0 %796
      %798 = vrot.lane.b32.xlu0 %v709, 127
      %v799 = vpop.permute.xlu0 %798
      %800 = vrot.lane.b32.xlu0 %v710, 127
      %v801 = vpop.permute.xlu0 %800
      %vm802 = vcmask 1039360
      %v803 = vsel %vm802, %v787, %v789
      %v804 = vsel %vm802, %v791, %v793
      %v805 = vsel %vm802, %v795, %v797
      %v806 = vsel %vm802, %v799, %v801
      %vm811 = vcmask 1039360
      %v813 = vsel %vm811, %v789, 0
      %v816 = vsel %vm811, %v793, 0
      %v819 = vsel %vm811, %v797, 0
      %v822 = vsel %vm811, %v801, 0
      %v824 = vsel %vm784, 1, 0
      %v825 = vsel %vm785, 1, 0
      %vm826 = vcmp.eq.s32.totalorder %v824, 1
      %vm827 = vcmp.eq.s32.totalorder %v825, 1
      %vm828 = vmpackc.low %vm827, %vm826
      %v829 = vsel %vm828, 65537, 0
      %v830 = vlaneseq
      %v831 = vshrl.u32 %v830, 7
      %v832 = vsub.s32 0, %v831
      %v833 = vrot.slane %v829, %v832
      %v834 = vlaneseq
      %v835 = vshrl.u32 %v834, 7
      %v836 = vsub.s32 4, %v835
      %v837 = vrot.slane %v829, %v836
      %vm838 = vcmp.ne.s16.totalorder %v833, 0
      %vm839 = vcmp.ne.s16.totalorder %v837, 0
      %v840 = vsel %vm838, %v803, 0
      %v841 = vsel %vm839, %v813, 0
      %v842 = vsel %vm838, %v804, 0
      %v843 = vsel %vm839, %v816, 0
      %v844 = vsel %vm838, %v805, 0
      %v845 = vsel %vm839, %v819, 0
      %v846 = vsel %vm838, %v806, 0
      %v847 = vsel %vm839, %v822, 0
      %v848 = vld [vmem:[%s3] sm:$0xff]
      %v849 = vld [vmem:[%s3 + $0x8] sm:$0xff]
      %v850 = vld [vmem:[%s3 + $0x10] sm:$0xff]
      %v851 = vld [vmem:[%s3 + $0x18] sm:$0xff]
      %v852 = vld [vmem:[%s3 + $0x20] sm:$0xff]
      %v853 = vld [vmem:[%s3 + $0x28] sm:$0xff]
      %v854 = vld [vmem:[%s3 + $0x30] sm:$0xff]
      %v855 = vld [vmem:[%s3 + $0x38] sm:$0xff]
      %v856 = vld [vmem:[%s4] sm:$0xff]
      %v857 = vld [vmem:[%s4 + $0x8] sm:$0xff]
      %v858 = vld [vmem:[%s4 + $0x10] sm:$0xff]
      %v859 = vld [vmem:[%s4 + $0x18] sm:$0xff]
      %v860 = vld [vmem:[%s4 + $0x20] sm:$0xff]
      %v861 = vld [vmem:[%s4 + $0x28] sm:$0xff]
      %v862 = vld [vmem:[%s4 + $0x30] sm:$0xff]
      %v863 = vld [vmem:[%s4 + $0x38] sm:$0xff]
      %865 = vset.pattern.permute.xlu0 0
      %866 = vperm.xlu0 %865, %v856
      %v867 = vpop.permute.xlu0 %866
      %870 = vset.pattern.permute.xlu0 0
      %871 = vperm.xlu0 %870, %v857
      %v872 = vpop.permute.xlu0 %871
      %875 = vset.pattern.permute.xlu0 0
      %876 = vperm.xlu0 %875, %v858
      %v877 = vpop.permute.xlu0 %876
      %880 = vset.pattern.permute.xlu0 0
      %881 = vperm.xlu0 %880, %v859
      %v882 = vpop.permute.xlu0 %881
      %885 = vset.pattern.permute.xlu0 0
      %886 = vperm.xlu0 %885, %v860
      %v887 = vpop.permute.xlu0 %886
      %890 = vset.pattern.permute.xlu0 0
      %891 = vperm.xlu0 %890, %v861
      %v892 = vpop.permute.xlu0 %891
      %895 = vset.pattern.permute.xlu0 0
      %896 = vperm.xlu0 %895, %v862
      %v897 = vpop.permute.xlu0 %896
      %900 = vset.pattern.permute.xlu0 0
      %901 = vperm.xlu0 %900, %v863
      %v902 = vpop.permute.xlu0 %901
      %v912 = vunpack.c.l.b16 %v848
      %v913 = vunpack.c.h.b16 %v848
      %v914 = vunpack.c.l.b16 %v849
      %v915 = vunpack.c.h.b16 %v849
      %v916 = vunpack.c.l.b16 %v850
      %v917 = vunpack.c.h.b16 %v850
      %v918 = vunpack.c.l.b16 %v851
      %v919 = vunpack.c.h.b16 %v851
      %v920 = vunpack.c.l.b16 %v852
      %v921 = vunpack.c.h.b16 %v852
      %v922 = vunpack.c.l.b16 %v853
      %v923 = vunpack.c.h.b16 %v853
      %v924 = vunpack.c.l.b16 %v854
      %v925 = vunpack.c.h.b16 %v854
      %v926 = vunpack.c.l.b16 %v855
      %v927 = vunpack.c.h.b16 %v855
      %v928 = vpack.c.b16 %v914, %v912
      %v929 = vpack.c.b16 %v915, %v913
      %v930 = vpack.c.b16 %v918, %v916
      %v931 = vpack.c.b16 %v919, %v917
      %v932 = vpack.c.b16 %v922, %v920
      %v933 = vpack.c.b16 %v923, %v921
      %v934 = vpack.c.b16 %v926, %v924
      %v935 = vpack.c.b16 %v927, %v925
      %vm940 = vcmask 523264
      %v942 = vsel %vm940, %v929, 0
      %v945 = vsel %vm940, %v931, 0
      %v948 = vsel %vm940, %v933, 0
      %v951 = vsel %vm940, %v935, 0
      %953 = vmatprep.subr.bf16.mxu0 %v777
      %954 = vmatpush1.bf16.msra.mxu0 %v776
      %955 = vmatprep.subr.bf16.mxu0 %v779
      %956 = vmatpush1.bf16.msra.mxu0 %v778
      %957 = vmatprep.subr.bf16.mxu0 %v781
      %958 = vmatpush1.bf16.msra.mxu0 %v780
      %959 = vmatprep.subr.bf16.mxu0 %v783
      %960 = vmatpush1.bf16.msra.mxu0 %v782
      %961 = vmatprep.subr.bf16.mxu0 %v704
      %962 = vmatpush1.bf16.msra.mxu0 %v703
      %963 = vmatprep.subr.bf16.mxu0 %v706
      %964 = vmatpush1.bf16.msra.mxu0 %v705
      %965 = vmatprep.subr.bf16.mxu0 %v708
      %966 = vmatpush1.bf16.msra.mxu0 %v707
      %967 = vmatprep.subr.bf16.mxu0 %v710
      %968 = vmatpush1.bf16.msra.mxu0 %v709
      %969 = vmatprep.subr.bf16.mxu0 %v841
      %970 = vmatpush1.bf16.msra.mxu0 %v840
      %971 = vmatprep.subr.bf16.mxu0 %v843
      %972 = vmatpush1.bf16.msra.mxu0 %v842
      %973 = vmatprep.subr.bf16.mxu0 %v845
      %974 = vmatpush1.bf16.msra.mxu0 %v844
      %975 = vmatprep.subr.bf16.mxu0 %v847
      %976 = vmatpush1.bf16.msra.mxu0 %v846
      %977 = vmatprep.subr.bf16.mxu0 0
      %978 = vmatpush1.bf16.msra.mxu0 0
      %979 = vmatprep.subr.bf16.mxu0 0
      %980 = vmatpush1.bf16.msra.mxu0 0
      %981 = vmatprep.subr.bf16.mxu0 0
      %982 = vmatpush1.bf16.msra.mxu0 0
      %983 = vmatprep.subr.bf16.mxu0 0
      %984 = vmatpush1.bf16.msra.mxu0 0
      %985 = vmatprep.mubr.bf16.mxu0 %v942
      %986 = vmatmul.mubr.bf16.gmra.mrb[0].mxu0 %v928
      %v987 = vpop.f32.mrb[0].mxu0
      %v988 = vadd.f32 %v867, %v987
      %v989 = vpop.f32.mrb[0].mxu0
      %v990 = vadd.f32 %v867, %v989
      %v991 = vpop.f32.mrb[0].mxu0
      %v992 = vadd.f32 %v872, %v991
      %v993 = vpop.f32.mrb[0].mxu0
      %v994 = vadd.f32 %v872, %v993
      %995 = vmatprep.mubr.bf16.mxu0 %v945
      %996 = vmatmul.mubr.bf16.gmra.mrb[0].mxu0 %v930
      %v997 = vpop.f32.mrb[0].mxu0
      %v998 = vadd.f32 %v877, %v997
      %v999 = vpop.f32.mrb[0].mxu0
      %v1000 = vadd.f32 %v877, %v999
      %v1001 = vpop.f32.mrb[0].mxu0
      %v1002 = vadd.f32 %v882, %v1001
      %v1003 = vpop.f32.mrb[0].mxu0
      %v1004 = vadd.f32 %v882, %v1003
      %1005 = vmatprep.mubr.bf16.mxu0 %v948
      %1006 = vmatmul.mubr.bf16.gmra.mrb[0].mxu0 %v932
      %v1007 = vpop.f32.mrb[0].mxu0
      %v1008 = vadd.f32 %v887, %v1007
      %v1009 = vpop.f32.mrb[0].mxu0
      %v1010 = vadd.f32 %v887, %v1009
      %v1011 = vpop.f32.mrb[0].mxu0
      %v1012 = vadd.f32 %v892, %v1011
      %v1013 = vpop.f32.mrb[0].mxu0
      %v1014 = vadd.f32 %v892, %v1013
      %1015 = vmatprep.mubr.bf16.mxu0 %v951
      %1016 = vmatmul.mubr.bf16.gmra.mrb[0].mxu0 %v934
      %v1017 = vpop.f32.mrb[0].mxu0
      %v1018 = vadd.f32 %v897, %v1017
      %v1019 = vpop.f32.mrb[0].mxu0
      %v1020 = vadd.f32 %v897, %v1019
      %v1021 = vpop.f32.mrb[0].mxu0
      %v1022 = vadd.f32 %v902, %v1021
      %v1023 = vpop.f32.mrb[0].mxu0
      %v1024 = vadd.f32 %v902, %v1023
      %1025 = vdwg.mxu0
      %v1026 = vmax.f32 %v988, 0.0
      %v1027 = vmax.f32 %v990, 0.0
      %v1028 = vmax.f32 %v992, 0.0
      %v1029 = vmax.f32 %v994, 0.0
      %v1030 = vmax.f32 %v998, 0.0
      %v1031 = vmax.f32 %v1000, 0.0
      %v1032 = vmax.f32 %v1002, 0.0
      %v1033 = vmax.f32 %v1004, 0.0
      %v1034 = vmax.f32 %v1008, 0.0
      %v1035 = vmax.f32 %v1010, 0.0
      %v1036 = vmax.f32 %v1012, 0.0
      %v1037 = vmax.f32 %v1014, 0.0
      %v1038 = vmax.f32 %v1018, 0.0
      %v1039 = vmax.f32 %v1020, 0.0
      %v1040 = vmax.f32 %v1022, 0.0
      %v1041 = vmax.f32 %v1024, 0.0
      %v1042 = vld [vmem:[%s5] sm:$0xf]
      %v1043 = vld [vmem:[%s5 + $0x4] sm:$0xf]
      %v1044 = vld [vmem:[%s5 + $0x8] sm:$0xf]
      %v1045 = vld [vmem:[%s5 + $0xc] sm:$0xf]
      %v1046 = vld [vmem:[%s5 + $0x10] sm:$0xf]
      %v1047 = vld [vmem:[%s5 + $0x14] sm:$0xf]
      %v1048 = vld [vmem:[%s5 + $0x18] sm:$0xf]
      %v1049 = vld [vmem:[%s5 + $0x1c] sm:$0xf]
      %v1050 = vpack.c.bf16 %v1028, %v1026
      %v1051 = vpack.c.bf16 %v1029, %v1027
      %v1052 = vpack.c.bf16 %v1032, %v1030
      %v1053 = vpack.c.bf16 %v1033, %v1031
      %v1054 = vpack.c.bf16 %v1036, %v1034
      %v1055 = vpack.c.bf16 %v1037, %v1035
      %v1056 = vpack.c.bf16 %v1040, %v1038
      %v1057 = vpack.c.bf16 %v1041, %v1039
      %v1058 = vld [vmem:[%s6] sm:$0xff]
      %v1059 = vld [vmem:[%s6 + $0x8] sm:$0xff]
      %v1060 = vld [vmem:[%s6 + $0x10] sm:$0xff]
      %v1061 = vld [vmem:[%s6 + $0x18] sm:$0xff]
      %v1062 = vld [vmem:[%s6 + $0x20] sm:$0xff]
      %v1063 = vld [vmem:[%s6 + $0x28] sm:$0xff]
      %v1064 = vld [vmem:[%s6 + $0x30] sm:$0xff]
      %v1065 = vld [vmem:[%s6 + $0x38] sm:$0xff]
      %1067 = vset.pattern.permute.xlu0 0
      %1068 = vperm.xlu0 %1067, %v1058
      %v1069 = vpop.permute.xlu0 %1068
      %1072 = vset.pattern.permute.xlu0 0
      %1073 = vperm.xlu0 %1072, %v1059
      %v1074 = vpop.permute.xlu0 %1073
      %1077 = vset.pattern.permute.xlu0 0
      %1078 = vperm.xlu0 %1077, %v1060
      %v1079 = vpop.permute.xlu0 %1078
      %1082 = vset.pattern.permute.xlu0 0
      %1083 = vperm.xlu0 %1082, %v1061
      %v1084 = vpop.permute.xlu0 %1083
      %1087 = vset.pattern.permute.xlu0 0
      %1088 = vperm.xlu0 %1087, %v1062
      %v1089 = vpop.permute.xlu0 %1088
      %1092 = vset.pattern.permute.xlu0 0
      %1093 = vperm.xlu0 %1092, %v1063
      %v1094 = vpop.permute.xlu0 %1093
      %1097 = vset.pattern.permute.xlu0 0
      %1098 = vperm.xlu0 %1097, %v1064
      %v1099 = vpop.permute.xlu0 %1098
      %1102 = vset.pattern.permute.xlu0 0
      %1103 = vperm.xlu0 %1102, %v1065
      %v1104 = vpop.permute.xlu0 %1103
      %v1114 = vunpack.c.l.b16 %v1042
      %v1115 = vunpack.c.l.b16 %v1043
      %v1116 = vunpack.c.l.b16 %v1044
      %v1117 = vunpack.c.l.b16 %v1045
      %v1118 = vunpack.c.l.b16 %v1046
      %v1119 = vunpack.c.l.b16 %v1047
      %v1120 = vunpack.c.l.b16 %v1048
      %v1121 = vunpack.c.l.b16 %v1049
      %v1122 = vpack.c.b16 %v1115, %v1114
      %v1123 = vpack.c.b16 %v1117, %v1116
      %v1124 = vpack.c.b16 %v1119, %v1118
      %v1125 = vpack.c.b16 %v1121, %v1120
      %v1127 = vsel %vm940, %v1122, 0
      %v1130 = vsel %vm940, %v1123, 0
      %v1133 = vsel %vm940, %v1124, 0
      %v1136 = vsel %vm940, %v1125, 0
      %1138 = vmatprep.subr.bf16.mxu0 %v1051
      %1139 = vmatpush1.bf16.msra.mxu0 %v1050
      %1140 = vmatprep.subr.bf16.mxu0 %v1053
      %1141 = vmatpush1.bf16.msra.mxu0 %v1052
      %1142 = vmatprep.subr.bf16.mxu0 %v1055
      %1143 = vmatpush1.bf16.msra.mxu0 %v1054
      %1144 = vmatprep.subr.bf16.mxu0 %v1057
      %1145 = vmatpush1.bf16.msra.mxu0 %v1056
      %1146 = vmatprep.subr.bf16.mxu0 0
      %1147 = vmatpush1.bf16.msra.mxu0 0
      %1148 = vmatprep.subr.bf16.mxu0 0
      %1149 = vmatpush1.bf16.msra.mxu0 0
      %1150 = vmatprep.subr.bf16.mxu0 0
      %1151 = vmatpush1.bf16.msra.mxu0 0
      %1152 = vmatprep.subr.bf16.mxu0 0
      %1153 = vmatpush1.bf16.msra.mxu0 0
      %1154 = vmatprep.subr.bf16.mxu0 0
      %1155 = vmatpush1.bf16.msra.mxu0 0
      %1156 = vmatprep.subr.bf16.mxu0 0
      %1157 = vmatpush1.bf16.msra.mxu0 0
      %1158 = vmatprep.subr.bf16.mxu0 0
      %1159 = vmatpush1.bf16.msra.mxu0 0
      %1160 = vmatprep.subr.bf16.mxu0 0
      %1161 = vmatpush1.bf16.msra.mxu0 0
      %1162 = vmatprep.subr.bf16.mxu0 0
      %1163 = vmatpush1.bf16.msra.mxu0 0
      %1164 = vmatprep.subr.bf16.mxu0 0
      %1165 = vmatpush1.bf16.msra.mxu0 0
      %1166 = vmatprep.subr.bf16.mxu0 0
      %1167 = vmatpush1.bf16.msra.mxu0 0
      %1168 = vmatprep.subr.bf16.mxu0 0
      %1169 = vmatpush1.bf16.msra.mxu0 0
      %1170 = vmatprep.mubr.bf16.mxu0 0
      %1171 = vmatmul.mubr.bf16.gmra.mrb[0].mxu0 %v1127
      %v1172 = vpop.f32.mrb[0].mxu0
      %v1173 = vadd.f32 %v1069, %v1172
      %v1174 = vpop.f32.mrb[0].mxu0
      %v1175 = vadd.f32 %v1069, %v1174
      %v1176 = vpop.f32.mrb[0].mxu0
      %v1177 = vadd.f32 %v1074, %v1176
      %v1178 = vpop.f32.mrb[0].mxu0
      %v1179 = vadd.f32 %v1074, %v1178
      %1180 = vmatprep.mubr.bf16.mxu0 0
      %1181 = vmatmul.mubr.bf16.gmra.mrb[0].mxu0 %v1130
      %v1182 = vpop.f32.mrb[0].mxu0
      %v1183 = vadd.f32 %v1079, %v1182
      %v1184 = vpop.f32.mrb[0].mxu0
      %v1185 = vadd.f32 %v1079, %v1184
      %v1186 = vpop.f32.mrb[0].mxu0
      %v1187 = vadd.f32 %v1084, %v1186
      %v1188 = vpop.f32.mrb[0].mxu0
      %v1189 = vadd.f32 %v1084, %v1188
      %1190 = vmatprep.mubr.bf16.mxu0 0
      %1191 = vmatmul.mubr.bf16.gmra.mrb[0].mxu0 %v1133
      %v1192 = vpop.f32.mrb[0].mxu0
      %v1193 = vadd.f32 %v1089, %v1192
      %v1194 = vpop.f32.mrb[0].mxu0
      %v1195 = vadd.f32 %v1089, %v1194
      %v1196 = vpop.f32.mrb[0].mxu0
      %v1197 = vadd.f32 %v1094, %v1196
      %v1198 = vpop.f32.mrb[0].mxu0
      %v1199 = vadd.f32 %v1094, %v1198
      %1200 = vmatprep.mubr.bf16.mxu0 0
      %1201 = vmatmul.mubr.bf16.gmra.mrb[0].mxu0 %v1136
      %v1202 = vpop.f32.mrb[0].mxu0
      %v1203 = vadd.f32 %v1099, %v1202
      %v1204 = vpop.f32.mrb[0].mxu0
      %v1205 = vadd.f32 %v1099, %v1204
      %v1206 = vpop.f32.mrb[0].mxu0
      %v1207 = vadd.f32 %v1104, %v1206
      %v1208 = vpop.f32.mrb[0].mxu0
      %v1209 = vadd.f32 %v1104, %v1208
      %1210 = vdwg.mxu0
      %v1211 = vadd.f32 %v638, %v1173
      %v1212 = vadd.f32 %v640, %v1175
      %v1213 = vadd.f32 %v642, %v1177
      %v1214 = vadd.f32 %v644, %v1179
      %v1215 = vadd.f32 %v648, %v1183
      %v1216 = vadd.f32 %v650, %v1185
      %v1217 = vadd.f32 %v652, %v1187
      %v1218 = vadd.f32 %v654, %v1189
      %v1219 = vadd.f32 %v658, %v1193
      %v1220 = vadd.f32 %v660, %v1195
      %v1221 = vadd.f32 %v662, %v1197
      %v1222 = vadd.f32 %v664, %v1199
      %v1223 = vadd.f32 %v668, %v1203
      %v1224 = vadd.f32 %v670, %v1205
      %v1225 = vadd.f32 %v672, %v1207
      %v1226 = vadd.f32 %v674, %v1209
      %v1227 = vpack.c.bf16 %v1213, %v1211
      %v1228 = vpack.c.bf16 %v1214, %v1212
      %v1229 = vpack.c.bf16 %v1217, %v1215
      %v1230 = vpack.c.bf16 %v1218, %v1216
      %v1231 = vpack.c.bf16 %v1221, %v1219
      %v1232 = vpack.c.bf16 %v1222, %v1220
      %v1233 = vpack.c.bf16 %v1225, %v1223
      %v1234 = vpack.c.bf16 %v1226, %v1224
      %vm1235 = vcmp.ge.s32.totalorder %v701, 2
      %vm1236 = vcmp.ge.s32.totalorder %v702, 2
      %1245 = vrot.lane.b32.xlu0 %v1227, 2
      %v1246 = vpop.permute.xlu0 %1245
      %1247 = vrot.lane.b32.xlu0 %v1228, 2
      %v1248 = vpop.permute.xlu0 %1247
      %1249 = vrot.lane.b32.xlu0 %v1229, 2
      %v1250 = vpop.permute.xlu0 %1249
      %1251 = vrot.lane.b32.xlu0 %v1230, 2
      %v1252 = vpop.permute.xlu0 %1251
      %1253 = vrot.lane.b32.xlu0 %v1231, 2
      %v1254 = vpop.permute.xlu0 %1253
      %1255 = vrot.lane.b32.xlu0 %v1232, 2
      %v1256 = vpop.permute.xlu0 %1255
      %1257 = vrot.lane.b32.xlu0 %v1233, 2
      %v1258 = vpop.permute.xlu0 %1257
      %1259 = vrot.lane.b32.xlu0 %v1234, 2
      %v1260 = vpop.permute.xlu0 %1259
      %vm1261 = vcmask 15360
      %v1262 = vsel %vm1261, %v1246, %v1248
      %v1263 = vsel %vm1261, %v1250, %v1252
      %v1264 = vsel %vm1261, %v1254, %v1256
      %v1265 = vsel %vm1261, %v1258, %v1260
      %vm1270 = vcmask 15360
      %v1272 = vsel %vm1270, 0, %v1246
      %v1275 = vsel %vm1270, 0, %v1250
      %v1278 = vsel %vm1270, 0, %v1254
      %v1281 = vsel %vm1270, 0, %v1258
      %v1283 = vsel %vm1235, 1, 0
      %v1284 = vsel %vm1236, 1, 0
      %vm1285 = vcmp.eq.s32.totalorder %v1283, 1
      %vm1286 = vcmp.eq.s32.totalorder %v1284, 1
      %vm1287 = vmpackc.low %vm1286, %vm1285
      %v1288 = vsel %vm1287, 65537, 0
      %v1289 = vlaneseq
      %v1290 = vshrl.u32 %v1289, 7
      %v1291 = vsub.s32 0, %v1290
      %v1292 = vrot.slane %v1288, %v1291
      %v1293 = vlaneseq
      %v1294 = vshrl.u32 %v1293, 7
      %v1295 = vsub.s32 4, %v1294
      %v1296 = vrot.slane %v1288, %v1295
      %vm1297 = vcmp.ne.s16.totalorder %v1292, 0
      %vm1298 = vcmp.ne.s16.totalorder %v1296, 0
      %v1299 = vsel %vm1297, %v1272, 0
      %v1300 = vsel %vm1298, %v1262, 0
      %v1301 = vsel %vm1297, %v1275, 0
      %v1302 = vsel %vm1298, %v1263, 0
      %v1303 = vsel %vm1297, %v1278, 0
      %v1304 = vsel %vm1298, %v1264, 0
      %v1305 = vsel %vm1297, %v1281, 0
      %v1306 = vsel %vm1298, %v1265, 0
      %vm1307 = vcmp.lt.s32.totalorder %v701, 126
      %vm1308 = vcmp.lt.s32.totalorder %v702, 126
      %1309 = vrot.lane.b32.xlu0 %v1227, 126
      %v1310 = vpop.permute.xlu0 %1309
      %1311 = vrot.lane.b32.xlu0 %v1228, 126
      %v1312 = vpop.permute.xlu0 %1311
      %1313 = vrot.lane.b32.xlu0 %v1229, 126
      %v1314 = vpop.permute.xlu0 %1313
      %1315 = vrot.lane.b32.xlu0 %v1230, 126
      %v1316 = vpop.permute.xlu0 %1315
      %1317 = vrot.lane.b32.xlu0 %v1231, 126
      %v1318 = vpop.permute.xlu0 %1317
      %1319 = vrot.lane.b32.xlu0 %v1232, 126
      %v1320 = vpop.permute.xlu0 %1319
      %1321 = vrot.lane.b32.xlu0 %v1233, 126
      %v1322 = vpop.permute.xlu0 %1321
      %1323 = vrot.lane.b32.xlu0 %v1234, 126
      %v1324 = vpop.permute.xlu0 %1323
      %vm1325 = vcmask 1031168
      %v1326 = vsel %vm1325, %v1310, %v1312
      %v1327 = vsel %vm1325, %v1314, %v1316
      %v1328 = vsel %vm1325, %v1318, %v1320
      %v1329 = vsel %vm1325, %v1322, %v1324
      %vm1334 = vcmask 1031168
      %v1336 = vsel %vm1334, %v1312, 0
      %v1339 = vsel %vm1334, %v1316, 0
      %v1342 = vsel %vm1334, %v1320, 0
      %v1345 = vsel %vm1334, %v1324, 0
      %v1347 = vsel %vm1307, 1, 0
      %v1348 = vsel %vm1308, 1, 0
      %vm1349 = vcmp.eq.s32.totalorder %v1347, 1
      %vm1350 = vcmp.eq.s32.totalorder %v1348, 1
      %vm1351 = vmpackc.low %vm1350, %vm1349
      %v1352 = vsel %vm1351, 65537, 0
      %v1353 = vlaneseq
      %v1354 = vshrl.u32 %v1353, 7
      %v1355 = vsub.s32 0, %v1354
      %v1356 = vrot.slane %v1352, %v1355
      %v1357 = vlaneseq
      %v1358 = vshrl.u32 %v1357, 7
      %v1359 = vsub.s32 4, %v1358
      %v1360 = vrot.slane %v1352, %v1359
      %vm1361 = vcmp.ne.s16.totalorder %v1356, 0
      %vm1362 = vcmp.ne.s16.totalorder %v1360, 0
      %v1363 = vsel %vm1361, %v1326, 0
      %v1364 = vsel %vm1362, %v1336, 0
      %v1365 = vsel %vm1361, %v1327, 0
      %v1366 = vsel %vm1362, %v1339, 0
      %v1367 = vsel %vm1361, %v1328, 0
      %v1368 = vsel %vm1362, %v1342, 0
      %v1369 = vsel %vm1361, %v1329, 0
      %v1370 = vsel %vm1362, %v1345, 0
      %s1371 = scalar_lea.vmem %s3, 64
      %v1372 = vld [vmem:[%s1371] sm:$0xff]
      %v1373 = vld [vmem:[%s1371 + $0x8] sm:$0xff]
      %v1374 = vld [vmem:[%s1371 + $0x10] sm:$0xff]
      %v1375 = vld [vmem:[%s1371 + $0x18] sm:$0xff]
      %v1376 = vld [vmem:[%s1371 + $0x20] sm:$0xff]
      %v1377 = vld [vmem:[%s1371 + $0x28] sm:$0xff]
      %v1378 = vld [vmem:[%s1371 + $0x30] sm:$0xff]
      %v1379 = vld [vmem:[%s1371 + $0x38] sm:$0xff]
      %s1380 = scalar_lea.vmem %s4, 64
      %v1381 = vld [vmem:[%s1380] sm:$0xff]
      %v1382 = vld [vmem:[%s1380 + $0x8] sm:$0xff]
      %v1383 = vld [vmem:[%s1380 + $0x10] sm:$0xff]
      %v1384 = vld [vmem:[%s1380 + $0x18] sm:$0xff]
      %v1385 = vld [vmem:[%s1380 + $0x20] sm:$0xff]
      %v1386 = vld [vmem:[%s1380 + $0x28] sm:$0xff]
      %v1387 = vld [vmem:[%s1380 + $0x30] sm:$0xff]
      %v1388 = vld [vmem:[%s1380 + $0x38] sm:$0xff]
      %1390 = vset.pattern.permute.xlu0 0
      %1391 = vperm.xlu0 %1390, %v1381
      %v1392 = vpop.permute.xlu0 %1391
      %1395 = vset.pattern.permute.xlu0 0
      %1396 = vperm.xlu0 %1395, %v1382
      %v1397 = vpop.permute.xlu0 %1396
      %1400 = vset.pattern.permute.xlu0 0
      %1401 = vperm.xlu0 %1400, %v1383
      %v1402 = vpop.permute.xlu0 %1401
      %1405 = vset.pattern.permute.xlu0 0
      %1406 = vperm.xlu0 %1405, %v1384
      %v1407 = vpop.permute.xlu0 %1406
      %1410 = vset.pattern.permute.xlu0 0
      %1411 = vperm.xlu0 %1410, %v1385
      %v1412 = vpop.permute.xlu0 %1411
      %1415 = vset.pattern.permute.xlu0 0
      %1416 = vperm.xlu0 %1415, %v1386
      %v1417 = vpop.permute.xlu0 %1416
      %1420 = vset.pattern.permute.xlu0 0
      %1421 = vperm.xlu0 %1420, %v1387
      %v1422 = vpop.permute.xlu0 %1421
      %1425 = vset.pattern.permute.xlu0 0
      %1426 = vperm.xlu0 %1425, %v1388
      %v1427 = vpop.permute.xlu0 %1426
      %v1437 = vunpack.c.l.b16 %v1372
      %v1438 = vunpack.c.h.b16 %v1372
      %v1439 = vunpack.c.l.b16 %v1373
      %v1440 = vunpack.c.h.b16 %v1373
      %v1441 = vunpack.c.l.b16 %v1374
      %v1442 = vunpack.c.h.b16 %v1374
      %v1443 = vunpack.c.l.b16 %v1375
      %v1444 = vunpack.c.h.b16 %v1375
      %v1445 = vunpack.c.l.b16 %v1376
      %v1446 = vunpack.c.h.b16 %v1376
      %v1447 = vunpack.c.l.b16 %v1377
      %v1448 = vunpack.c.h.b16 %v1377
      %v1449 = vunpack.c.l.b16 %v1378
      %v1450 = vunpack.c.h.b16 %v1378
      %v1451 = vunpack.c.l.b16 %v1379
      %v1452 = vunpack.c.h.b16 %v1379
      %v1453 = vpack.c.b16 %v1439, %v1437
      %v1454 = vpack.c.b16 %v1440, %v1438
      %v1455 = vpack.c.b16 %v1443, %v1441
      %v1456 = vpack.c.b16 %v1444, %v1442
      %v1457 = vpack.c.b16 %v1447, %v1445
      %v1458 = vpack.c.b16 %v1448, %v1446
      %v1459 = vpack.c.b16 %v1451, %v1449
      %v1460 = vpack.c.b16 %v1452, %v1450
      %v1466 = vsel %vm940, %v1454, 0
      %v1469 = vsel %vm940, %v1456, 0
      %v1472 = vsel %vm940, %v1458, 0
      %v1475 = vsel %vm940, %v1460, 0
      %1477 = vmatprep.subr.bf16.mxu0 %v1300
      %1478 = vmatpush1.bf16.msra.mxu0 %v1299
      %1479 = vmatprep.subr.bf16.mxu0 %v1302
      %1480 = vmatpush1.bf16.msra.mxu0 %v1301
      %1481 = vmatprep.subr.bf16.mxu0 %v1304
      %1482 = vmatpush1.bf16.msra.mxu0 %v1303
      %1483 = vmatprep.subr.bf16.mxu0 %v1306
      %1484 = vmatpush1.bf16.msra.mxu0 %v1305
      %1485 = vmatprep.subr.bf16.mxu0 %v1228
      %1486 = vmatpush1.bf16.msra.mxu0 %v1227
      %1487 = vmatprep.subr.bf16.mxu0 %v1230
      %1488 = vmatpush1.bf16.msra.mxu0 %v1229
      %1489 = vmatprep.subr.bf16.mxu0 %v1232
      %1490 = vmatpush1.bf16.msra.mxu0 %v1231
      %1491 = vmatprep.subr.bf16.mxu0 %v1234
      %1492 = vmatpush1.bf16.msra.mxu0 %v1233
      %1493 = vmatprep.subr.bf16.mxu0 %v1364
      %1494 = vmatpush1.bf16.msra.mxu0 %v1363
      %1495 = vmatprep.subr.bf16.mxu0 %v1366
      %1496 = vmatpush1.bf16.msra.mxu0 %v1365
      %1497 = vmatprep.subr.bf16.mxu0 %v1368
      %1498 = vmatpush1.bf16.msra.mxu0 %v1367
      %1499 = vmatprep.subr.bf16.mxu0 %v1370
      %1500 = vmatpush1.bf16.msra.mxu0 %v1369
      %1501 = vmatprep.subr.bf16.mxu0 0
      %1502 = vmatpush1.bf16.msra.mxu0 0
      %1503 = vmatprep.subr.bf16.mxu0 0
      %1504 = vmatpush1.bf16.msra.mxu0 0
      %1505 = vmatprep.subr.bf16.mxu0 0
      %1506 = vmatpush1.bf16.msra.mxu0 0
      %1507 = vmatprep.subr.bf16.mxu0 0
      %1508 = vmatpush1.bf16.msra.mxu0 0
      %1509 = vmatprep.mubr.bf16.mxu0 %v1466
      %1510 = vmatmul.mubr.bf16.gmra.mrb[0].mxu0 %v1453
      %v1511 = vpop.f32.mrb[0].mxu0
      %v1512 = vadd.f32 %v1392, %v1511
      %v1513 = vpop.f32.mrb[0].mxu0
      %v1514 = vadd.f32 %v1392, %v1513
      %v1515 = vpop.f32.mrb[0].mxu0
      %v1516 = vadd.f32 %v1397, %v1515
      %v1517 = vpop.f32.mrb[0].mxu0
      %v1518 = vadd.f32 %v1397, %v1517
      %1519 = vmatprep.mubr.bf16.mxu0 %v1469
      %1520 = vmatmul.mubr.bf16.gmra.mrb[0].mxu0 %v1455
      %v1521 = vpop.f32.mrb[0].mxu0
      %v1522 = vadd.f32 %v1402, %v1521
      %v1523 = vpop.f32.mrb[0].mxu0
      %v1524 = vadd.f32 %v1402, %v1523
      %v1525 = vpop.f32.mrb[0].mxu0
      %v1526 = vadd.f32 %v1407, %v1525
      %v1527 = vpop.f32.mrb[0].mxu0
      %v1528 = vadd.f32 %v1407, %v1527
      %1529 = vmatprep.mubr.bf16.mxu0 %v1472
      %1530 = vmatmul.mubr.bf16.gmra.mrb[0].mxu0 %v1457
      %v1531 = vpop.f32.mrb[0].mxu0
      %v1532 = vadd.f32 %v1412, %v1531
      %v1533 = vpop.f32.mrb[0].mxu0
      %v1534 = vadd.f32 %v1412, %v1533
      %v1535 = vpop.f32.mrb[0].mxu0
      %v1536 = vadd.f32 %v1417, %v1535
      %v1537 = vpop.f32.mrb[0].mxu0
      %v1538 = vadd.f32 %v1417, %v1537
      %1539 = vmatprep.mubr.bf16.mxu0 %v1475
      %1540 = vmatmul.mubr.bf16.gmra.mrb[0].mxu0 %v1459
      %v1541 = vpop.f32.mrb[0].mxu0
      %v1542 = vadd.f32 %v1422, %v1541
      %v1543 = vpop.f32.mrb[0].mxu0
      %v1544 = vadd.f32 %v1422, %v1543
      %v1545 = vpop.f32.mrb[0].mxu0
      %v1546 = vadd.f32 %v1427, %v1545
      %v1547 = vpop.f32.mrb[0].mxu0
      %v1548 = vadd.f32 %v1427, %v1547
      %1549 = vdwg.mxu0
      %v1550 = vmax.f32 %v1512, 0.0
      %v1551 = vmax.f32 %v1514, 0.0
      %v1552 = vmax.f32 %v1516, 0.0
      %v1553 = vmax.f32 %v1518, 0.0
      %v1554 = vmax.f32 %v1522, 0.0
      %v1555 = vmax.f32 %v1524, 0.0
      %v1556 = vmax.f32 %v1526, 0.0
      %v1557 = vmax.f32 %v1528, 0.0
      %v1558 = vmax.f32 %v1532, 0.0
      %v1559 = vmax.f32 %v1534, 0.0
      %v1560 = vmax.f32 %v1536, 0.0
      %v1561 = vmax.f32 %v1538, 0.0
      %v1562 = vmax.f32 %v1542, 0.0
      %v1563 = vmax.f32 %v1544, 0.0
      %v1564 = vmax.f32 %v1546, 0.0
      %v1565 = vmax.f32 %v1548, 0.0
      %s1566 = scalar_lea.vmem %s5, 32
      %v1567 = vld [vmem:[%s1566] sm:$0xf]
      %v1568 = vld [vmem:[%s1566 + $0x4] sm:$0xf]
      %v1569 = vld [vmem:[%s1566 + $0x8] sm:$0xf]
      %v1570 = vld [vmem:[%s1566 + $0xc] sm:$0xf]
      %v1571 = vld [vmem:[%s1566 + $0x10] sm:$0xf]
      %v1572 = vld [vmem:[%s1566 + $0x14] sm:$0xf]
      %v1573 = vld [vmem:[%s1566 + $0x18] sm:$0xf]
      %v1574 = vld [vmem:[%s1566 + $0x1c] sm:$0xf]
      %v1575 = vpack.c.bf16 %v1552, %v1550
      %v1576 = vpack.c.bf16 %v1553, %v1551
      %v1577 = vpack.c.bf16 %v1556, %v1554
      %v1578 = vpack.c.bf16 %v1557, %v1555
      %v1579 = vpack.c.bf16 %v1560, %v1558
      %v1580 = vpack.c.bf16 %v1561, %v1559
      %v1581 = vpack.c.bf16 %v1564, %v1562
      %v1582 = vpack.c.bf16 %v1565, %v1563
      %s1583 = scalar_lea.vmem %s6, 64
      %v1584 = vld [vmem:[%s1583] sm:$0xff]
      %v1585 = vld [vmem:[%s1583 + $0x8] sm:$0xff]
      %v1586 = vld [vmem:[%s1583 + $0x10] sm:$0xff]
      %v1587 = vld [vmem:[%s1583 + $0x18] sm:$0xff]
      %v1588 = vld [vmem:[%s1583 + $0x20] sm:$0xff]
      %v1589 = vld [vmem:[%s1583 + $0x28] sm:$0xff]
      %v1590 = vld [vmem:[%s1583 + $0x30] sm:$0xff]
      %v1591 = vld [vmem:[%s1583 + $0x38] sm:$0xff]
      %1593 = vset.pattern.permute.xlu0 0
      %1594 = vperm.xlu0 %1593, %v1584
      %v1595 = vpop.permute.xlu0 %1594
      %1598 = vset.pattern.permute.xlu0 0
      %1599 = vperm.xlu0 %1598, %v1585
      %v1600 = vpop.permute.xlu0 %1599
      %1603 = vset.pattern.permute.xlu0 0
      %1604 = vperm.xlu0 %1603, %v1586
      %v1605 = vpop.permute.xlu0 %1604
      %1608 = vset.pattern.permute.xlu0 0
      %1609 = vperm.xlu0 %1608, %v1587
      %v1610 = vpop.permute.xlu0 %1609
      %1613 = vset.pattern.permute.xlu0 0
      %1614 = vperm.xlu0 %1613, %v1588
      %v1615 = vpop.permute.xlu0 %1614
      %1618 = vset.pattern.permute.xlu0 0
      %1619 = vperm.xlu0 %1618, %v1589
      %v1620 = vpop.permute.xlu0 %1619
      %1623 = vset.pattern.permute.xlu0 0
      %1624 = vperm.xlu0 %1623, %v1590
      %v1625 = vpop.permute.xlu0 %1624
      %1628 = vset.pattern.permute.xlu0 0
      %1629 = vperm.xlu0 %1628, %v1591
      %v1630 = vpop.permute.xlu0 %1629
      %v1640 = vunpack.c.l.b16 %v1567
      %v1641 = vunpack.c.l.b16 %v1568
      %v1642 = vunpack.c.l.b16 %v1569
      %v1643 = vunpack.c.l.b16 %v1570
      %v1644 = vunpack.c.l.b16 %v1571
      %v1645 = vunpack.c.l.b16 %v1572
      %v1646 = vunpack.c.l.b16 %v1573
      %v1647 = vunpack.c.l.b16 %v1574
      %v1648 = vpack.c.b16 %v1641, %v1640
      %v1649 = vpack.c.b16 %v1643, %v1642
      %v1650 = vpack.c.b16 %v1645, %v1644
      %v1651 = vpack.c.b16 %v1647, %v1646
      %v1653 = vsel %vm940, %v1648, 0
      %v1656 = vsel %vm940, %v1649, 0
      %v1659 = vsel %vm940, %v1650, 0
      %v1662 = vsel %vm940, %v1651, 0
      %1664 = vmatprep.subr.bf16.mxu0 %v1576
      %1665 = vmatpush1.bf16.msra.mxu0 %v1575
      %1666 = vmatprep.subr.bf16.mxu0 %v1578
      %1667 = vmatpush1.bf16.msra.mxu0 %v1577
      %1668 = vmatprep.subr.bf16.mxu0 %v1580
      %1669 = vmatpush1.bf16.msra.mxu0 %v1579
      %1670 = vmatprep.subr.bf16.mxu0 %v1582
      %1671 = vmatpush1.bf16.msra.mxu0 %v1581
      %1672 = vmatprep.subr.bf16.mxu0 0
      %1673 = vmatpush1.bf16.msra.mxu0 0
      %1674 = vmatprep.subr.bf16.mxu0 0
      %1675 = vmatpush1.bf16.msra.mxu0 0
      %1676 = vmatprep.subr.bf16.mxu0 0
      %1677 = vmatpush1.bf16.msra.mxu0 0
      %1678 = vmatprep.subr.bf16.mxu0 0
      %1679 = vmatpush1.bf16.msra.mxu0 0
      %1680 = vmatprep.subr.bf16.mxu0 0
      %1681 = vmatpush1.bf16.msra.mxu0 0
      %1682 = vmatprep.subr.bf16.mxu0 0
      %1683 = vmatpush1.bf16.msra.mxu0 0
      %1684 = vmatprep.subr.bf16.mxu0 0
      %1685 = vmatpush1.bf16.msra.mxu0 0
      %1686 = vmatprep.subr.bf16.mxu0 0
      %1687 = vmatpush1.bf16.msra.mxu0 0
      %1688 = vmatprep.subr.bf16.mxu0 0
      %1689 = vmatpush1.bf16.msra.mxu0 0
      %1690 = vmatprep.subr.bf16.mxu0 0
      %1691 = vmatpush1.bf16.msra.mxu0 0
      %1692 = vmatprep.subr.bf16.mxu0 0
      %1693 = vmatpush1.bf16.msra.mxu0 0
      %1694 = vmatprep.subr.bf16.mxu0 0
      %1695 = vmatpush1.bf16.msra.mxu0 0
      %1696 = vmatprep.mubr.bf16.mxu0 0
      %1697 = vmatmul.mubr.bf16.gmra.mrb[0].mxu0 %v1653
      %v1698 = vpop.f32.mrb[0].mxu0
      %v1699 = vadd.f32 %v1595, %v1698
      %v1700 = vpop.f32.mrb[0].mxu0
      %v1701 = vadd.f32 %v1595, %v1700
      %v1702 = vpop.f32.mrb[0].mxu0
      %v1703 = vadd.f32 %v1600, %v1702
      %v1704 = vpop.f32.mrb[0].mxu0
      %v1705 = vadd.f32 %v1600, %v1704
      %1706 = vmatprep.mubr.bf16.mxu0 0
      %1707 = vmatmul.mubr.bf16.gmra.mrb[0].mxu0 %v1656
      %v1708 = vpop.f32.mrb[0].mxu0
      %v1709 = vadd.f32 %v1605, %v1708
      %v1710 = vpop.f32.mrb[0].mxu0
      %v1711 = vadd.f32 %v1605, %v1710
      %v1712 = vpop.f32.mrb[0].mxu0
      %v1713 = vadd.f32 %v1610, %v1712
      %v1714 = vpop.f32.mrb[0].mxu0
      %v1715 = vadd.f32 %v1610, %v1714
      %1716 = vmatprep.mubr.bf16.mxu0 0
      %1717 = vmatmul.mubr.bf16.gmra.mrb[0].mxu0 %v1659
      %v1718 = vpop.f32.mrb[0].mxu0
      %v1719 = vadd.f32 %v1615, %v1718
      %v1720 = vpop.f32.mrb[0].mxu0
      %v1721 = vadd.f32 %v1615, %v1720
      %v1722 = vpop.f32.mrb[0].mxu0
      %v1723 = vadd.f32 %v1620, %v1722
      %v1724 = vpop.f32.mrb[0].mxu0
      %v1725 = vadd.f32 %v1620, %v1724
      %1726 = vmatprep.mubr.bf16.mxu0 0
      %1727 = vmatmul.mubr.bf16.gmra.mrb[0].mxu0 %v1662
      %v1728 = vpop.f32.mrb[0].mxu0
      %v1729 = vadd.f32 %v1625, %v1728
      %v1730 = vpop.f32.mrb[0].mxu0
      %v1731 = vadd.f32 %v1625, %v1730
      %v1732 = vpop.f32.mrb[0].mxu0
      %v1733 = vadd.f32 %v1630, %v1732
      %v1734 = vpop.f32.mrb[0].mxu0
      %v1735 = vadd.f32 %v1630, %v1734
      %1736 = vdwg.mxu0
      %v1737 = vadd.f32 %v1211, %v1699
      %v1738 = vadd.f32 %v1212, %v1701
      %v1739 = vadd.f32 %v1213, %v1703
      %v1740 = vadd.f32 %v1214, %v1705
      %v1741 = vadd.f32 %v1215, %v1709
      %v1742 = vadd.f32 %v1216, %v1711
      %v1743 = vadd.f32 %v1217, %v1713
      %v1744 = vadd.f32 %v1218, %v1715
      %v1745 = vadd.f32 %v1219, %v1719
      %v1746 = vadd.f32 %v1220, %v1721
      %v1747 = vadd.f32 %v1221, %v1723
      %v1748 = vadd.f32 %v1222, %v1725
      %v1749 = vadd.f32 %v1223, %v1729
      %v1750 = vadd.f32 %v1224, %v1731
      %v1751 = vadd.f32 %v1225, %v1733
      %v1752 = vadd.f32 %v1226, %v1735
      %v1753 = vpack.c.bf16 %v1739, %v1737
      %v1754 = vpack.c.bf16 %v1740, %v1738
      %v1755 = vpack.c.bf16 %v1743, %v1741
      %v1756 = vpack.c.bf16 %v1744, %v1742
      %v1757 = vpack.c.bf16 %v1747, %v1745
      %v1758 = vpack.c.bf16 %v1748, %v1746
      %v1759 = vpack.c.bf16 %v1751, %v1749
      %v1760 = vpack.c.bf16 %v1752, %v1750
      %vm1761 = vcmp.ge.s32.totalorder %v701, 4
      %vm1762 = vcmp.ge.s32.totalorder %v702, 4
      %1771 = vrot.lane.b32.xlu0 %v1753, 4
      %v1772 = vpop.permute.xlu0 %1771
      %1773 = vrot.lane.b32.xlu0 %v1754, 4
      %v1774 = vpop.permute.xlu0 %1773
      %1775 = vrot.lane.b32.xlu0 %v1755, 4
      %v1776 = vpop.permute.xlu0 %1775
      %1777 = vrot.lane.b32.xlu0 %v1756, 4
      %v1778 = vpop.permute.xlu0 %1777
      %1779 = vrot.lane.b32.xlu0 %v1757, 4
      %v1780 = vpop.permute.xlu0 %1779
      %1781 = vrot.lane.b32.xlu0 %v1758, 4
      %v1782 = vpop.permute.xlu0 %1781
      %1783 = vrot.lane.b32.xlu0 %v1759, 4
      %v1784 = vpop.permute.xlu0 %1783
      %1785 = vrot.lane.b32.xlu0 %v1760, 4
      %v1786 = vpop.permute.xlu0 %1785
      %vm1787 = vcmask 31744
      %v1788 = vsel %vm1787, %v1772, %v1774
      %v1789 = vsel %vm1787, %v1776, %v1778
      %v1790 = vsel %vm1787, %v1780, %v1782
      %v1791 = vsel %vm1787, %v1784, %v1786
      %vm1796 = vcmask 31744
      %v1798 = vsel %vm1796, 0, %v1772
      %v1801 = vsel %vm1796, 0, %v1776
      %v1804 = vsel %vm1796, 0, %v1780
      %v1807 = vsel %vm1796, 0, %v1784
      %v1809 = vsel %vm1761, 1, 0
      %v1810 = vsel %vm1762, 1, 0
      %vm1811 = vcmp.eq.s32.totalorder %v1809, 1
      %vm1812 = vcmp.eq.s32.totalorder %v1810, 1
      %vm1813 = vmpackc.low %vm1812, %vm1811
      %v1814 = vsel %vm1813, 65537, 0
      %v1815 = vlaneseq
      %v1816 = vshrl.u32 %v1815, 7
      %v1817 = vsub.s32 0, %v1816
      %v1818 = vrot.slane %v1814, %v1817
      %v1819 = vlaneseq
      %v1820 = vshrl.u32 %v1819, 7
      %v1821 = vsub.s32 4, %v1820
      %v1822 = vrot.slane %v1814, %v1821
      %vm1823 = vcmp.ne.s16.totalorder %v1818, 0
      %vm1824 = vcmp.ne.s16.totalorder %v1822, 0
      %v1825 = vsel %vm1823, %v1798, 0
      %v1826 = vsel %vm1824, %v1788, 0
      %v1827 = vsel %vm1823, %v1801, 0
      %v1828 = vsel %vm1824, %v1789, 0
      %v1829 = vsel %vm1823, %v1804, 0
      %v1830 = vsel %vm1824, %v1790, 0
      %v1831 = vsel %vm1823, %v1807, 0
      %v1832 = vsel %vm1824, %v1791, 0
      %vm1833 = vcmp.lt.s32.totalorder %v701, 124
      %vm1834 = vcmp.lt.s32.totalorder %v702, 124
      %1835 = vrot.lane.b32.xlu0 %v1753, 124
      %v1836 = vpop.permute.xlu0 %1835
      %1837 = vrot.lane.b32.xlu0 %v1754, 124
      %v1838 = vpop.permute.xlu0 %1837
      %1839 = vrot.lane.b32.xlu0 %v1755, 124
      %v1840 = vpop.permute.xlu0 %1839
      %1841 = vrot.lane.b32.xlu0 %v1756, 124
      %v1842 = vpop.permute.xlu0 %1841
      %1843 = vrot.lane.b32.xlu0 %v1757, 124
      %v1844 = vpop.permute.xlu0 %1843
      %1845 = vrot.lane.b32.xlu0 %v1758, 124
      %v1846 = vpop.permute.xlu0 %1845
      %1847 = vrot.lane.b32.xlu0 %v1759, 124
      %v1848 = vpop.permute.xlu0 %1847
      %1849 = vrot.lane.b32.xlu0 %v1760, 124
      %v1850 = vpop.permute.xlu0 %1849
      %vm1851 = vcmask 1014784
      %v1852 = vsel %vm1851, %v1836, %v1838
      %v1853 = vsel %vm1851, %v1840, %v1842
      %v1854 = vsel %vm1851, %v1844, %v1846
      %v1855 = vsel %vm1851, %v1848, %v1850
      %vm1860 = vcmask 1014784
      %v1862 = vsel %vm1860, %v1838, 0
      %v1865 = vsel %vm1860, %v1842, 0
      %v1868 = vsel %vm1860, %v1846, 0
      %v1871 = vsel %vm1860, %v1850, 0
      %v1873 = vsel %vm1833, 1, 0
      %v1874 = vsel %vm1834, 1, 0
      %vm1875 = vcmp.eq.s32.totalorder %v1873, 1
      %vm1876 = vcmp.eq.s32.totalorder %v1874, 1
      %vm1877 = vmpackc.low %vm1876, %vm1875
      %v1878 = vsel %vm1877, 65537, 0
      %v1879 = vlaneseq
      %v1880 = vshrl.u32 %v1879, 7
      %v1881 = vsub.s32 0, %v1880
      %v1882 = vrot.slane %v1878, %v1881
      %v1883 = vlaneseq
      %v1884 = vshrl.u32 %v1883, 7
      %v1885 = vsub.s32 4, %v1884
      %v1886 = vrot.slane %v1878, %v1885
      %vm1887 = vcmp.ne.s16.totalorder %v1882, 0
      %vm1888 = vcmp.ne.s16.totalorder %v1886, 0
      %v1889 = vsel %vm1887, %v1852, 0
      %v1890 = vsel %vm1888, %v1862, 0
      %v1891 = vsel %vm1887, %v1853, 0
      %v1892 = vsel %vm1888, %v1865, 0
      %v1893 = vsel %vm1887, %v1854, 0
      %v1894 = vsel %vm1888, %v1868, 0
      %v1895 = vsel %vm1887, %v1855, 0
      %v1896 = vsel %vm1888, %v1871, 0
      %s1897 = scalar_lea.vmem %s3, 128
      %v1898 = vld [vmem:[%s1897] sm:$0xff]
      %v1899 = vld [vmem:[%s1897 + $0x8] sm:$0xff]
      %v1900 = vld [vmem:[%s1897 + $0x10] sm:$0xff]
      %v1901 = vld [vmem:[%s1897 + $0x18] sm:$0xff]
      %v1902 = vld [vmem:[%s1897 + $0x20] sm:$0xff]
      %v1903 = vld [vmem:[%s1897 + $0x28] sm:$0xff]
      %v1904 = vld [vmem:[%s1897 + $0x30] sm:$0xff]
      %v1905 = vld [vmem:[%s1897 + $0x38] sm:$0xff]
      %s1906 = scalar_lea.vmem %s4, 128
      %v1907 = vld [vmem:[%s1906] sm:$0xff]
      %v1908 = vld [vmem:[%s1906 + $0x8] sm:$0xff]
      %v1909 = vld [vmem:[%s1906 + $0x10] sm:$0xff]
      %v1910 = vld [vmem:[%s1906 + $0x18] sm:$0xff]
      %v1911 = vld [vmem:[%s1906 + $0x20] sm:$0xff]
      %v1912 = vld [vmem:[%s1906 + $0x28] sm:$0xff]
      %v1913 = vld [vmem:[%s1906 + $0x30] sm:$0xff]
      %v1914 = vld [vmem:[%s1906 + $0x38] sm:$0xff]
      %1916 = vset.pattern.permute.xlu0 0
      %1917 = vperm.xlu0 %1916, %v1907
      %v1918 = vpop.permute.xlu0 %1917
      %1921 = vset.pattern.permute.xlu0 0
      %1922 = vperm.xlu0 %1921, %v1908
      %v1923 = vpop.permute.xlu0 %1922
      %1926 = vset.pattern.permute.xlu0 0
      %1927 = vperm.xlu0 %1926, %v1909
      %v1928 = vpop.permute.xlu0 %1927
      %1931 = vset.pattern.permute.xlu0 0
      %1932 = vperm.xlu0 %1931, %v1910
      %v1933 = vpop.permute.xlu0 %1932
      %1936 = vset.pattern.permute.xlu0 0
      %1937 = vperm.xlu0 %1936, %v1911
      %v1938 = vpop.permute.xlu0 %1937
      %1941 = vset.pattern.permute.xlu0 0
      %1942 = vperm.xlu0 %1941, %v1912
      %v1943 = vpop.permute.xlu0 %1942
      %1946 = vset.pattern.permute.xlu0 0
      %1947 = vperm.xlu0 %1946, %v1913
      %v1948 = vpop.permute.xlu0 %1947
      %1951 = vset.pattern.permute.xlu0 0
      %1952 = vperm.xlu0 %1951, %v1914
      %v1953 = vpop.permute.xlu0 %1952
      %v1963 = vunpack.c.l.b16 %v1898
      %v1964 = vunpack.c.h.b16 %v1898
      %v1965 = vunpack.c.l.b16 %v1899
      %v1966 = vunpack.c.h.b16 %v1899
      %v1967 = vunpack.c.l.b16 %v1900
      %v1968 = vunpack.c.h.b16 %v1900
      %v1969 = vunpack.c.l.b16 %v1901
      %v1970 = vunpack.c.h.b16 %v1901
      %v1971 = vunpack.c.l.b16 %v1902
      %v1972 = vunpack.c.h.b16 %v1902
      %v1973 = vunpack.c.l.b16 %v1903
      %v1974 = vunpack.c.h.b16 %v1903
      %v1975 = vunpack.c.l.b16 %v1904
      %v1976 = vunpack.c.h.b16 %v1904
      %v1977 = vunpack.c.l.b16 %v1905
      %v1978 = vunpack.c.h.b16 %v1905
      %v1979 = vpack.c.b16 %v1965, %v1963
      %v1980 = vpack.c.b16 %v1966, %v1964
      %v1981 = vpack.c.b16 %v1969, %v1967
      %v1982 = vpack.c.b16 %v1970, %v1968
      %v1983 = vpack.c.b16 %v1973, %v1971
      %v1984 = vpack.c.b16 %v1974, %v1972
      %v1985 = vpack.c.b16 %v1977, %v1975
      %v1986 = vpack.c.b16 %v1978, %v1976
      %v1992 = vsel %vm940, %v1980, 0
      %v1995 = vsel %vm940, %v1982, 0
      %v1998 = vsel %vm940, %v1984, 0
      %v2001 = vsel %vm940, %v1986, 0
      %2003 = vmatprep.subr.bf16.mxu0 %v1826
      %2004 = vmatpush1.bf16.msra.mxu0 %v1825
      %2005 = vmatprep.subr.bf16.mxu0 %v1828
      %2006 = vmatpush1.bf16.msra.mxu0 %v1827
      %2007 = vmatprep.subr.bf16.mxu0 %v1830
      %2008 = vmatpush1.bf16.msra.mxu0 %v1829
      %2009 = vmatprep.subr.bf16.mxu0 %v1832
      %2010 = vmatpush1.bf16.msra.mxu0 %v1831
      %2011 = vmatprep.subr.bf16.mxu0 %v1754
      %2012 = vmatpush1.bf16.msra.mxu0 %v1753
      %2013 = vmatprep.subr.bf16.mxu0 %v1756
      %2014 = vmatpush1.bf16.msra.mxu0 %v1755
      %2015 = vmatprep.subr.bf16.mxu0 %v1758
      %2016 = vmatpush1.bf16.msra.mxu0 %v1757
      %2017 = vmatprep.subr.bf16.mxu0 %v1760
      %2018 = vmatpush1.bf16.msra.mxu0 %v1759
      %2019 = vmatprep.subr.bf16.mxu0 %v1890
      %2020 = vmatpush1.bf16.msra.mxu0 %v1889
      %2021 = vmatprep.subr.bf16.mxu0 %v1892
      %2022 = vmatpush1.bf16.msra.mxu0 %v1891
      %2023 = vmatprep.subr.bf16.mxu0 %v1894
      %2024 = vmatpush1.bf16.msra.mxu0 %v1893
      %2025 = vmatprep.subr.bf16.mxu0 %v1896
      %2026 = vmatpush1.bf16.msra.mxu0 %v1895
      %2027 = vmatprep.subr.bf16.mxu0 0
      %2028 = vmatpush1.bf16.msra.mxu0 0
      %2029 = vmatprep.subr.bf16.mxu0 0
      %2030 = vmatpush1.bf16.msra.mxu0 0
      %2031 = vmatprep.subr.bf16.mxu0 0
      %2032 = vmatpush1.bf16.msra.mxu0 0
      %2033 = vmatprep.subr.bf16.mxu0 0
      %2034 = vmatpush1.bf16.msra.mxu0 0
      %2035 = vmatprep.mubr.bf16.mxu0 %v1992
      %2036 = vmatmul.mubr.bf16.gmra.mrb[0].mxu0 %v1979
      %v2037 = vpop.f32.mrb[0].mxu0
      %v2038 = vadd.f32 %v1918, %v2037
      %v2039 = vpop.f32.mrb[0].mxu0
      %v2040 = vadd.f32 %v1918, %v2039
      %v2041 = vpop.f32.mrb[0].mxu0
      %v2042 = vadd.f32 %v1923, %v2041
      %v2043 = vpop.f32.mrb[0].mxu0
      %v2044 = vadd.f32 %v1923, %v2043
      %2045 = vmatprep.mubr.bf16.mxu0 %v1995
      %2046 = vmatmul.mubr.bf16.gmra.mrb[0].mxu0 %v1981
      %v2047 = vpop.f32.mrb[0].mxu0
      %v2048 = vadd.f32 %v1928, %v2047
      %v2049 = vpop.f32.mrb[0].mxu0
      %v2050 = vadd.f32 %v1928, %v2049
      %v2051 = vpop.f32.mrb[0].mxu0
      %v2052 = vadd.f32 %v1933, %v2051
      %v2053 = vpop.f32.mrb[0].mxu0
      %v2054 = vadd.f32 %v1933, %v2053
      %2055 = vmatprep.mubr.bf16.mxu0 %v1998
      %2056 = vmatmul.mubr.bf16.gmra.mrb[0].mxu0 %v1983
      %v2057 = vpop.f32.mrb[0].mxu0
      %v2058 = vadd.f32 %v1938, %v2057
      %v2059 = vpop.f32.mrb[0].mxu0
      %v2060 = vadd.f32 %v1938, %v2059
      %v2061 = vpop.f32.mrb[0].mxu0
      %v2062 = vadd.f32 %v1943, %v2061
      %v2063 = vpop.f32.mrb[0].mxu0
      %v2064 = vadd.f32 %v1943, %v2063
      %2065 = vmatprep.mubr.bf16.mxu0 %v2001
      %2066 = vmatmul.mubr.bf16.gmra.mrb[0].mxu0 %v1985
      %v2067 = vpop.f32.mrb[0].mxu0
      %v2068 = vadd.f32 %v1948, %v2067
      %v2069 = vpop.f32.mrb[0].mxu0
      %v2070 = vadd.f32 %v1948, %v2069
      %v2071 = vpop.f32.mrb[0].mxu0
      %v2072 = vadd.f32 %v1953, %v2071
      %v2073 = vpop.f32.mrb[0].mxu0
      %v2074 = vadd.f32 %v1953, %v2073
      %2075 = vdwg.mxu0
      %v2076 = vmax.f32 %v2038, 0.0
      %v2077 = vmax.f32 %v2040, 0.0
      %v2078 = vmax.f32 %v2042, 0.0
      %v2079 = vmax.f32 %v2044, 0.0
      %v2080 = vmax.f32 %v2048, 0.0
      %v2081 = vmax.f32 %v2050, 0.0
      %v2082 = vmax.f32 %v2052, 0.0
      %v2083 = vmax.f32 %v2054, 0.0
      %v2084 = vmax.f32 %v2058, 0.0
      %v2085 = vmax.f32 %v2060, 0.0
      %v2086 = vmax.f32 %v2062, 0.0
      %v2087 = vmax.f32 %v2064, 0.0
      %v2088 = vmax.f32 %v2068, 0.0
      %v2089 = vmax.f32 %v2070, 0.0
      %v2090 = vmax.f32 %v2072, 0.0
      %v2091 = vmax.f32 %v2074, 0.0
      %s2092 = scalar_lea.vmem %s5, 64
      %v2093 = vld [vmem:[%s2092] sm:$0xf]
      %v2094 = vld [vmem:[%s2092 + $0x4] sm:$0xf]
      %v2095 = vld [vmem:[%s2092 + $0x8] sm:$0xf]
      %v2096 = vld [vmem:[%s2092 + $0xc] sm:$0xf]
      %v2097 = vld [vmem:[%s2092 + $0x10] sm:$0xf]
      %v2098 = vld [vmem:[%s2092 + $0x14] sm:$0xf]
      %v2099 = vld [vmem:[%s2092 + $0x18] sm:$0xf]
      %v2100 = vld [vmem:[%s2092 + $0x1c] sm:$0xf]
      %v2101 = vpack.c.bf16 %v2078, %v2076
      %v2102 = vpack.c.bf16 %v2079, %v2077
      %v2103 = vpack.c.bf16 %v2082, %v2080
      %v2104 = vpack.c.bf16 %v2083, %v2081
      %v2105 = vpack.c.bf16 %v2086, %v2084
      %v2106 = vpack.c.bf16 %v2087, %v2085
      %v2107 = vpack.c.bf16 %v2090, %v2088
      %v2108 = vpack.c.bf16 %v2091, %v2089
      %s2109 = scalar_lea.vmem %s6, 128
      %v2110 = vld [vmem:[%s2109] sm:$0xff]
      %v2111 = vld [vmem:[%s2109 + $0x8] sm:$0xff]
      %v2112 = vld [vmem:[%s2109 + $0x10] sm:$0xff]
      %v2113 = vld [vmem:[%s2109 + $0x18] sm:$0xff]
      %v2114 = vld [vmem:[%s2109 + $0x20] sm:$0xff]
      %v2115 = vld [vmem:[%s2109 + $0x28] sm:$0xff]
      %v2116 = vld [vmem:[%s2109 + $0x30] sm:$0xff]
      %v2117 = vld [vmem:[%s2109 + $0x38] sm:$0xff]
      %2119 = vset.pattern.permute.xlu0 0
      %2120 = vperm.xlu0 %2119, %v2110
      %v2121 = vpop.permute.xlu0 %2120
      %2124 = vset.pattern.permute.xlu0 0
      %2125 = vperm.xlu0 %2124, %v2111
      %v2126 = vpop.permute.xlu0 %2125
      %2129 = vset.pattern.permute.xlu0 0
      %2130 = vperm.xlu0 %2129, %v2112
      %v2131 = vpop.permute.xlu0 %2130
      %2134 = vset.pattern.permute.xlu0 0
      %2135 = vperm.xlu0 %2134, %v2113
      %v2136 = vpop.permute.xlu0 %2135
      %2139 = vset.pattern.permute.xlu0 0
      %2140 = vperm.xlu0 %2139, %v2114
      %v2141 = vpop.permute.xlu0 %2140
      %2144 = vset.pattern.permute.xlu0 0
      %2145 = vperm.xlu0 %2144, %v2115
      %v2146 = vpop.permute.xlu0 %2145
      %2149 = vset.pattern.permute.xlu0 0
      %2150 = vperm.xlu0 %2149, %v2116
      %v2151 = vpop.permute.xlu0 %2150
      %2154 = vset.pattern.permute.xlu0 0
      %2155 = vperm.xlu0 %2154, %v2117
      %v2156 = vpop.permute.xlu0 %2155
      %v2166 = vunpack.c.l.b16 %v2093
      %v2167 = vunpack.c.l.b16 %v2094
      %v2168 = vunpack.c.l.b16 %v2095
      %v2169 = vunpack.c.l.b16 %v2096
      %v2170 = vunpack.c.l.b16 %v2097
      %v2171 = vunpack.c.l.b16 %v2098
      %v2172 = vunpack.c.l.b16 %v2099
      %v2173 = vunpack.c.l.b16 %v2100
      %v2174 = vpack.c.b16 %v2167, %v2166
      %v2175 = vpack.c.b16 %v2169, %v2168
      %v2176 = vpack.c.b16 %v2171, %v2170
      %v2177 = vpack.c.b16 %v2173, %v2172
      %v2179 = vsel %vm940, %v2174, 0
      %v2182 = vsel %vm940, %v2175, 0
      %v2185 = vsel %vm940, %v2176, 0
      %v2188 = vsel %vm940, %v2177, 0
      %2190 = vmatprep.subr.bf16.mxu0 %v2102
      %2191 = vmatpush1.bf16.msra.mxu0 %v2101
      %2192 = vmatprep.subr.bf16.mxu0 %v2104
      %2193 = vmatpush1.bf16.msra.mxu0 %v2103
      %2194 = vmatprep.subr.bf16.mxu0 %v2106
      %2195 = vmatpush1.bf16.msra.mxu0 %v2105
      %2196 = vmatprep.subr.bf16.mxu0 %v2108
      %2197 = vmatpush1.bf16.msra.mxu0 %v2107
      %2198 = vmatprep.subr.bf16.mxu0 0
      %2199 = vmatpush1.bf16.msra.mxu0 0
      %2200 = vmatprep.subr.bf16.mxu0 0
      %2201 = vmatpush1.bf16.msra.mxu0 0
      %2202 = vmatprep.subr.bf16.mxu0 0
      %2203 = vmatpush1.bf16.msra.mxu0 0
      %2204 = vmatprep.subr.bf16.mxu0 0
      %2205 = vmatpush1.bf16.msra.mxu0 0
      %2206 = vmatprep.subr.bf16.mxu0 0
      %2207 = vmatpush1.bf16.msra.mxu0 0
      %2208 = vmatprep.subr.bf16.mxu0 0
      %2209 = vmatpush1.bf16.msra.mxu0 0
      %2210 = vmatprep.subr.bf16.mxu0 0
      %2211 = vmatpush1.bf16.msra.mxu0 0
      %2212 = vmatprep.subr.bf16.mxu0 0
      %2213 = vmatpush1.bf16.msra.mxu0 0
      %2214 = vmatprep.subr.bf16.mxu0 0
      %2215 = vmatpush1.bf16.msra.mxu0 0
      %2216 = vmatprep.subr.bf16.mxu0 0
      %2217 = vmatpush1.bf16.msra.mxu0 0
      %2218 = vmatprep.subr.bf16.mxu0 0
      %2219 = vmatpush1.bf16.msra.mxu0 0
      %2220 = vmatprep.subr.bf16.mxu0 0
      %2221 = vmatpush1.bf16.msra.mxu0 0
      %2222 = vmatprep.mubr.bf16.mxu0 0
      %2223 = vmatmul.mubr.bf16.gmra.mrb[0].mxu0 %v2179
      %v2224 = vpop.f32.mrb[0].mxu0
      %v2225 = vadd.f32 %v2121, %v2224
      %v2226 = vpop.f32.mrb[0].mxu0
      %v2227 = vadd.f32 %v2121, %v2226
      %v2228 = vpop.f32.mrb[0].mxu0
      %v2229 = vadd.f32 %v2126, %v2228
      %v2230 = vpop.f32.mrb[0].mxu0
      %v2231 = vadd.f32 %v2126, %v2230
      %2232 = vmatprep.mubr.bf16.mxu0 0
      %2233 = vmatmul.mubr.bf16.gmra.mrb[0].mxu0 %v2182
      %v2234 = vpop.f32.mrb[0].mxu0
      %v2235 = vadd.f32 %v2131, %v2234
      %v2236 = vpop.f32.mrb[0].mxu0
      %v2237 = vadd.f32 %v2131, %v2236
      %v2238 = vpop.f32.mrb[0].mxu0
      %v2239 = vadd.f32 %v2136, %v2238
      %v2240 = vpop.f32.mrb[0].mxu0
      %v2241 = vadd.f32 %v2136, %v2240
      %2242 = vmatprep.mubr.bf16.mxu0 0
      %2243 = vmatmul.mubr.bf16.gmra.mrb[0].mxu0 %v2185
      %v2244 = vpop.f32.mrb[0].mxu0
      %v2245 = vadd.f32 %v2141, %v2244
      %v2246 = vpop.f32.mrb[0].mxu0
      %v2247 = vadd.f32 %v2141, %v2246
      %v2248 = vpop.f32.mrb[0].mxu0
      %v2249 = vadd.f32 %v2146, %v2248
      %v2250 = vpop.f32.mrb[0].mxu0
      %v2251 = vadd.f32 %v2146, %v2250
      %2252 = vmatprep.mubr.bf16.mxu0 0
      %2253 = vmatmul.mubr.bf16.gmra.mrb[0].mxu0 %v2188
      %v2254 = vpop.f32.mrb[0].mxu0
      %v2255 = vadd.f32 %v2151, %v2254
      %v2256 = vpop.f32.mrb[0].mxu0
      %v2257 = vadd.f32 %v2151, %v2256
      %v2258 = vpop.f32.mrb[0].mxu0
      %v2259 = vadd.f32 %v2156, %v2258
      %v2260 = vpop.f32.mrb[0].mxu0
      %v2261 = vadd.f32 %v2156, %v2260
      %2262 = vdwg.mxu0
      %v2263 = vadd.f32 %v1737, %v2225
      %v2264 = vadd.f32 %v1738, %v2227
      %v2265 = vadd.f32 %v1739, %v2229
      %v2266 = vadd.f32 %v1740, %v2231
      %v2267 = vadd.f32 %v1741, %v2235
      %v2268 = vadd.f32 %v1742, %v2237
      %v2269 = vadd.f32 %v1743, %v2239
      %v2270 = vadd.f32 %v1744, %v2241
      %v2271 = vadd.f32 %v1745, %v2245
      %v2272 = vadd.f32 %v1746, %v2247
      %v2273 = vadd.f32 %v1747, %v2249
      %v2274 = vadd.f32 %v1748, %v2251
      %v2275 = vadd.f32 %v1749, %v2255
      %v2276 = vadd.f32 %v1750, %v2257
      %v2277 = vadd.f32 %v1751, %v2259
      %v2278 = vadd.f32 %v1752, %v2261
      %2279 = vst [vmem:[%s489] sm:$0xff] %v2263
      %2280 = vst [vmem:[%s489 + $0x8] sm:$0xff] %v2264
      %2281 = vst [vmem:[%s489 + $0x10] sm:$0xff] %v2265
      %2282 = vst [vmem:[%s489 + $0x18] sm:$0xff] %v2266
      %2283 = vst [vmem:[%s489 + $0x20] sm:$0xff] %v2267
      %2284 = vst [vmem:[%s489 + $0x28] sm:$0xff] %v2268
      %2285 = vst [vmem:[%s489 + $0x30] sm:$0xff] %v2269
      %2286 = vst [vmem:[%s489 + $0x38] sm:$0xff] %v2270
      %2287 = vst [vmem:[%s489 + $0x40] sm:$0xff] %v2271
      %2288 = vst [vmem:[%s489 + $0x48] sm:$0xff] %v2272
      %2289 = vst [vmem:[%s489 + $0x50] sm:$0xff] %v2273
      %2290 = vst [vmem:[%s489 + $0x58] sm:$0xff] %v2274
      %2291 = vst [vmem:[%s489 + $0x60] sm:$0xff] %v2275
      %2292 = vst [vmem:[%s489 + $0x68] sm:$0xff] %v2276
      %2293 = vst [vmem:[%s489 + $0x70] sm:$0xff] %v2277
      %2294 = vst [vmem:[%s489 + $0x78] sm:$0xff] %v2278
      %v2295 = vpack.c.bf16 %v2265, %v2263
      %v2296 = vpack.c.bf16 %v2266, %v2264
      %v2297 = vpack.c.bf16 %v2269, %v2267
      %v2298 = vpack.c.bf16 %v2270, %v2268
      %v2299 = vpack.c.bf16 %v2273, %v2271
      %v2300 = vpack.c.bf16 %v2274, %v2272
      %v2301 = vpack.c.bf16 %v2277, %v2275
      %v2302 = vpack.c.bf16 %v2278, %v2276
      %v2303 = vld [vmem:[%s7] sm:$0xf]
      %v2304 = vld [vmem:[%s7 + $0x4] sm:$0xf]
      %v2305 = vld [vmem:[%s7 + $0x8] sm:$0xf]
      %v2306 = vld [vmem:[%s7 + $0xc] sm:$0xf]
      %v2307 = vld [vmem:[%s7 + $0x10] sm:$0xf]
      %v2308 = vld [vmem:[%s7 + $0x14] sm:$0xf]
      %v2309 = vld [vmem:[%s7 + $0x18] sm:$0xf]
      %v2310 = vld [vmem:[%s7 + $0x1c] sm:$0xf]
      %v2311 = vld [vmem:[%s7 + $0x20] sm:$0xf]
      %v2312 = vld [vmem:[%s8] sm:$0xff]
      %v2313 = vld [vmem:[%s8 + $0x8] sm:$0xff]
      %v2314 = vld [vmem:[%s8 + $0x10] sm:$0xff]
      %v2315 = vld [vmem:[%s8 + $0x18] sm:$0xff]
      %v2316 = vld [vmem:[%s8 + $0x20] sm:$0xff]
      %v2317 = vld [vmem:[%s8 + $0x28] sm:$0xff]
      %v2318 = vld [vmem:[%s8 + $0x30] sm:$0xff]
      %v2319 = vld [vmem:[%s8 + $0x38] sm:$0xff]
      %v2320 = vld [vmem:[%s8 + $0x40] sm:$0xff]
      %2322 = vset.pattern.permute.xlu0 0
      %2323 = vperm.xlu0 %2322, %v2312
      %v2324 = vpop.permute.xlu0 %2323
      %2327 = vset.pattern.permute.xlu0 0
      %2328 = vperm.xlu0 %2327, %v2313
      %v2329 = vpop.permute.xlu0 %2328
      %2332 = vset.pattern.permute.xlu0 0
      %2333 = vperm.xlu0 %2332, %v2314
      %v2334 = vpop.permute.xlu0 %2333
      %2337 = vset.pattern.permute.xlu0 0
      %2338 = vperm.xlu0 %2337, %v2315
      %v2339 = vpop.permute.xlu0 %2338
      %2342 = vset.pattern.permute.xlu0 0
      %2343 = vperm.xlu0 %2342, %v2316
      %v2344 = vpop.permute.xlu0 %2343
      %2347 = vset.pattern.permute.xlu0 0
      %2348 = vperm.xlu0 %2347, %v2317
      %v2349 = vpop.permute.xlu0 %2348
      %2352 = vset.pattern.permute.xlu0 0
      %2353 = vperm.xlu0 %2352, %v2318
      %v2354 = vpop.permute.xlu0 %2353
      %2357 = vset.pattern.permute.xlu0 0
      %2358 = vperm.xlu0 %2357, %v2319
      %v2359 = vpop.permute.xlu0 %2358
      %2362 = vset.pattern.permute.xlu0 0
      %2363 = vperm.xlu0 %2362, %v2320
      %v2364 = vpop.permute.xlu0 %2363
      %v2375 = vunpack.c.l.b16 %v2303
      %v2376 = vunpack.c.l.b16 %v2304
      %v2377 = vunpack.c.l.b16 %v2305
      %v2378 = vunpack.c.l.b16 %v2306
      %v2379 = vunpack.c.l.b16 %v2307
      %v2380 = vunpack.c.l.b16 %v2308
      %v2381 = vunpack.c.l.b16 %v2309
      %v2382 = vunpack.c.l.b16 %v2310
      %v2383 = vunpack.c.l.b16 %v2311
      %v2384 = vpack.c.b16 %v2376, %v2375
      %v2385 = vpack.c.b16 %v2378, %v2377
      %v2386 = vpack.c.b16 %v2380, %v2379
      %v2387 = vpack.c.b16 %v2382, %v2381
      %v2388 = vpack.c.b16 %v2383, %v2383
      %v2390 = vsel %vm940, %v2384, 0
      %v2393 = vsel %vm940, %v2385, 0
      %v2396 = vsel %vm940, %v2386, 0
      %v2399 = vsel %vm940, %v2387, 0
      %v2402 = vsel %vm940, %v2388, 0
      %2404 = vmatprep.subr.bf16.mxu0 %v2296
      %2405 = vmatpush1.bf16.msra.mxu0 %v2295
      %2406 = vmatprep.subr.bf16.mxu0 %v2298
      %2407 = vmatpush1.bf16.msra.mxu0 %v2297
      %2408 = vmatprep.subr.bf16.mxu0 %v2300
      %2409 = vmatpush1.bf16.msra.mxu0 %v2299
      %2410 = vmatprep.subr.bf16.mxu0 %v2302
      %2411 = vmatpush1.bf16.msra.mxu0 %v2301
      %2412 = vmatprep.subr.bf16.mxu0 0
      %2413 = vmatpush1.bf16.msra.mxu0 0
      %2414 = vmatprep.subr.bf16.mxu0 0
      %2415 = vmatpush1.bf16.msra.mxu0 0
      %2416 = vmatprep.subr.bf16.mxu0 0
      %2417 = vmatpush1.bf16.msra.mxu0 0
      %2418 = vmatprep.subr.bf16.mxu0 0
      %2419 = vmatpush1.bf16.msra.mxu0 0
      %2420 = vmatprep.subr.bf16.mxu0 0
      %2421 = vmatpush1.bf16.msra.mxu0 0
      %2422 = vmatprep.subr.bf16.mxu0 0
      %2423 = vmatpush1.bf16.msra.mxu0 0
      %2424 = vmatprep.subr.bf16.mxu0 0
      %2425 = vmatpush1.bf16.msra.mxu0 0
      %2426 = vmatprep.subr.bf16.mxu0 0
      %2427 = vmatpush1.bf16.msra.mxu0 0
      %2428 = vmatprep.subr.bf16.mxu0 0
      %2429 = vmatpush1.bf16.msra.mxu0 0
      %2430 = vmatprep.subr.bf16.mxu0 0
      %2431 = vmatpush1.bf16.msra.mxu0 0
      %2432 = vmatprep.subr.bf16.mxu0 0
      %2433 = vmatpush1.bf16.msra.mxu0 0
      %2434 = vmatprep.subr.bf16.mxu0 0
      %2435 = vmatpush1.bf16.msra.mxu0 0
      %2436 = vmatprep.mubr.bf16.mxu0 0
      %2437 = vmatmul.mubr.bf16.gmra.mrb[0].mxu0 %v2390
      %v2438 = vpop.f32.mrb[0].mxu0
      %v2439 = vadd.f32 %v2324, %v2438
      %v2440 = vpop.f32.mrb[0].mxu0
      %v2441 = vadd.f32 %v2324, %v2440
      %v2442 = vpop.f32.mrb[0].mxu0
      %v2443 = vadd.f32 %v2329, %v2442
      %v2444 = vpop.f32.mrb[0].mxu0
      %v2445 = vadd.f32 %v2329, %v2444
      %2446 = vmatprep.mubr.bf16.mxu0 0
      %2447 = vmatmul.mubr.bf16.gmra.mrb[0].mxu0 %v2393
      %v2448 = vpop.f32.mrb[0].mxu0
      %v2449 = vadd.f32 %v2334, %v2448
      %v2450 = vpop.f32.mrb[0].mxu0
      %v2451 = vadd.f32 %v2334, %v2450
      %v2452 = vpop.f32.mrb[0].mxu0
      %v2453 = vadd.f32 %v2339, %v2452
      %v2454 = vpop.f32.mrb[0].mxu0
      %v2455 = vadd.f32 %v2339, %v2454
      %2456 = vmatprep.mubr.bf16.mxu0 0
      %2457 = vmatmul.mubr.bf16.gmra.mrb[0].mxu0 %v2396
      %v2458 = vpop.f32.mrb[0].mxu0
      %v2459 = vadd.f32 %v2344, %v2458
      %v2460 = vpop.f32.mrb[0].mxu0
      %v2461 = vadd.f32 %v2344, %v2460
      %v2462 = vpop.f32.mrb[0].mxu0
      %v2463 = vadd.f32 %v2349, %v2462
      %v2464 = vpop.f32.mrb[0].mxu0
      %v2465 = vadd.f32 %v2349, %v2464
      %2466 = vmatprep.mubr.bf16.mxu0 0
      %2467 = vmatmul.mubr.bf16.gmra.mrb[0].mxu0 %v2399
      %v2468 = vpop.f32.mrb[0].mxu0
      %v2469 = vadd.f32 %v2354, %v2468
      %v2470 = vpop.f32.mrb[0].mxu0
      %v2471 = vadd.f32 %v2354, %v2470
      %v2472 = vpop.f32.mrb[0].mxu0
      %v2473 = vadd.f32 %v2359, %v2472
      %v2474 = vpop.f32.mrb[0].mxu0
      %v2475 = vadd.f32 %v2359, %v2474
      %2476 = vmatprep.mubr.bf16.mxu0 0
      %2477 = vmatmul.mubr.bf16.gmra.mrb[0].mxu0 %v2402
      %v2478 = vpop.f32.mrb[0].mxu0
      %v2479 = vadd.f32 %v2364, %v2478
      %v2480 = vpop.f32.mrb[0].mxu0
      %v2481 = vadd.f32 %v2364, %v2480
      %v2482 = vpop.f32.mrb[0].mxu0
      %v2483 = vpop.f32.mrb[0].mxu0
      %2484 = vdwg.mxu0
      %2485 = vst [vmem:[%s494] sm:$0xff] %v2439
      %2486 = vst [vmem:[%s494 + $0x8] sm:$0xff] %v2441
      %v2487 = vmax.f32 %v2443, 0.0
      %v2488 = vmax.f32 %v2445, 0.0
      %v2489 = vmax.f32 %v2449, 0.0
      %v2490 = vmax.f32 %v2451, 0.0
      %v2491 = vmax.f32 %v2453, 0.0
      %v2492 = vmax.f32 %v2455, 0.0
      %v2493 = vmax.f32 %v2459, 0.0
      %v2494 = vmax.f32 %v2461, 0.0
      %v2495 = vmax.f32 %v2463, 0.0
      %v2496 = vmax.f32 %v2465, 0.0
      %v2497 = vmax.f32 %v2469, 0.0
      %v2498 = vmax.f32 %v2471, 0.0
      %v2499 = vmax.f32 %v2473, 0.0
      %v2500 = vmax.f32 %v2475, 0.0
      %v2501 = vmax.f32 %v2479, 0.0
      %v2502 = vmax.f32 %v2481, 0.0
      %v2503 = vrot.slane %v2439, 4
      %v2504 = vmax.f32 %v2439, %v2503
      %v2505 = vrot.slane %v2504, 2
      %v2506 = vmax.f32 %v2504, %v2505
      %v2507 = vrot.slane %v2506, 1
      %v2508 = vmax.f32 %v2506, %v2507
      %v2509 = vrot.slane %v2441, 4
      %v2510 = vmax.f32 %v2441, %v2509
      %v2511 = vrot.slane %v2510, 2
      %v2512 = vmax.f32 %v2510, %v2511
      %v2513 = vrot.slane %v2512, 1
      %v2514 = vmax.f32 %v2512, %v2513
      %v2515 = vsub.f32 %v2439, %v2508
      %v2516 = vsub.f32 %v2441, %v2514
      %v2517 = vmul.f32 %v2515, 1.442695
      %v2518 = vpow.pop %v2517
      %v2519 = vmul.f32 %v2516, 1.442695
      %v2520 = vpow.pop %v2519
      %v2521 = vrot.slane %v2518, 4
      %v2522 = vadd.f32 %v2518, %v2521
      %v2523 = vrot.slane %v2522, 2
      %v2524 = vadd.f32 %v2522, %v2523
      %v2525 = vrot.slane %v2524, 1
      %v2526 = vadd.f32 %v2524, %v2525
      %v2527 = vrot.slane %v2520, 4
      %v2528 = vadd.f32 %v2520, %v2527
      %v2529 = vrot.slane %v2528, 2
      %v2530 = vadd.f32 %v2528, %v2529
      %v2531 = vrot.slane %v2530, 1
      %v2532 = vadd.f32 %v2530, %v2531
      %v2533 = vrcp.pop %v2526
      %v2534 = vmul.f32 %v2518, %v2533
      %v2535 = vrcp.pop %v2532
      %v2536 = vmul.f32 %v2520, %v2535
      %2537 = vst [vmem:[%s499] sm:$0xff] %v2534
      %2538 = vst [vmem:[%s499 + $0x8] sm:$0xff] %v2536
      %v2539 = vld [vmem:[%s9] sm:$0x1]
      %v2540 = vpack.c.bf16 %v2489, %v2487
      %v2541 = vpack.c.bf16 %v2490, %v2488
      %v2542 = vpack.c.bf16 %v2493, %v2491
      %v2543 = vpack.c.bf16 %v2494, %v2492
      %v2544 = vpack.c.bf16 %v2497, %v2495
      %v2545 = vpack.c.bf16 %v2498, %v2496
      %v2546 = vpack.c.bf16 %v2501, %v2499
      %v2547 = vpack.c.bf16 %v2502, %v2500
      %v2548 = vld [vmem:[%s10] sm:$0x3]
      %2550 = vset.pattern.permute.xlu0 0
      %2551 = vperm.xlu0 %2550, %v2548
      %v2552 = vpop.permute.xlu0 %2551
      %v2555 = vsel %vm940, %v2539, 0
      %2557 = vmatprep.subr.bf16.mxu0 %v2541
      %2558 = vmatpush1.bf16.msra.mxu0 %v2540
      %2559 = vmatprep.subr.bf16.mxu0 %v2543
      %2560 = vmatpush1.bf16.msra.mxu0 %v2542
      %2561 = vmatprep.subr.bf16.mxu0 %v2545
      %2562 = vmatpush1.bf16.msra.mxu0 %v2544
      %2563 = vmatprep.subr.bf16.mxu0 %v2547
      %2564 = vmatpush1.bf16.msra.mxu0 %v2546
      %2565 = vmatprep.subr.bf16.mxu0 0
      %2566 = vmatpush1.bf16.msra.mxu0 0
      %2567 = vmatprep.subr.bf16.mxu0 0
      %2568 = vmatpush1.bf16.msra.mxu0 0
      %2569 = vmatprep.subr.bf16.mxu0 0
      %2570 = vmatpush1.bf16.msra.mxu0 0
      %2571 = vmatprep.subr.bf16.mxu0 0
      %2572 = vmatpush1.bf16.msra.mxu0 0
      %2573 = vmatprep.subr.bf16.mxu0 0
      %2574 = vmatpush1.bf16.msra.mxu0 0
      %2575 = vmatprep.subr.bf16.mxu0 0
      %2576 = vmatpush1.bf16.msra.mxu0 0
      %2577 = vmatprep.subr.bf16.mxu0 0
      %2578 = vmatpush1.bf16.msra.mxu0 0
      %2579 = vmatprep.subr.bf16.mxu0 0
      %2580 = vmatpush1.bf16.msra.mxu0 0
      %2581 = vmatprep.subr.bf16.mxu0 0
      %2582 = vmatpush1.bf16.msra.mxu0 0
      %2583 = vmatprep.subr.bf16.mxu0 0
      %2584 = vmatpush1.bf16.msra.mxu0 0
      %2585 = vmatprep.subr.bf16.mxu0 0
      %2586 = vmatpush1.bf16.msra.mxu0 0
      %2587 = vmatprep.subr.bf16.mxu0 0
      %2588 = vmatpush1.bf16.msra.mxu0 0
      %2589 = vmatprep.mubr.bf16.mxu0 0
      %2590 = vmatmul.mubr.bf16.gmra.mrb[0].mxu0 %v2555
      %v2591 = vpop.f32.mrb[0].mxu0
      %v2592 = vadd.f32 %v2552, %v2591
      %v2593 = vpop.f32.mrb[0].mxu0
      %v2594 = vadd.f32 %v2552, %v2593
      %v2595 = vpop.f32.mrb[0].mxu0
      %v2596 = vpop.f32.mrb[0].mxu0
      %2597 = vdwg.mxu0
      %v2600 = vcombine.low %v2592, %v2594
      %v2602 = vunpack.c.l.s4 1983009808
      %v2603 = vunpack.c.0.s8 %v2602
      %v2604 = vlaneseq
      %v2605 = vshrl.u32 %v2604, 7
      %v2606 = vsub.s32 %v2603, %v2605
      %v2607 = vrot.slane %v2600, %v2606
      %2609 = vst [vmem:[%s504] sm:$0xf] %v2607
      %p2610 = scmp.lt.s32.totalorder %s26, 1
      %s2611 = scalar_select %p2610, %s26, 1
      %s2612 = smul.addr %s2611, 16
      %s2613 = smul.addr %s2612, 8
      %s2614 = scalar_lea.vmem %s11, %s2613
      %p2615 = scmp.lt.s32.totalorder %s26, 1
      %s2616 = scalar_select %p2615, %s26, 1
      %s2617 = smul.addr %s2616, 2
      %s2618 = smul.addr %s2617, 8
      %s2619 = scalar_lea.vmem %s12, %s2618
      %p2620 = scmp.lt.s32.totalorder %s26, 1
      %s2621 = scalar_select %p2620, %s26, 1
      %s2622 = smul.addr %s2621, 2
      %s2623 = smul.addr %s2622, 8
      %s2624 = scalar_lea.vmem %s13, %s2623
      %p2625 = scmp.lt.s32.totalorder %s26, 1
      %s2626 = scalar_select %p2625, %s26, 1
      %s2627 = smul.addr %s2626, 2
      %s2628 = smul.addr %s2627, 2
      %s2629 = scalar_lea.vmem %s14, %s2628
      // Predicated region
      $region65: #{_pipeline.2} parent=63 // pred_check
        %p2630 = pneg %p280
      $region66: #{_pipeline.2} parent=63 // pred_check_branch
        %2632 = sbr.rel (%p2630) target = $region68
      $region67: #{_pipeline.2} parent=63 // pred_region
        _
      $region68: #{_pipeline.2} parent=63 // pred_fallthru
        _
      // Predicated region
      $region69: #{_pipeline.2} parent=63 // pred_check
        %p2633 = pneg %p306
      $region70: #{_pipeline.2} parent=63 // pred_check_branch
        %2635 = sbr.rel (%p2633) target = $region72
      $region71: #{_pipeline.2} parent=63 // pred_region
        _
      $region72: #{_pipeline.2} parent=63 // pred_fallthru
        _
      // Predicated region
      $region73: #{_pipeline.2} parent=63 // pred_check
        %p2636 = pneg %p332
      $region74: #{_pipeline.2} parent=63 // pred_check_branch
        %2638 = sbr.rel (%p2636) target = $region76
      $region75: #{_pipeline.2} parent=63 // pred_region
        _
      $region76: #{_pipeline.2} parent=63 // pred_fallthru
        _
      // Predicated region
      $region77: #{_pipeline.2} parent=63 // pred_check
        %p2639 = pneg %p358
      $region78: #{_pipeline.2} parent=63 // pred_check_branch
        %2641 = sbr.rel (%p2639) target = $region80
      $region79: #{_pipeline.2} parent=63 // pred_region
        _
      $region80: #{_pipeline.2} parent=63 // pred_fallthru
        _
    $region64: #{_pipeline.2} parent=5 // pred_fallthru
      _
    %p2642 = scmp.le.s32.totalorder 2, %s21
    // Predicated region
    $region81: #{_pipeline.2} parent=5 // pred_check
      %p2643 = pneg %p2642
    $region82: #{_pipeline.2} parent=5 // pred_check_branch
      %2645 = sbr.rel (%p2643) target = $region84
    $region83: #{_pipeline.2} parent=5 // pred_region
      %s2646 = ssub.s32 %s21, 2
      // Predicated region
      $region85: #{_pipeline.2} parent=83 // pred_check
        %p2647 = pneg %p286
      $region86: #{_pipeline.2} parent=83 // pred_check_branch
        %2649 = sbr.rel (%p2647) target = $region88
      $region87: #{_pipeline.2} parent=83 // pred_region
        %p2650 = scmp.lt.s32.totalorder %s27, 1
        %s2651 = scalar_select %p2650, %s27, 1
        %s2652 = smul.addr %s2651, 16
        %s2653 = smul.addr %s2652, 8
        %s2654 = scalar_lea.vmem %s11, %s2653
      $region88: #{_pipeline.2} parent=83 // pred_fallthru
        _
      // Predicated region
      $region89: #{_pipeline.2} parent=83 // pred_check
        %p2655 = pneg %p312
      $region90: #{_pipeline.2} parent=83 // pred_check_branch
        %2657 = sbr.rel (%p2655) target = $region92
      $region91: #{_pipeline.2} parent=83 // pred_region
        %p2658 = scmp.lt.s32.totalorder %s27, 1
        %s2659 = scalar_select %p2658, %s27, 1
        %s2660 = smul.addr %s2659, 2
        %s2661 = smul.addr %s2660, 8
        %s2662 = scalar_lea.vmem %s12, %s2661
      $region92: #{_pipeline.2} parent=83 // pred_fallthru
        _
      // Predicated region
      $region93: #{_pipeline.2} parent=83 // pred_check
        %p2663 = pneg %p338
      $region94: #{_pipeline.2} parent=83 // pred_check_branch
        %2665 = sbr.rel (%p2663) target = $region96
      $region95: #{_pipeline.2} parent=83 // pred_region
        %p2666 = scmp.lt.s32.totalorder %s27, 1
        %s2667 = scalar_select %p2666, %s27, 1
        %s2668 = smul.addr %s2667, 2
        %s2669 = smul.addr %s2668, 8
        %s2670 = scalar_lea.vmem %s13, %s2669
      $region96: #{_pipeline.2} parent=83 // pred_fallthru
        _
      // Predicated region
      $region97: #{_pipeline.2} parent=83 // pred_check
        %p2671 = pneg %p364
      $region98: #{_pipeline.2} parent=83 // pred_check_branch
        %2673 = sbr.rel (%p2671) target = $region100
      $region99: #{_pipeline.2} parent=83 // pred_region
        %p2674 = scmp.lt.s32.totalorder %s27, 1
        %s2675 = scalar_select %p2674, %s27, 1
        %s2676 = smul.addr %s2675, 2
        %s2677 = smul.addr %s2676, 2
        %s2678 = scalar_lea.vmem %s14, %s2677
      $region100: #{_pipeline.2} parent=83 // pred_fallthru
        _
    $region84: #{_pipeline.2} parent=5 // pred_fallthru
      _
  $region6: #{_pipeline.2} parent=0 // loop_footer
    %s25 = sadd.s32 1, %s21
  $region7: #{_pipeline.2} parent=0 // loop_footer_branch
    %20 = sbr.rel target = $region3
  $region8: #{_pipeline.2} parent=0 // loop_exit
    _

</llo_original>
